<compile_context>
chip_gen: v7x
topology: tpu7x:2x2x1
jax: 0.10.0
libtpu: 0.0.40
codegen_flags: <defaults>
</compile_context>

<pallas_src>
import math

import numpy as np
import jax
import jax.numpy as jnp
from jax.experimental import pallas as pl
from jax.experimental.pallas import tpu as pltpu

# ---------------- problem sizes (consistent with the module) -----------------
IN_DIM = 32      # in_dim
H_DIM = 64       # h_dim
TIME_DIM = 16    # time_dim
COND_DIM = 24    # condition_dim
N_HEAD = 2       # head
DH = IN_DIM // N_HEAD           # 16
TC_DIM = TIME_DIM + COND_DIM    # 40
LN_EPS = 1e-6
LANES = 128                     # one vreg lane group
# dropout = 0 in the module -> identity, nothing to implement.

# ---------------- static packed-slab layout (all lane-dense) -----------------
# weight slab rows: every matmul's K is padded to 128 so the LHS never needs a
# narrow / offset slice; padded rows are exact zeros.
R_QKV = 0                       # 128 rows: wqkv (32) + bqkv row (col-32 "ones" hook)
R_PROJ = R_QKV + LANES          # 32 rows : wproj (cols >=32 zero)
R_W1 = R_PROJ + IN_DIM          # 128 rows: w1 (32) + b1_eff row
R_TC = R_W1 + LANES             # 128 rows: [wt;wc] (40) + bc row + bt row (+ b2 hook)
R_W2 = R_TC + LANES             # 128 rows: w2 (64) + b2_eff row
W_ROWS = R_W2 + LANES           # 544 (all offsets multiples of 8)


def transformer_block_kernel(act_ref, w_ref, ln_ref, o_ref):
    scale = 1.0 / math.sqrt(DH)          # == 1/sqrt(in_dim // n_head)
    rows = o_ref.shape[0]

    act = act_ref[...]                    # (rows, 256) -- one lane-dense tile
    xg = act[:, :LANES]                   # [x(32) | 1 | 0...]              (rows,128)
    tg = act[:, LANES:]                   # [t(16) | c(24) | m | 1 | 0...]  (rows,128)

    # ---------------- MultiHeadAttention (2 heads) ----------------
    # The qkv matmul also delivers bqkv (through the ones column of xg) and the
    # per-head swapped copies of k and v (through duplicated weight columns):
    #   cols = [q0 q1 | k0 k1 k0 | v0 v1 v0]   (8 groups of DH=16 -> exactly 128 lanes)
    qkv = jnp.dot(xg, w_ref[R_QKV:R_QKV + LANES, :],
                  preferred_element_type=jnp.float32)                 # (rows,128)
    q = qkv[:, 0 * DH:2 * DH]
    k = qkv[:, 2 * DH:4 * DH]
    k_swap = qkv[:, 3 * DH:5 * DH]        # [k1 | k0]
    v = qkv[:, 5 * DH:7 * DH]
    v_swap = qkv[:, 6 * DH:8 * DH]        # [v1 | v0]

    lane32 = jax.lax.broadcasted_iota(jnp.int32, (rows, 2 * DH), 1)
    head0 = lane32 < DH
    diff = q * (k - k_swap)               # [q0*(k0-k1) | q1*(k1-k0)]
    s0 = jnp.sum(jnp.where(head0, diff, 0.0), axis=-1, keepdims=True)  # d00 - d01
    s1 = jnp.sum(diff, axis=-1, keepdims=True) - s0                    # d11 - d10
    # softmax over 2 heads == sigmoid of the scaled score difference (EUP slot)
    p = jax.nn.sigmoid(scale * jnp.where(head0, s0, s1))               # (rows, 32)
    attn = p * v + (1.0 - p) * v_swap                                  # (rows, 32)

    # proj matmul: weight cols >=32 are zero, so the result is already 128-lane
    # padded with exact zeros; bproj is folded host-side into b1_eff / b2_eff.
    x1 = xg + jnp.dot(attn, w_ref[R_PROJ:R_PROJ + IN_DIM, :],
                      preferred_element_type=jnp.float32)       # (rows,128), col 32 == 1

    # ---------------- FeedForward -----------------------------------------
    # NOTE: x1@w1 and stc@wtc are deliberately NOT fused into one matmul:
    # silu() is applied between them in the reference module.
    h = jax.nn.silu(jnp.dot(x1, w_ref[R_W1:R_W1 + LANES, :],
                            preferred_element_type=jnp.float32))       # b1 via col 32

    lane128 = jax.lax.broadcasted_iota(jnp.int32, (rows, LANES), 1)
    mask = tg[:, TC_DIM:TC_DIM + 1]                                    # (rows,1)
    gate = jnp.where(lane128 < TIME_DIM, 1.0, mask)
    # (silu(c)@wc + bc)*m == (silu(c)*m)@wc + m*bc ; the mask column (col 40) and the
    # ones column (col 41) pass through untouched so the matmul adds m*bc + bt and
    # plants a 1 in column 64 of the result (hook for the b2_eff row of w2).
    stc = jnp.where(lane128 < TC_DIM, jax.nn.silu(tg) * gate, tg)
    h = h + jnp.dot(stc, w_ref[R_TC:R_TC + LANES, :],
                    preferred_element_type=jnp.float32)

    h2 = x1 + jnp.dot(h, w_ref[R_W2:R_W2 + LANES, :],
                      preferred_element_type=jnp.float32)              # dropout p=0

    # ---------------- LayerNorm over the 32 real columns (biased var, eps=1e-6) ----
    valid = lane128 < IN_DIM
    h2m = jnp.where(valid, h2, 0.0)
    mu = jnp.sum(h2m, axis=-1, keepdims=True) * (1.0 / IN_DIM)
    cen = jnp.where(valid, h2 - mu, 0.0)
    var = jnp.sum(cen * cen, axis=-1, keepdims=True) * (1.0 / IN_DIM)
    # gamma/beta rows are zero beyond col 32, so padded output lanes are exactly 0.
    o_ref[...] = (cen * jax.lax.rsqrt(var + LN_EPS) * ln_ref[0:1, :]
                  + ln_ref[1:2, :])


# ---------------- host-side packing (one-time, hoisted out of the call path) --
def _qkv_perm():
    # PyTorch column layout of the (in, 3*in) qkv weight: per head h -> [q_h | k_h | v_h].
    # Kernel layout (8 groups of DH lanes, exactly 128 columns):
    #   [q0 q1 | k0 k1 k0 | v0 v1 v0]
    # The duplicated k0 / v0 columns give the "swapped head" copies directly out of
    # the matmul -- no roll / concat / 16-lane slices in the kernel.
    def grp(part, h):
        s = h * 3 * DH + part * DH
        return list(range(s, s + DH))
    cols = (grp(0, 0) + grp(0, 1)
            + grp(1, 0) + grp(1, 1) + grp(1, 0)
            + grp(2, 0) + grp(2, 1) + grp(2, 0))
    return np.asarray(cols, dtype=np.int32)


def pack_params(p):
    """One-time packing of all weights/biases into two lane-dense slabs.

    Call once and reuse (hoisted out of the per-call path). Linear biases are
    folded into the matmuls through constant-one activation columns; bproj is
    distributed exactly into b1_eff (through w1) and b2_eff (residual path).
    """
    perm = _qkv_perm()
    hi = jax.lax.Precision.HIGHEST
    b1_eff = p["b1"] + jnp.dot(p["bproj"], p["w1"], precision=hi)      # (1, 64)
    b2_eff = p["b2"] + p["bproj"]                                      # (1, 32)

    w = jnp.zeros((W_ROWS, LANES), jnp.float32)
    w = w.at[R_QKV:R_QKV + IN_DIM, :].set(p["wqkv"][:, perm])
    w = w.at[R_QKV + IN_DIM, :].set(p["bqkv"][0, perm])                # * ones col of xg
    w = w.at[R_PROJ:R_PROJ + IN_DIM, :IN_DIM].set(p["wproj"])
    w = w.at[R_W1:R_W1 + IN_DIM, :H_DIM].set(p["w1"])
    w = w.at[R_W1 + IN_DIM, :H_DIM].set(b1_eff[0])                     # * ones col of x1
    w = w.at[R_TC:R_TC + TIME_DIM, :H_DIM].set(p["wt"])
    w = w.at[R_TC + TIME_DIM:R_TC + TC_DIM, :H_DIM].set(p["wc"])
    w = w.at[R_TC + TC_DIM, :H_DIM].set(p["bc"][0])                    # * mask col (40)
    w = w.at[R_TC + TC_DIM + 1, :H_DIM].set(p["bt"][0])                # * ones col (41)
    w = w.at[R_TC + TC_DIM + 1, H_DIM].set(1.0)                        # -> col 64 == 1
    w = w.at[R_W2:R_W2 + H_DIM, :IN_DIM].set(p["w2"])
    w = w.at[R_W2 + H_DIM, :IN_DIM].set(b2_eff[0])                     # * col 64 of h

    ln = jnp.zeros((8, LANES), jnp.float32)
    ln = ln.at[0, :IN_DIM].set(p["gamma"][0])
    ln = ln.at[1, :IN_DIM].set(p["beta"][0])
    return w, ln


def _round_up(v, m):
    return (v + m - 1) // m * m


def pack_act(x, timestep, condition, condition_mask):
    """Per-call activation slab: two aligned 128-lane groups,
    [x | 1 | 0...] and [timestep | condition | mask | 1 | 0...]."""
    bx = x.shape[0]
    one = jnp.ones((bx, 1), jnp.float32)
    return jnp.concatenate(
        [x, one, jnp.zeros((bx, LANES - IN_DIM - 1), jnp.float32),
         timestep, condition, condition_mask.reshape(bx, 1), one,
         jnp.zeros((bx, LANES - TC_DIM - 2), jnp.float32)], axis=-1)   # (bx, 256)


def transformer_block(x, timestep, condition, condition_mask, wslab, lnslab,
                      *, block_rows=256):
    # block_rows >= 128 fills the v5e MXU, >= 256 the v6e/v7x MXU. A 256-row grid step
    # uses ~1 MiB of VMEM (double-buffered act+out tiles + resident 272 KiB weight
    # slab), far under the 32 MiB scoped default on every generation (incl. v7x 64 MiB).
    bx = x.shape[0]
    act = pack_act(x, timestep, condition, condition_mask)
    tm = min(block_rows, _round_up(bx, 8))
    b_pad = _round_up(bx, tm)
    if b_pad != bx:
        act = jnp.pad(act, ((0, b_pad - bx), (0, 0)))      # zero rows -> finite junk, sliced off
    out = pl.pallas_call(
        transformer_block_kernel,
        out_shape=jax.ShapeDtypeStruct((b_pad, LANES), jnp.float32),
        grid=(b_pad // tm,),
        in_specs=[pl.BlockSpec((tm, 2 * LANES), lambda i: (i, 0)),
                  pl.BlockSpec((W_ROWS, LANES), lambda i: (0, 0)),
                  pl.BlockSpec((8, LANES), lambda i: (0, 0))],
        out_specs=pl.BlockSpec((tm, LANES), lambda i: (i, 0)),
        compiler_params=pltpu.CompilerParams(
            dimension_semantics=("parallel",)),
    )(act, wslab, lnslab)
    return out[:bx, :IN_DIM]


# ---------------- pure-JAX reference (mirrors the PyTorch forward) -----------
def reference(x, timestep, condition, condition_mask, p):
    Bx, D = x.shape
    H, dh = N_HEAD, D // N_HEAD
    qkv = (x @ p["wqkv"] + p["bqkv"][0]).reshape(Bx, H, 3 * dh)
    q, k, v = qkv[..., :dh], qkv[..., dh:2 * dh], qkv[..., 2 * dh:]
    score = jnp.einsum("bhd,bgd->bhg", q, k) / math.sqrt(dh)
    score = jax.nn.softmax(score, axis=-1)
    attn = jnp.einsum("bhg,bgd->bhd", score, v).reshape(Bx, D)
    x1 = x + attn @ p["wproj"] + p["bproj"][0]

    h = jax.nn.silu(x1 @ p["w1"] + p["b1"][0])
    t = jax.nn.silu(timestep) @ p["wt"] + p["bt"][0]
    c = (jax.nn.silu(condition) @ p["wc"] + p["bc"][0]) * condition_mask[:, None]
    h = h + t + c
    h2 = h @ p["w2"] + p["b2"][0] + x1
    mu = h2.mean(-1, keepdims=True)
    var = ((h2 - mu) ** 2).mean(-1, keepdims=True)
    return (h2 - mu) / jnp.sqrt(var + LN_EPS) * p["gamma"][0] + p["beta"][0]


def init_params(key):
    ks = jax.random.split(key, 12)
    s = 0.05

    def w(k, shape):
        return jax.random.normal(k, shape, jnp.float32) * s

    # weights stored pre-transposed as (in, out); biases as (1, out); PyTorch-style
    # per-head-interleaved qkv column layout (pack_params regroups/duplicates columns).
    return dict(
        wqkv=w(ks[0], (IN_DIM, 3 * IN_DIM)), bqkv=w(ks[1], (1, 3 * IN_DIM)),
        wproj=w(ks[2], (IN_DIM, IN_DIM)),    bproj=w(ks[3], (1, IN_DIM)),
        w1=w(ks[4], (IN_DIM, H_DIM)),        b1=w(ks[5], (1, H_DIM)),
        wt=w(ks[6], (TIME_DIM, H_DIM)),      bt=w(ks[7], (1, H_DIM)),
        wc=w(ks[8], (COND_DIM, H_DIM)),      bc=w(ks[9], (1, H_DIM)),
        w2=w(ks[10], (H_DIM, IN_DIM)),       b2=w(ks[11], (1, IN_DIM)),
        gamma=jnp.ones((1, IN_DIM), jnp.float32),
        beta=jnp.zeros((1, IN_DIM), jnp.float32),
    )


if __name__ == "__main__":
    B = 512  # independent rows -> 2 grid steps of 256 rows (parallel axis, fills MXU)
    key = jax.random.PRNGKey(0)
    kx, kt, kc, km, kp = jax.random.split(key, 5)

    x = jax.random.normal(kx, (B, IN_DIM), jnp.float32)
    timestep = jax.random.normal(kt, (B, TIME_DIM), jnp.float32)
    condition = jax.random.normal(kc, (B, COND_DIM), jnp.float32)
    condition_mask = (jax.random.uniform(km, (B,)) > 0.5).astype(jnp.float32)
    params = init_params(kp)

    # one-time weight packing, hoisted out of the per-call path (perf-review item)
    wslab, lnslab = pack_params(params)
    wslab, lnslab = jax.block_until_ready((wslab, lnslab))

    fwd = jax.jit(transformer_block)
    out = jax.block_until_ready(fwd(x, timestep, condition, condition_mask, wslab, lnslab))

    ref = reference(x, timestep, condition, condition_mask, params)
    assert out.shape == (B, IN_DIM)
    max_err = float(jnp.max(jnp.abs(out - ref)))
    assert jnp.allclose(out, ref, atol=2e-4, rtol=2e-4), max_err
    print("KERNEL_OK")
</pallas_src>

<mosaic_0001>
module attributes {stable_mosaic.version = 11 : i64} {
  func.func @transformer_block_kernel(%arg0: i32, %arg1: memref<256x256xf32, #tpu.memory_space<vmem>>, %arg2: memref<544x128xf32, #tpu.memory_space<vmem>>, %arg3: memref<8x128xf32, #tpu.memory_space<vmem>>, %arg4: memref<256x128xf32, #tpu.memory_space<vmem>>) attributes {dimension_semantics = [#tpu.dimension_semantics<parallel>], iteration_bounds = array<i64: 2>, scalar_prefetch = 0 : i64, scratch_operands = 0 : i64, tpu.core_type = #tpu.core_type<tc>, window_params = [{transform_indices = @transform_0, window_bounds = array<i64: 256, 256>}, {pipeline_mode = #tpu.pipeline_mode<synchronous>, transform_indices = @transform_1, window_bounds = array<i64: 544, 128>}, {pipeline_mode = #tpu.pipeline_mode<synchronous>, transform_indices = @transform_2, window_bounds = array<i64: 8, 128>}, {transform_indices = @transform_3, window_bounds = array<i64: 256, 128>}]} {
    %c0 = arith.constant 0 : index
    %c0_0 = arith.constant 0 : index
    %0 = vector.load %arg1[%c0, %c0_0] : memref<256x256xf32, #tpu.memory_space<vmem>>, vector<256x256xf32>
    %1 = vector.extract_strided_slice %0 {offsets = [0, 0], sizes = [256, 128], strides = [1, 1]} : vector<256x256xf32> to vector<256x128xf32>
    %2 = vector.extract_strided_slice %0 {offsets = [0, 128], sizes = [256, 128], strides = [1, 1]} : vector<256x256xf32> to vector<256x128xf32>
    %c0_1 = arith.constant 0 : index
    %c0_2 = arith.constant 0 : index
    %3 = vector.load %arg2[%c0_1, %c0_2] : memref<544x128xf32, #tpu.memory_space<vmem>>, vector<128x128xf32>
    %cst = arith.constant dense<0.000000e+00> : vector<256x128xf32>
    %4 = tpu.matmul %1, %3, %cst {dimension_numbers = #tpu.dot_dimension_numbers<[1], [0], [0], [1], [0, 0, 1, 1], [], []>} : vector<256x128xf32>, vector<128x128xf32>, vector<256x128xf32> -> vector<256x128xf32>
    %5 = vector.extract_strided_slice %4 {offsets = [0, 0], sizes = [256, 32], strides = [1, 1]} : vector<256x128xf32> to vector<256x32xf32>
    %6 = vector.extract_strided_slice %4 {offsets = [0, 32], sizes = [256, 32], strides = [1, 1]} : vector<256x128xf32> to vector<256x32xf32>
    %7 = vector.extract_strided_slice %4 {offsets = [0, 48], sizes = [256, 32], strides = [1, 1]} : vector<256x128xf32> to vector<256x32xf32>
    %8 = vector.extract_strided_slice %4 {offsets = [0, 80], sizes = [256, 32], strides = [1, 1]} : vector<256x128xf32> to vector<256x32xf32>
    %9 = vector.extract_strided_slice %4 {offsets = [0, 96], sizes = [256, 32], strides = [1, 1]} : vector<256x128xf32> to vector<256x32xf32>
    %10 = tpu.iota {dimensions = array<i32: 1>} : vector<256x32xi32>
    %c16_i32 = arith.constant 16 : i32
    %11 = vector.broadcast %c16_i32 : i32 to vector<256x32xi32>
    %12 = arith.cmpi slt, %10, %11 : vector<256x32xi32>
    %13 = arith.subf %6, %7 : vector<256x32xf32>
    %14 = arith.mulf %5, %13 : vector<256x32xf32>
    %cst_3 = arith.constant 0.000000e+00 : f32
    %15 = vector.broadcast %cst_3 : f32 to vector<256x32xf32>
    %16 = arith.select %12, %14, %15 : vector<256x32xi1>, vector<256x32xf32>
    %cst_4 = arith.constant dense<0.000000e+00> : vector<256xf32>
    %17 = vector.multi_reduction <add>, %16, %cst_4 [1] : vector<256x32xf32> to vector<256xf32>
    %18 = vector.shape_cast %17 : vector<256xf32> to vector<256x1xf32>
    %cst_5 = arith.constant dense<0.000000e+00> : vector<256xf32>
    %19 = vector.multi_reduction <add>, %14, %cst_5 [1] : vector<256x32xf32> to vector<256xf32>
    %20 = vector.shape_cast %19 : vector<256xf32> to vector<256x1xf32>
    %21 = arith.subf %20, %18 : vector<256x1xf32>
    %22 = vector.shape_cast %18 : vector<256x1xf32> to vector<256x1xf32>
    %23 = vector.broadcast %22 : vector<256x1xf32> to vector<256x32xf32>
    %24 = vector.shape_cast %21 : vector<256x1xf32> to vector<256x1xf32>
    %25 = vector.broadcast %24 : vector<256x1xf32> to vector<256x32xf32>
    %26 = arith.select %12, %23, %25 : vector<256x32xi1>, vector<256x32xf32>
    %cst_6 = arith.constant 2.500000e-01 : f32
    %27 = vector.broadcast %cst_6 : f32 to vector<256x32xf32>
    %28 = arith.mulf %27, %26 : vector<256x32xf32>
    %29 = arith.negf %28 : vector<256x32xf32>
    %30 = math.exp %29 : vector<256x32xf32>
    %cst_7 = arith.constant 1.000000e+00 : f32
    %31 = vector.broadcast %cst_7 : f32 to vector<256x32xf32>
    %32 = arith.addf %31, %30 : vector<256x32xf32>
    %33 = arith.divf %31, %32 : vector<256x32xf32>
    %34 = arith.mulf %33, %8 : vector<256x32xf32>
    %cst_8 = arith.constant 1.000000e+00 : f32
    %35 = vector.broadcast %cst_8 : f32 to vector<256x32xf32>
    %36 = arith.subf %35, %33 : vector<256x32xf32>
    %37 = arith.mulf %36, %9 : vector<256x32xf32>
    %38 = arith.addf %34, %37 : vector<256x32xf32>
    %c128 = arith.constant 128 : index
    %c0_9 = arith.constant 0 : index
    %39 = vector.load %arg2[%c128, %c0_9] : memref<544x128xf32, #tpu.memory_space<vmem>>, vector<32x128xf32>
    %cst_10 = arith.constant dense<0.000000e+00> : vector<256x128xf32>
    %40 = tpu.matmul %38, %39, %cst_10 {dimension_numbers = #tpu.dot_dimension_numbers<[1], [0], [0], [1], [0, 0, 1, 1], [], []>} : vector<256x32xf32>, vector<32x128xf32>, vector<256x128xf32> -> vector<256x128xf32>
    %41 = arith.addf %1, %40 : vector<256x128xf32>
    %c160 = arith.constant 160 : index
    %c0_11 = arith.constant 0 : index
    %42 = vector.load %arg2[%c160, %c0_11] : memref<544x128xf32, #tpu.memory_space<vmem>>, vector<128x128xf32>
    %cst_12 = arith.constant dense<0.000000e+00> : vector<256x128xf32>
    %43 = tpu.matmul %41, %42, %cst_12 {dimension_numbers = #tpu.dot_dimension_numbers<[1], [0], [0], [1], [0, 0, 1, 1], [], []>} : vector<256x128xf32>, vector<128x128xf32>, vector<256x128xf32> -> vector<256x128xf32>
    %44 = arith.negf %43 : vector<256x128xf32>
    %45 = math.exp %44 : vector<256x128xf32>
    %cst_13 = arith.constant 1.000000e+00 : f32
    %46 = vector.broadcast %cst_13 : f32 to vector<256x128xf32>
    %47 = arith.addf %46, %45 : vector<256x128xf32>
    %48 = arith.divf %46, %47 : vector<256x128xf32>
    %49 = arith.mulf %43, %48 : vector<256x128xf32>
    %50 = tpu.iota {dimensions = array<i32: 1>} : vector<256x128xi32>
    %51 = vector.extract_strided_slice %2 {offsets = [0, 40], sizes = [256, 1], strides = [1, 1]} : vector<256x128xf32> to vector<256x1xf32>
    %c16_i32_14 = arith.constant 16 : i32
    %52 = vector.broadcast %c16_i32_14 : i32 to vector<256x128xi32>
    %53 = arith.cmpi slt, %50, %52 : vector<256x128xi32>
    %cst_15 = arith.constant 1.000000e+00 : f32
    %54 = vector.broadcast %cst_15 : f32 to vector<256x128xf32>
    %55 = vector.shape_cast %51 : vector<256x1xf32> to vector<256x1xf32>
    %56 = vector.broadcast %55 : vector<256x1xf32> to vector<256x128xf32>
    %57 = arith.select %53, %54, %56 : vector<256x128xi1>, vector<256x128xf32>
    %c40_i32 = arith.constant 40 : i32
    %58 = vector.broadcast %c40_i32 : i32 to vector<256x128xi32>
    %59 = arith.cmpi slt, %50, %58 : vector<256x128xi32>
    %60 = arith.negf %2 : vector<256x128xf32>
    %61 = math.exp %60 : vector<256x128xf32>
    %cst_16 = arith.constant 1.000000e+00 : f32
    %62 = vector.broadcast %cst_16 : f32 to vector<256x128xf32>
    %63 = arith.addf %62, %61 : vector<256x128xf32>
    %64 = arith.divf %62, %63 : vector<256x128xf32>
    %65 = arith.mulf %2, %64 : vector<256x128xf32>
    %66 = arith.mulf %65, %57 : vector<256x128xf32>
    %67 = arith.select %59, %66, %2 : vector<256x128xi1>, vector<256x128xf32>
    %c288 = arith.constant 288 : index
    %c0_17 = arith.constant 0 : index
    %68 = vector.load %arg2[%c288, %c0_17] : memref<544x128xf32, #tpu.memory_space<vmem>>, vector<128x128xf32>
    %cst_18 = arith.constant dense<0.000000e+00> : vector<256x128xf32>
    %69 = tpu.matmul %67, %68, %cst_18 {dimension_numbers = #tpu.dot_dimension_numbers<[1], [0], [0], [1], [0, 0, 1, 1], [], []>} : vector<256x128xf32>, vector<128x128xf32>, vector<256x128xf32> -> vector<256x128xf32>
    %70 = arith.addf %49, %69 : vector<256x128xf32>
    %c416 = arith.constant 416 : index
    %c0_19 = arith.constant 0 : index
    %71 = vector.load %arg2[%c416, %c0_19] : memref<544x128xf32, #tpu.memory_space<vmem>>, vector<128x128xf32>
    %cst_20 = arith.constant dense<0.000000e+00> : vector<256x128xf32>
    %72 = tpu.matmul %70, %71, %cst_20 {dimension_numbers = #tpu.dot_dimension_numbers<[1], [0], [0], [1], [0, 0, 1, 1], [], []>} : vector<256x128xf32>, vector<128x128xf32>, vector<256x128xf32> -> vector<256x128xf32>
    %73 = arith.addf %41, %72 : vector<256x128xf32>
    %c32_i32 = arith.constant 32 : i32
    %74 = vector.broadcast %c32_i32 : i32 to vector<256x128xi32>
    %75 = arith.cmpi slt, %50, %74 : vector<256x128xi32>
    %cst_21 = arith.constant 0.000000e+00 : f32
    %76 = vector.broadcast %cst_21 : f32 to vector<256x128xf32>
    %77 = arith.select %75, %73, %76 : vector<256x128xi1>, vector<256x128xf32>
    %cst_22 = arith.constant dense<0.000000e+00> : vector<256xf32>
    %78 = vector.multi_reduction <add>, %77, %cst_22 [1] : vector<256x128xf32> to vector<256xf32>
    %79 = vector.shape_cast %78 : vector<256xf32> to vector<256x1xf32>
    %cst_23 = arith.constant 3.125000e-02 : f32
    %80 = vector.broadcast %cst_23 : f32 to vector<256x1xf32>
    %81 = arith.mulf %79, %80 : vector<256x1xf32>
    %82 = vector.broadcast %81 : vector<256x1xf32> to vector<256x128xf32>
    %83 = arith.subf %73, %82 : vector<256x128xf32>
    %cst_24 = arith.constant 0.000000e+00 : f32
    %84 = vector.broadcast %cst_24 : f32 to vector<256x128xf32>
    %85 = arith.select %75, %83, %84 : vector<256x128xi1>, vector<256x128xf32>
    %86 = arith.mulf %85, %85 : vector<256x128xf32>
    %cst_25 = arith.constant dense<0.000000e+00> : vector<256xf32>
    %87 = vector.multi_reduction <add>, %86, %cst_25 [1] : vector<256x128xf32> to vector<256xf32>
    %88 = vector.shape_cast %87 : vector<256xf32> to vector<256x1xf32>
    %cst_26 = arith.constant 3.125000e-02 : f32
    %89 = vector.broadcast %cst_26 : f32 to vector<256x1xf32>
    %90 = arith.mulf %88, %89 : vector<256x1xf32>
    %cst_27 = arith.constant 9.99999997E-7 : f32
    %91 = vector.broadcast %cst_27 : f32 to vector<256x1xf32>
    %92 = arith.addf %90, %91 : vector<256x1xf32>
    %93 = math.rsqrt %92 : vector<256x1xf32>
    %94 = vector.broadcast %93 : vector<256x1xf32> to vector<256x128xf32>
    %95 = arith.mulf %85, %94 : vector<256x128xf32>
    %c0_28 = arith.constant 0 : index
    %c0_29 = arith.constant 0 : index
    %96 = vector.load %arg3[%c0_28, %c0_29] : memref<8x128xf32, #tpu.memory_space<vmem>>, vector<1x128xf32>
    %97 = vector.broadcast %96 : vector<1x128xf32> to vector<256x128xf32>
    %98 = arith.mulf %95, %97 : vector<256x128xf32>
    %c1 = arith.constant 1 : index
    %c0_30 = arith.constant 0 : index
    %99 = vector.load %arg3[%c1, %c0_30] : memref<8x128xf32, #tpu.memory_space<vmem>>, vector<1x128xf32>
    %100 = vector.broadcast %99 : vector<1x128xf32> to vector<256x128xf32>
    %101 = arith.addf %98, %100 : vector<256x128xf32>
    %c0_31 = arith.constant 0 : index
    %c0_32 = arith.constant 0 : index
    %102 = vector.load %arg4[%c0_31, %c0_32] : memref<256x128xf32, #tpu.memory_space<vmem>>, vector<256x128xf32>
    tpu.vector_store %arg4[%c0_31, %c0_32], %101 {strides = array<i32>} : memref<256x128xf32, #tpu.memory_space<vmem>>, vector<256x128xf32>,
    return
  }
  func.func @transform_0(%arg0: i32) -> (i32, i32) {
    %c0_i32 = arith.constant 0 : i32
    %c0_i32_0 = arith.constant 0 : i32
    return %arg0, %c0_i32 : i32, i32
  }
  func.func @transform_1(%arg0: i32) -> (i32, i32) {
    %c0_i32 = arith.constant 0 : i32
    %c0_i32_0 = arith.constant 0 : i32
    %c0_i32_1 = arith.constant 0 : i32
    return %c0_i32, %c0_i32_0 : i32, i32
  }
  func.func @transform_2(%arg0: i32) -> (i32, i32) {
    %c0_i32 = arith.constant 0 : i32
    %c0_i32_0 = arith.constant 0 : i32
    %c0_i32_1 = arith.constant 0 : i32
    return %c0_i32, %c0_i32_0 : i32, i32
  }
  func.func @transform_3(%arg0: i32) -> (i32, i32) {
    %c0_i32 = arith.constant 0 : i32
    %c0_i32_0 = arith.constant 0 : i32
    return %arg0, %c0_i32 : i32, i32
  }
}

</mosaic_0001>

<llo_original>
// kernel: transformer_block.1
$region0: #{transformer_block.1}
  #allocation0 [shape = 'u32[]', space=smem, size = 0x4, offset = 0x4, fixed_abs, tag = 'smem constant byte address 0x4 - core index']
  #allocation1 [shape = 'u32[144,128]{1,0:T(1,128)}', space=vmem, size = 0x12000, scoped, tag = 'internal scratch']
  %s0 = inlined_call_operand.vmem [shape: f32[512,256], index: 0, kind: input, shape index: {}]
  %s1 = inlined_call_operand.vmem [shape: f32[544,128], index: 1, kind: input, shape index: {}]
  %s2 = inlined_call_operand.vmem [shape: f32[8,128], index: 2, kind: input, shape index: {}]
  %s3 = inlined_call_operand.vmem [shape: f32[512,128], index: 3, kind: output, shape index: {}]
  %s4 = sld [smem:[#allocation0]]
  $region45: #{transformer_block.1} parent=0
    _
  %s6 = ssub.s32 1, %s4
  %s7 = scalar_select 0, %s6, %s4
  loop: start=0, step=1, limit=4
  $region2: #{transformer_block.1} parent=0 // loop_pre_header
    _
  $region3: #{transformer_block.1} parent=0 // loop_header
    %s9 = sphi 0, %s13
    %p10 = scmp.ge.s32.totalorder %s9, 4
    %s19 = sphi 0, %s21
    %s22 = sphi 0, %s19
    %s23 = sphi 0, %s22
    %s39 = sphi 0, %s23
    %s43 = sphi 0, %s43
    %s45 = sphi 0, %s43
    %s46 = sphi 0, %s45
    %s60 = sphi 0, %s46
    %s64 = sphi 0, %s64
    %s66 = sphi 0, %s64
    %s67 = sphi 0, %s66
    %s81 = sphi 0, %s67
    %s87 = sphi 0, %s89
    %s90 = sphi 0, %s87
    %s91 = sphi 0, %s90
    %s107 = sphi 0, %s91
  $region4: #{transformer_block.1} parent=0 // loop_header_branch
    %12 = sbr.rel (%p10) target = $region8
  $region5: #{transformer_block.1} parent=0 // loop_body
    %s14 = ssub.s32 %s9, 1
    %s15 = ssub.s32 %s9, 2
    %s16 = sadd.s32 %s9, 1
    %s17 = ssub.s32 %s9, %s16
    %p18 = scmp.eq.s32.totalorder %s17, 0
    %s20 = sadd.s32 %s19, 1
    %s21 = scalar_select %p18, %s19, %s20
    %p24 = pneg %p18
    %p25 = scmp.eq.s32.totalorder %s9, 1
    %p26 = por %p24, %p25
    %p27 = scmp.ne.s32.totalorder %s19, %s22
    %p28 = scmp.eq.s32.totalorder %s9, 0
    %p29 = por %p27, %p28
    %p30 = scmp.ne.s32.totalorder %s19, %s22
    %p31 = scmp.eq.s32.totalorder %s14, 1
    %p32 = por %p30, %p31
    %p33 = scmp.ne.s32.totalorder %s22, %s23
    %p34 = scmp.eq.s32.totalorder %s14, 0
    %p35 = por %p33, %p34
    %p36 = scmp.ne.s32.totalorder %s22, %s23
    %p37 = scmp.eq.s32.totalorder %s15, 1
    %p38 = por %p36, %p37
    %p40 = scmp.ne.s32.totalorder %s23, %s39
    %p41 = scmp.eq.s32.totalorder %s15, 0
    %p42 = por %p40, %p41
    %s44 = sadd.s32 %s43, 1
    %p47 = scmp.eq.s32.totalorder %s9, 1
    %p48 = scmp.ne.s32.totalorder %s43, %s45
    %p49 = scmp.eq.s32.totalorder %s9, 0
    %p50 = por %p48, %p49
    %p51 = scmp.ne.s32.totalorder %s43, %s45
    %p52 = scmp.eq.s32.totalorder %s14, 1
    %p53 = por %p51, %p52
    %p54 = scmp.ne.s32.totalorder %s45, %s46
    %p55 = scmp.eq.s32.totalorder %s14, 0
    %p56 = por %p54, %p55
    %p57 = scmp.ne.s32.totalorder %s45, %s46
    %p58 = scmp.eq.s32.totalorder %s15, 1
    %p59 = por %p57, %p58
    %p61 = scmp.ne.s32.totalorder %s46, %s60
    %p62 = scmp.eq.s32.totalorder %s15, 0
    %p63 = por %p61, %p62
    %s65 = sadd.s32 %s64, 1
    %p68 = scmp.eq.s32.totalorder %s9, 1
    %p69 = scmp.ne.s32.totalorder %s64, %s66
    %p70 = scmp.eq.s32.totalorder %s9, 0
    %p71 = por %p69, %p70
    %p72 = scmp.ne.s32.totalorder %s64, %s66
    %p73 = scmp.eq.s32.totalorder %s14, 1
    %p74 = por %p72, %p73
    %p75 = scmp.ne.s32.totalorder %s66, %s67
    %p76 = scmp.eq.s32.totalorder %s14, 0
    %p77 = por %p75, %p76
    %p78 = scmp.ne.s32.totalorder %s66, %s67
    %p79 = scmp.eq.s32.totalorder %s15, 1
    %p80 = por %p78, %p79
    %p82 = scmp.ne.s32.totalorder %s67, %s81
    %p83 = scmp.eq.s32.totalorder %s15, 0
    %p84 = por %p82, %p83
    %s85 = ssub.s32 %s9, %s16
    %p86 = scmp.eq.s32.totalorder %s85, 0
    %s88 = sadd.s32 %s87, 1
    %s89 = scalar_select %p86, %s87, %s88
    %p92 = pneg %p86
    %p93 = scmp.eq.s32.totalorder %s9, 1
    %p94 = por %p92, %p93
    %p95 = scmp.ne.s32.totalorder %s87, %s90
    %p96 = scmp.eq.s32.totalorder %s9, 0
    %p97 = por %p95, %p96
    %p98 = scmp.ne.s32.totalorder %s87, %s90
    %p99 = scmp.eq.s32.totalorder %s14, 1
    %p100 = por %p98, %p99
    %p101 = scmp.ne.s32.totalorder %s90, %s91
    %p102 = scmp.eq.s32.totalorder %s14, 0
    %p103 = por %p101, %p102
    %p104 = scmp.ne.s32.totalorder %s90, %s91
    %p105 = scmp.eq.s32.totalorder %s15, 1
    %p106 = por %p104, %p105
    %p108 = scmp.ne.s32.totalorder %s91, %s107
    %p109 = scmp.eq.s32.totalorder %s15, 0
    %p110 = por %p108, %p109
    %p111 = scmp.le.s32.totalorder 1, %s9
    %p112 = scmp.lt.s32.totalorder %s9, 3
    %p113 = pnand %p111, %p112
    %p114 = pneg %p113
    // Predicated region
    $region9: #{transformer_block.1} parent=5 // pred_check
      _
    $region10: #{transformer_block.1} parent=5 // pred_check_branch
      %116 = sbr.rel (%p113) target = $region12
    $region11: #{transformer_block.1} parent=5 // pred_region
      %s117 = ssub.s32 %s9, 1
      // Predicated region
      $region13: #{transformer_block.1} parent=11 // pred_check
        %p118 = pneg %p56
      $region14: #{transformer_block.1} parent=11 // pred_check_branch
        %120 = sbr.rel (%p118) target = $region16
      $region15: #{transformer_block.1} parent=11 // pred_region
        _
      $region16: #{transformer_block.1} parent=11 // pred_fallthru
        _
      // Predicated region
      $region17: #{transformer_block.1} parent=11 // pred_check
        %p121 = pneg %p77
      $region18: #{transformer_block.1} parent=11 // pred_check_branch
        %123 = sbr.rel (%p121) target = $region20
      $region19: #{transformer_block.1} parent=11 // pred_region
        _
      $region20: #{transformer_block.1} parent=11 // pred_fallthru
        _
    $region12: #{transformer_block.1} parent=5 // pred_fallthru
      _
    %p124 = scmp.lt.s32.totalorder %s9, 2
    // Predicated region
    $region21: #{transformer_block.1} parent=5 // pred_check
      %p125 = pneg %p124
    $region22: #{transformer_block.1} parent=5 // pred_check_branch
      %127 = sbr.rel (%p125) target = $region24
    $region23: #{transformer_block.1} parent=5 // pred_region
      // Predicated region
      $region25: #{transformer_block.1} parent=23 // pred_check
        %p128 = pneg %p29
      $region26: #{transformer_block.1} parent=23 // pred_check_branch
        %130 = sbr.rel (%p128) target = $region28
      $region27: #{transformer_block.1} parent=23 // pred_region
        %s131 = smul.u32 32, %s9
        %p132 = scmp.lt.s32.totalorder %s131, 63
        %s133 = scalar_select %p132, %s131, 63
        %s134 = smul.addr %s133, 2
        %s135 = smul.addr %s134, 8
        %s136 = scalar_lea.vmem %s0, %s135
        %s137 = smul.u32 32, %s9
      $region28: #{transformer_block.1} parent=23 // pred_fallthru
        _
    $region24: #{transformer_block.1} parent=5 // pred_fallthru
      _
    %p138 = scmp.le.s32.totalorder 1, %s9
    %p139 = scmp.lt.s32.totalorder %s9, 3
    %p140 = pnand %p138, %p139
    %p141 = pneg %p140
    // Predicated region
    $region29: #{transformer_block.1} parent=5 // pred_check
      _
    $region30: #{transformer_block.1} parent=5 // pred_check_branch
      %143 = sbr.rel (%p140) target = $region32
    $region31: #{transformer_block.1} parent=5 // pred_region
      %s144 = ssub.s32 %s9, 1
      %s145 = smul.u32 32, %s14
      %p146 = scmp.lt.s32.totalorder %s145, 63
      %s147 = scalar_select %p146, %s145, 63
      %s148 = smul.addr %s147, 2
      %s149 = smul.addr %s148, 8
      %s150 = scalar_lea.vmem %s0, %s149
      %p151 = pneg %p35
      %p152 = pneg %p32
      %p153 = pneg %p56
      %p154 = pneg %p53
      %p155 = pneg %p77
      %p156 = pneg %p74
      %p157 = pneg %p103
      %p158 = pneg %p100
      %s159 = smul.u32 32, %s14
      %p160 = scmp.lt.s32.totalorder %s159, 63
      %s161 = scalar_select %p160, %s159, 63
      %s162 = smul.addr %s161, 8
      %s163 = scalar_lea.vmem %s3, %s162
      %s164 = smul.u32 32, %s14
      %p165 = scmp.lt.s32.totalorder %s164, 63
      %s166 = scalar_select %p165, %s164, 63
      %s167 = smul.addr %s166, 2
      %s168 = smul.addr %s167, 8
      %s169 = scalar_lea.vmem %s0, %s168
      %s170 = smul.u32 32, %s14
      %s171 = smul.u32 32, %s14
      %p172 = scmp.lt.s32.totalorder %s171, 63
      %s173 = scalar_select %p172, %s171, 63
      %s174 = smul.addr %s173, 8
      %s175 = scalar_lea.vmem %s3, %s174
      %s176 = smul.u32 32, %s14
      %v177 = vld [vmem:[%s169] sm:$0xff]
      %v178 = vld [vmem:[%s169 + $0x8] sm:$0xff]
      %v179 = vld [vmem:[%s169 + $0x10] sm:$0xff]
      %v180 = vld [vmem:[%s169 + $0x18] sm:$0xff]
      %v181 = vld [vmem:[%s169 + $0x20] sm:$0xff]
      %v182 = vld [vmem:[%s169 + $0x28] sm:$0xff]
      %v183 = vld [vmem:[%s169 + $0x30] sm:$0xff]
      %v184 = vld [vmem:[%s169 + $0x38] sm:$0xff]
      %v185 = vld [vmem:[%s169 + $0x40] sm:$0xff]
      %v186 = vld [vmem:[%s169 + $0x48] sm:$0xff]
      %v187 = vld [vmem:[%s169 + $0x50] sm:$0xff]
      %v188 = vld [vmem:[%s169 + $0x58] sm:$0xff]
      %v189 = vld [vmem:[%s169 + $0x60] sm:$0xff]
      %v190 = vld [vmem:[%s169 + $0x68] sm:$0xff]
      %v191 = vld [vmem:[%s169 + $0x70] sm:$0xff]
      %v192 = vld [vmem:[%s169 + $0x78] sm:$0xff]
      %v193 = vld [vmem:[%s169 + $0x80] sm:$0xff]
      %v194 = vld [vmem:[%s169 + $0x88] sm:$0xff]
      %v195 = vld [vmem:[%s169 + $0x90] sm:$0xff]
      %v196 = vld [vmem:[%s169 + $0x98] sm:$0xff]
      %v197 = vld [vmem:[%s169 + $0xa0] sm:$0xff]
      %v198 = vld [vmem:[%s169 + $0xa8] sm:$0xff]
      %v199 = vld [vmem:[%s169 + $0xb0] sm:$0xff]
      %v200 = vld [vmem:[%s169 + $0xb8] sm:$0xff]
      %v201 = vld [vmem:[%s169 + $0xc0] sm:$0xff]
      %v202 = vld [vmem:[%s169 + $0xc8] sm:$0xff]
      %v203 = vld [vmem:[%s169 + $0xd0] sm:$0xff]
      %v204 = vld [vmem:[%s169 + $0xd8] sm:$0xff]
      %v205 = vld [vmem:[%s169 + $0xe0] sm:$0xff]
      %v206 = vld [vmem:[%s169 + $0xe8] sm:$0xff]
      %v207 = vld [vmem:[%s169 + $0xf0] sm:$0xff]
      %v208 = vld [vmem:[%s169 + $0xf8] sm:$0xff]
      %v209 = vld [vmem:[%s169 + $0x100] sm:$0xff]
      %v210 = vld [vmem:[%s169 + $0x108] sm:$0xff]
      %v211 = vld [vmem:[%s169 + $0x110] sm:$0xff]
      %v212 = vld [vmem:[%s169 + $0x118] sm:$0xff]
      %v213 = vld [vmem:[%s169 + $0x120] sm:$0xff]
      %v214 = vld [vmem:[%s169 + $0x128] sm:$0xff]
      %v215 = vld [vmem:[%s169 + $0x130] sm:$0xff]
      %v216 = vld [vmem:[%s169 + $0x138] sm:$0xff]
      %v217 = vld [vmem:[%s169 + $0x140] sm:$0xff]
      %v218 = vld [vmem:[%s169 + $0x148] sm:$0xff]
      %v219 = vld [vmem:[%s169 + $0x150] sm:$0xff]
      %v220 = vld [vmem:[%s169 + $0x158] sm:$0xff]
      %v221 = vld [vmem:[%s169 + $0x160] sm:$0xff]
      %v222 = vld [vmem:[%s169 + $0x168] sm:$0xff]
      %v223 = vld [vmem:[%s169 + $0x170] sm:$0xff]
      %v224 = vld [vmem:[%s169 + $0x178] sm:$0xff]
      %v225 = vld [vmem:[%s169 + $0x180] sm:$0xff]
      %v226 = vld [vmem:[%s169 + $0x188] sm:$0xff]
      %v227 = vld [vmem:[%s169 + $0x190] sm:$0xff]
      %v228 = vld [vmem:[%s169 + $0x198] sm:$0xff]
      %v229 = vld [vmem:[%s169 + $0x1a0] sm:$0xff]
      %v230 = vld [vmem:[%s169 + $0x1a8] sm:$0xff]
      %v231 = vld [vmem:[%s169 + $0x1b0] sm:$0xff]
      %v232 = vld [vmem:[%s169 + $0x1b8] sm:$0xff]
      %v233 = vld [vmem:[%s169 + $0x1c0] sm:$0xff]
      %v234 = vld [vmem:[%s169 + $0x1c8] sm:$0xff]
      %v235 = vld [vmem:[%s169 + $0x1d0] sm:$0xff]
      %v236 = vld [vmem:[%s169 + $0x1d8] sm:$0xff]
      %v237 = vld [vmem:[%s169 + $0x1e0] sm:$0xff]
      %v238 = vld [vmem:[%s169 + $0x1e8] sm:$0xff]
      %v239 = vld [vmem:[%s169 + $0x1f0] sm:$0xff]
      %v240 = vld [vmem:[%s169 + $0x1f8] sm:$0xff]
      %v241 = vld [vmem:[%s1] sm:$0xff]
      %v242 = vld [vmem:[%s1 + $0x8] sm:$0xff]
      %v243 = vld [vmem:[%s1 + $0x10] sm:$0xff]
      %v244 = vld [vmem:[%s1 + $0x18] sm:$0xff]
      %v245 = vld [vmem:[%s1 + $0x20] sm:$0xff]
      %v246 = vld [vmem:[%s1 + $0x28] sm:$0xff]
      %v247 = vld [vmem:[%s1 + $0x30] sm:$0xff]
      %v248 = vld [vmem:[%s1 + $0x38] sm:$0xff]
      %v249 = vld [vmem:[%s1 + $0x40] sm:$0xff]
      %v250 = vld [vmem:[%s1 + $0x48] sm:$0xff]
      %v251 = vld [vmem:[%s1 + $0x50] sm:$0xff]
      %v252 = vld [vmem:[%s1 + $0x58] sm:$0xff]
      %v253 = vld [vmem:[%s1 + $0x60] sm:$0xff]
      %v254 = vld [vmem:[%s1 + $0x68] sm:$0xff]
      %v255 = vld [vmem:[%s1 + $0x70] sm:$0xff]
      %v256 = vld [vmem:[%s1 + $0x78] sm:$0xff]
      %257 = vmatprep.subr.mxu0 0.0
      %258 = vmatpush1.msra.mxu0 %v241
      %259 = vmatprep.subr.mxu0 0.0
      %260 = vmatpush1.msra.mxu0 %v242
      %261 = vmatprep.subr.mxu0 0.0
      %262 = vmatpush1.msra.mxu0 %v243
      %263 = vmatprep.subr.mxu0 0.0
      %264 = vmatpush1.msra.mxu0 %v244
      %265 = vmatprep.subr.mxu0 0.0
      %266 = vmatpush1.msra.mxu0 %v245
      %267 = vmatprep.subr.mxu0 0.0
      %268 = vmatpush1.msra.mxu0 %v246
      %269 = vmatprep.subr.mxu0 0.0
      %270 = vmatpush1.msra.mxu0 %v247
      %271 = vmatprep.subr.mxu0 0.0
      %272 = vmatpush1.msra.mxu0 %v248
      %273 = vmatprep.subr.mxu0 0.0
      %274 = vmatpush1.msra.mxu0 %v249
      %275 = vmatprep.subr.mxu0 0.0
      %276 = vmatpush1.msra.mxu0 %v250
      %277 = vmatprep.subr.mxu0 0.0
      %278 = vmatpush1.msra.mxu0 %v251
      %279 = vmatprep.subr.mxu0 0.0
      %280 = vmatpush1.msra.mxu0 %v252
      %281 = vmatprep.subr.mxu0 0.0
      %282 = vmatpush1.msra.mxu0 %v253
      %283 = vmatprep.subr.mxu0 0.0
      %284 = vmatpush1.msra.mxu0 %v254
      %285 = vmatprep.subr.mxu0 0.0
      %286 = vmatpush1.msra.mxu0 %v255
      %287 = vmatprep.subr.mxu0 0.0
      %288 = vmatpush1.msra.mxu0 %v256
      %289 = vmatprep.subr.mxu0 0.0
      %290 = vmatpush1.msra.mxu0 0.0
      %291 = vmatprep.subr.mxu0 0.0
      %292 = vmatpush1.msra.mxu0 0.0
      %293 = vmatprep.subr.mxu0 0.0
      %294 = vmatpush1.msra.mxu0 0.0
      %295 = vmatprep.subr.mxu0 0.0
      %296 = vmatpush1.msra.mxu0 0.0
      %297 = vmatprep.subr.mxu0 0.0
      %298 = vmatpush1.msra.mxu0 0.0
      %299 = vmatprep.subr.mxu0 0.0
      %300 = vmatpush1.msra.mxu0 0.0
      %301 = vmatprep.subr.mxu0 0.0
      %302 = vmatpush1.msra.mxu0 0.0
      %303 = vmatprep.subr.mxu0 0.0
      %304 = vmatpush1.msra.mxu0 0.0
      %305 = vmatprep.subr.mxu0 0.0
      %306 = vmatpush1.msra.mxu0 0.0
      %307 = vmatprep.subr.mxu0 0.0
      %308 = vmatpush1.msra.mxu0 0.0
      %309 = vmatprep.subr.mxu0 0.0
      %310 = vmatpush1.msra.mxu0 0.0
      %311 = vmatprep.subr.mxu0 0.0
      %312 = vmatpush1.msra.mxu0 0.0
      %313 = vmatprep.subr.mxu0 0.0
      %314 = vmatpush1.msra.mxu0 0.0
      %315 = vmatprep.subr.mxu0 0.0
      %316 = vmatpush1.msra.mxu0 0.0
      %317 = vmatprep.subr.mxu0 0.0
      %318 = vmatpush1.msra.mxu0 0.0
      %319 = vmatprep.subr.mxu0 0.0
      %320 = vmatpush1.msra.mxu0 0.0
      %321 = vmatprep.mubr.f32.mxu0 0.0
      %322 = vmatmul.mubr.f32.gmra.mrb[0].mxu0 %v177
      %v323 = vpop.f32.mrb[0].mxu0
      %v324 = vadd.f32 0.0, %v323
      %v325 = vpop.f32.mrb[0].mxu0
      %326 = vmatprep.mubr.f32.mxu0 0.0
      %327 = vmatmul.mubr.f32.gmra.mrb[0].mxu0 %v179
      %v328 = vpop.f32.mrb[0].mxu0
      %v329 = vadd.f32 0.0, %v328
      %v330 = vpop.f32.mrb[0].mxu0
      %331 = vmatprep.mubr.f32.mxu0 0.0
      %332 = vmatmul.mubr.f32.gmra.mrb[0].mxu0 %v181
      %v333 = vpop.f32.mrb[0].mxu0
      %v334 = vadd.f32 0.0, %v333
      %v335 = vpop.f32.mrb[0].mxu0
      %336 = vmatprep.mubr.f32.mxu0 0.0
      %337 = vmatmul.mubr.f32.gmra.mrb[0].mxu0 %v183
      %v338 = vpop.f32.mrb[0].mxu0
      %v339 = vadd.f32 0.0, %v338
      %v340 = vpop.f32.mrb[0].mxu0
      %341 = vmatprep.mubr.f32.mxu0 0.0
      %342 = vmatmul.mubr.f32.gmra.mrb[0].mxu0 %v185
      %v343 = vpop.f32.mrb[0].mxu0
      %v344 = vadd.f32 0.0, %v343
      %v345 = vpop.f32.mrb[0].mxu0
      %346 = vmatprep.mubr.f32.mxu0 0.0
      %347 = vmatmul.mubr.f32.gmra.mrb[0].mxu0 %v187
      %v348 = vpop.f32.mrb[0].mxu0
      %v349 = vadd.f32 0.0, %v348
      %v350 = vpop.f32.mrb[0].mxu0
      %351 = vmatprep.mubr.f32.mxu0 0.0
      %352 = vmatmul.mubr.f32.gmra.mrb[0].mxu0 %v189
      %v353 = vpop.f32.mrb[0].mxu0
      %v354 = vadd.f32 0.0, %v353
      %v355 = vpop.f32.mrb[0].mxu0
      %356 = vmatprep.mubr.f32.mxu0 0.0
      %357 = vmatmul.mubr.f32.gmra.mrb[0].mxu0 %v191
      %v358 = vpop.f32.mrb[0].mxu0
      %v359 = vadd.f32 0.0, %v358
      %v360 = vpop.f32.mrb[0].mxu0
      %361 = vmatprep.mubr.f32.mxu0 0.0
      %362 = vmatmul.mubr.f32.gmra.mrb[0].mxu0 %v193
      %v363 = vpop.f32.mrb[0].mxu0
      %v364 = vadd.f32 0.0, %v363
      %v365 = vpop.f32.mrb[0].mxu0
      %366 = vmatprep.mubr.f32.mxu0 0.0
      %367 = vmatmul.mubr.f32.gmra.mrb[0].mxu0 %v195
      %v368 = vpop.f32.mrb[0].mxu0
      %v369 = vadd.f32 0.0, %v368
      %v370 = vpop.f32.mrb[0].mxu0
      %371 = vmatprep.mubr.f32.mxu0 0.0
      %372 = vmatmul.mubr.f32.gmra.mrb[0].mxu0 %v197
      %v373 = vpop.f32.mrb[0].mxu0
      %v374 = vadd.f32 0.0, %v373
      %v375 = vpop.f32.mrb[0].mxu0
      %376 = vmatprep.mubr.f32.mxu0 0.0
      %377 = vmatmul.mubr.f32.gmra.mrb[0].mxu0 %v199
      %v378 = vpop.f32.mrb[0].mxu0
      %v379 = vadd.f32 0.0, %v378
      %v380 = vpop.f32.mrb[0].mxu0
      %381 = vmatprep.mubr.f32.mxu0 0.0
      %382 = vmatmul.mubr.f32.gmra.mrb[0].mxu0 %v201
      %v383 = vpop.f32.mrb[0].mxu0
      %v384 = vadd.f32 0.0, %v383
      %v385 = vpop.f32.mrb[0].mxu0
      %386 = vmatprep.mubr.f32.mxu0 0.0
      %387 = vmatmul.mubr.f32.gmra.mrb[0].mxu0 %v203
      %v388 = vpop.f32.mrb[0].mxu0
      %v389 = vadd.f32 0.0, %v388
      %v390 = vpop.f32.mrb[0].mxu0
      %391 = vmatprep.mubr.f32.mxu0 0.0
      %392 = vmatmul.mubr.f32.gmra.mrb[0].mxu0 %v205
      %v393 = vpop.f32.mrb[0].mxu0
      %v394 = vadd.f32 0.0, %v393
      %v395 = vpop.f32.mrb[0].mxu0
      %396 = vmatprep.mubr.f32.mxu0 0.0
      %397 = vmatmul.mubr.f32.gmra.mrb[0].mxu0 %v207
      %v398 = vpop.f32.mrb[0].mxu0
      %v399 = vadd.f32 0.0, %v398
      %v400 = vpop.f32.mrb[0].mxu0
      %401 = vmatprep.mubr.f32.mxu0 0.0
      %402 = vmatmul.mubr.f32.gmra.mrb[0].mxu0 %v209
      %v403 = vpop.f32.mrb[0].mxu0
      %v404 = vadd.f32 0.0, %v403
      %v405 = vpop.f32.mrb[0].mxu0
      %406 = vmatprep.mubr.f32.mxu0 0.0
      %407 = vmatmul.mubr.f32.gmra.mrb[0].mxu0 %v211
      %v408 = vpop.f32.mrb[0].mxu0
      %v409 = vadd.f32 0.0, %v408
      %v410 = vpop.f32.mrb[0].mxu0
      %411 = vmatprep.mubr.f32.mxu0 0.0
      %412 = vmatmul.mubr.f32.gmra.mrb[0].mxu0 %v213
      %v413 = vpop.f32.mrb[0].mxu0
      %v414 = vadd.f32 0.0, %v413
      %v415 = vpop.f32.mrb[0].mxu0
      %416 = vmatprep.mubr.f32.mxu0 0.0
      %417 = vmatmul.mubr.f32.gmra.mrb[0].mxu0 %v215
      %v418 = vpop.f32.mrb[0].mxu0
      %v419 = vadd.f32 0.0, %v418
      %v420 = vpop.f32.mrb[0].mxu0
      %421 = vmatprep.mubr.f32.mxu0 0.0
      %422 = vmatmul.mubr.f32.gmra.mrb[0].mxu0 %v217
      %v423 = vpop.f32.mrb[0].mxu0
      %v424 = vadd.f32 0.0, %v423
      %v425 = vpop.f32.mrb[0].mxu0
      %426 = vmatprep.mubr.f32.mxu0 0.0
      %427 = vmatmul.mubr.f32.gmra.mrb[0].mxu0 %v219
      %v428 = vpop.f32.mrb[0].mxu0
      %v429 = vadd.f32 0.0, %v428
      %v430 = vpop.f32.mrb[0].mxu0
      %431 = vmatprep.mubr.f32.mxu0 0.0
      %432 = vmatmul.mubr.f32.gmra.mrb[0].mxu0 %v221
      %v433 = vpop.f32.mrb[0].mxu0
      %v434 = vadd.f32 0.0, %v433
      %v435 = vpop.f32.mrb[0].mxu0
      %436 = vmatprep.mubr.f32.mxu0 0.0
      %437 = vmatmul.mubr.f32.gmra.mrb[0].mxu0 %v223
      %v438 = vpop.f32.mrb[0].mxu0
      %v439 = vadd.f32 0.0, %v438
      %v440 = vpop.f32.mrb[0].mxu0
      %441 = vmatprep.mubr.f32.mxu0 0.0
      %442 = vmatmul.mubr.f32.gmra.mrb[0].mxu0 %v225
      %v443 = vpop.f32.mrb[0].mxu0
      %v444 = vadd.f32 0.0, %v443
      %v445 = vpop.f32.mrb[0].mxu0
      %446 = vmatprep.mubr.f32.mxu0 0.0
      %447 = vmatmul.mubr.f32.gmra.mrb[0].mxu0 %v227
      %v448 = vpop.f32.mrb[0].mxu0
      %v449 = vadd.f32 0.0, %v448
      %v450 = vpop.f32.mrb[0].mxu0
      %451 = vmatprep.mubr.f32.mxu0 0.0
      %452 = vmatmul.mubr.f32.gmra.mrb[0].mxu0 %v229
      %v453 = vpop.f32.mrb[0].mxu0
      %v454 = vadd.f32 0.0, %v453
      %v455 = vpop.f32.mrb[0].mxu0
      %456 = vmatprep.mubr.f32.mxu0 0.0
      %457 = vmatmul.mubr.f32.gmra.mrb[0].mxu0 %v231
      %v458 = vpop.f32.mrb[0].mxu0
      %v459 = vadd.f32 0.0, %v458
      %v460 = vpop.f32.mrb[0].mxu0
      %461 = vmatprep.mubr.f32.mxu0 0.0
      %462 = vmatmul.mubr.f32.gmra.mrb[0].mxu0 %v233
      %v463 = vpop.f32.mrb[0].mxu0
      %v464 = vadd.f32 0.0, %v463
      %v465 = vpop.f32.mrb[0].mxu0
      %466 = vmatprep.mubr.f32.mxu0 0.0
      %467 = vmatmul.mubr.f32.gmra.mrb[0].mxu0 %v235
      %v468 = vpop.f32.mrb[0].mxu0
      %v469 = vadd.f32 0.0, %v468
      %v470 = vpop.f32.mrb[0].mxu0
      %471 = vmatprep.mubr.f32.mxu0 0.0
      %472 = vmatmul.mubr.f32.gmra.mrb[0].mxu0 %v237
      %v473 = vpop.f32.mrb[0].mxu0
      %v474 = vadd.f32 0.0, %v473
      %v475 = vpop.f32.mrb[0].mxu0
      %476 = vmatprep.mubr.f32.mxu0 0.0
      %477 = vmatmul.mubr.f32.gmra.mrb[0].mxu0 %v239
      %v478 = vpop.f32.mrb[0].mxu0
      %v479 = vadd.f32 0.0, %v478
      %v480 = vpop.f32.mrb[0].mxu0
      %481 = vdwg.mxu0
      %v482 = vlaneseq
      %v483 = vand.u32 %v482, 127
      %vm484 = vcmp.lt.s32.totalorder %v483, 16
      %517 = vrot.lane.b32.xlu0 %v324, 112
      %v518 = vpop.permute.xlu0 %517
      %519 = vrot.lane.b32.xlu0 %v329, 112
      %v520 = vpop.permute.xlu0 %519
      %521 = vrot.lane.b32.xlu0 %v334, 112
      %v522 = vpop.permute.xlu0 %521
      %523 = vrot.lane.b32.xlu0 %v339, 112
      %v524 = vpop.permute.xlu0 %523
      %525 = vrot.lane.b32.xlu0 %v344, 112
      %v526 = vpop.permute.xlu0 %525
      %527 = vrot.lane.b32.xlu0 %v349, 112
      %v528 = vpop.permute.xlu0 %527
      %529 = vrot.lane.b32.xlu0 %v354, 112
      %v530 = vpop.permute.xlu0 %529
      %531 = vrot.lane.b32.xlu0 %v359, 112
      %v532 = vpop.permute.xlu0 %531
      %533 = vrot.lane.b32.xlu0 %v364, 112
      %v534 = vpop.permute.xlu0 %533
      %535 = vrot.lane.b32.xlu0 %v369, 112
      %v536 = vpop.permute.xlu0 %535
      %537 = vrot.lane.b32.xlu0 %v374, 112
      %v538 = vpop.permute.xlu0 %537
      %539 = vrot.lane.b32.xlu0 %v379, 112
      %v540 = vpop.permute.xlu0 %539
      %541 = vrot.lane.b32.xlu0 %v384, 112
      %v542 = vpop.permute.xlu0 %541
      %543 = vrot.lane.b32.xlu0 %v389, 112
      %v544 = vpop.permute.xlu0 %543
      %545 = vrot.lane.b32.xlu0 %v394, 112
      %v546 = vpop.permute.xlu0 %545
      %547 = vrot.lane.b32.xlu0 %v399, 112
      %v548 = vpop.permute.xlu0 %547
      %549 = vrot.lane.b32.xlu0 %v404, 112
      %v550 = vpop.permute.xlu0 %549
      %551 = vrot.lane.b32.xlu0 %v409, 112
      %v552 = vpop.permute.xlu0 %551
      %553 = vrot.lane.b32.xlu0 %v414, 112
      %v554 = vpop.permute.xlu0 %553
      %555 = vrot.lane.b32.xlu0 %v419, 112
      %v556 = vpop.permute.xlu0 %555
      %557 = vrot.lane.b32.xlu0 %v424, 112
      %v558 = vpop.permute.xlu0 %557
      %559 = vrot.lane.b32.xlu0 %v429, 112
      %v560 = vpop.permute.xlu0 %559
      %561 = vrot.lane.b32.xlu0 %v434, 112
      %v562 = vpop.permute.xlu0 %561
      %563 = vrot.lane.b32.xlu0 %v439, 112
      %v564 = vpop.permute.xlu0 %563
      %565 = vrot.lane.b32.xlu0 %v444, 112
      %v566 = vpop.permute.xlu0 %565
      %567 = vrot.lane.b32.xlu0 %v449, 112
      %v568 = vpop.permute.xlu0 %567
      %569 = vrot.lane.b32.xlu0 %v454, 112
      %v570 = vpop.permute.xlu0 %569
      %571 = vrot.lane.b32.xlu0 %v459, 112
      %v572 = vpop.permute.xlu0 %571
      %573 = vrot.lane.b32.xlu0 %v464, 112
      %v574 = vpop.permute.xlu0 %573
      %575 = vrot.lane.b32.xlu0 %v469, 112
      %v576 = vpop.permute.xlu0 %575
      %577 = vrot.lane.b32.xlu0 %v474, 112
      %v578 = vpop.permute.xlu0 %577
      %579 = vrot.lane.b32.xlu0 %v479, 112
      %v580 = vpop.permute.xlu0 %579
      %v613 = vsub.f32 %v324, %v518
      %v614 = vsub.f32 %v329, %v520
      %v615 = vsub.f32 %v334, %v522
      %v616 = vsub.f32 %v339, %v524
      %v617 = vsub.f32 %v344, %v526
      %v618 = vsub.f32 %v349, %v528
      %v619 = vsub.f32 %v354, %v530
      %v620 = vsub.f32 %v359, %v532
      %v621 = vsub.f32 %v364, %v534
      %v622 = vsub.f32 %v369, %v536
      %v623 = vsub.f32 %v374, %v538
      %v624 = vsub.f32 %v379, %v540
      %v625 = vsub.f32 %v384, %v542
      %v626 = vsub.f32 %v389, %v544
      %v627 = vsub.f32 %v394, %v546
      %v628 = vsub.f32 %v399, %v548
      %v629 = vsub.f32 %v404, %v550
      %v630 = vsub.f32 %v409, %v552
      %v631 = vsub.f32 %v414, %v554
      %v632 = vsub.f32 %v419, %v556
      %v633 = vsub.f32 %v424, %v558
      %v634 = vsub.f32 %v429, %v560
      %v635 = vsub.f32 %v434, %v562
      %v636 = vsub.f32 %v439, %v564
      %v637 = vsub.f32 %v444, %v566
      %v638 = vsub.f32 %v449, %v568
      %v639 = vsub.f32 %v454, %v570
      %v640 = vsub.f32 %v459, %v572
      %v641 = vsub.f32 %v464, %v574
      %v642 = vsub.f32 %v469, %v576
      %v643 = vsub.f32 %v474, %v578
      %v644 = vsub.f32 %v479, %v580
      %677 = vrot.lane.b32.xlu0 %v613, 96
      %v678 = vpop.permute.xlu0 %677
      %679 = vrot.lane.b32.xlu0 %v614, 96
      %v680 = vpop.permute.xlu0 %679
      %681 = vrot.lane.b32.xlu0 %v615, 96
      %v682 = vpop.permute.xlu0 %681
      %683 = vrot.lane.b32.xlu0 %v616, 96
      %v684 = vpop.permute.xlu0 %683
      %685 = vrot.lane.b32.xlu0 %v617, 96
      %v686 = vpop.permute.xlu0 %685
      %687 = vrot.lane.b32.xlu0 %v618, 96
      %v688 = vpop.permute.xlu0 %687
      %689 = vrot.lane.b32.xlu0 %v619, 96
      %v690 = vpop.permute.xlu0 %689
      %691 = vrot.lane.b32.xlu0 %v620, 96
      %v692 = vpop.permute.xlu0 %691
      %693 = vrot.lane.b32.xlu0 %v621, 96
      %v694 = vpop.permute.xlu0 %693
      %695 = vrot.lane.b32.xlu0 %v622, 96
      %v696 = vpop.permute.xlu0 %695
      %697 = vrot.lane.b32.xlu0 %v623, 96
      %v698 = vpop.permute.xlu0 %697
      %699 = vrot.lane.b32.xlu0 %v624, 96
      %v700 = vpop.permute.xlu0 %699
      %701 = vrot.lane.b32.xlu0 %v625, 96
      %v702 = vpop.permute.xlu0 %701
      %703 = vrot.lane.b32.xlu0 %v626, 96
      %v704 = vpop.permute.xlu0 %703
      %705 = vrot.lane.b32.xlu0 %v627, 96
      %v706 = vpop.permute.xlu0 %705
      %707 = vrot.lane.b32.xlu0 %v628, 96
      %v708 = vpop.permute.xlu0 %707
      %709 = vrot.lane.b32.xlu0 %v629, 96
      %v710 = vpop.permute.xlu0 %709
      %711 = vrot.lane.b32.xlu0 %v630, 96
      %v712 = vpop.permute.xlu0 %711
      %713 = vrot.lane.b32.xlu0 %v631, 96
      %v714 = vpop.permute.xlu0 %713
      %715 = vrot.lane.b32.xlu0 %v632, 96
      %v716 = vpop.permute.xlu0 %715
      %717 = vrot.lane.b32.xlu0 %v633, 96
      %v718 = vpop.permute.xlu0 %717
      %719 = vrot.lane.b32.xlu0 %v634, 96
      %v720 = vpop.permute.xlu0 %719
      %721 = vrot.lane.b32.xlu0 %v635, 96
      %v722 = vpop.permute.xlu0 %721
      %723 = vrot.lane.b32.xlu0 %v636, 96
      %v724 = vpop.permute.xlu0 %723
      %725 = vrot.lane.b32.xlu0 %v637, 96
      %v726 = vpop.permute.xlu0 %725
      %727 = vrot.lane.b32.xlu0 %v638, 96
      %v728 = vpop.permute.xlu0 %727
      %729 = vrot.lane.b32.xlu0 %v639, 96
      %v730 = vpop.permute.xlu0 %729
      %731 = vrot.lane.b32.xlu0 %v640, 96
      %v732 = vpop.permute.xlu0 %731
      %733 = vrot.lane.b32.xlu0 %v641, 96
      %v734 = vpop.permute.xlu0 %733
      %735 = vrot.lane.b32.xlu0 %v642, 96
      %v736 = vpop.permute.xlu0 %735
      %737 = vrot.lane.b32.xlu0 %v643, 96
      %v738 = vpop.permute.xlu0 %737
      %739 = vrot.lane.b32.xlu0 %v644, 96
      %v740 = vpop.permute.xlu0 %739
      %v773 = vmul.f32 %v324, %v678
      %v774 = vmul.f32 %v329, %v680
      %v775 = vmul.f32 %v334, %v682
      %v776 = vmul.f32 %v339, %v684
      %v777 = vmul.f32 %v344, %v686
      %v778 = vmul.f32 %v349, %v688
      %v779 = vmul.f32 %v354, %v690
      %v780 = vmul.f32 %v359, %v692
      %v781 = vmul.f32 %v364, %v694
      %v782 = vmul.f32 %v369, %v696
      %v783 = vmul.f32 %v374, %v698
      %v784 = vmul.f32 %v379, %v700
      %v785 = vmul.f32 %v384, %v702
      %v786 = vmul.f32 %v389, %v704
      %v787 = vmul.f32 %v394, %v706
      %v788 = vmul.f32 %v399, %v708
      %v789 = vmul.f32 %v404, %v710
      %v790 = vmul.f32 %v409, %v712
      %v791 = vmul.f32 %v414, %v714
      %v792 = vmul.f32 %v419, %v716
      %v793 = vmul.f32 %v424, %v718
      %v794 = vmul.f32 %v429, %v720
      %v795 = vmul.f32 %v434, %v722
      %v796 = vmul.f32 %v439, %v724
      %v797 = vmul.f32 %v444, %v726
      %v798 = vmul.f32 %v449, %v728
      %v799 = vmul.f32 %v454, %v730
      %v800 = vmul.f32 %v459, %v732
      %v801 = vmul.f32 %v464, %v734
      %v802 = vmul.f32 %v469, %v736
      %v803 = vmul.f32 %v474, %v738
      %v804 = vmul.f32 %v479, %v740
      %v805 = vsel %vm484, %v773, 0.0
      %v806 = vsel %vm484, %v774, 0.0
      %v807 = vsel %vm484, %v775, 0.0
      %v808 = vsel %vm484, %v776, 0.0
      %v809 = vsel %vm484, %v777, 0.0
      %v810 = vsel %vm484, %v778, 0.0
      %v811 = vsel %vm484, %v779, 0.0
      %v812 = vsel %vm484, %v780, 0.0
      %v813 = vsel %vm484, %v781, 0.0
      %v814 = vsel %vm484, %v782, 0.0
      %v815 = vsel %vm484, %v783, 0.0
      %v816 = vsel %vm484, %v784, 0.0
      %v817 = vsel %vm484, %v785, 0.0
      %v818 = vsel %vm484, %v786, 0.0
      %v819 = vsel %vm484, %v787, 0.0
      %v820 = vsel %vm484, %v788, 0.0
      %v821 = vsel %vm484, %v789, 0.0
      %v822 = vsel %vm484, %v790, 0.0
      %v823 = vsel %vm484, %v791, 0.0
      %v824 = vsel %vm484, %v792, 0.0
      %v825 = vsel %vm484, %v793, 0.0
      %v826 = vsel %vm484, %v794, 0.0
      %v827 = vsel %vm484, %v795, 0.0
      %v828 = vsel %vm484, %v796, 0.0
      %v829 = vsel %vm484, %v797, 0.0
      %v830 = vsel %vm484, %v798, 0.0
      %v831 = vsel %vm484, %v799, 0.0
      %v832 = vsel %vm484, %v800, 0.0
      %v833 = vsel %vm484, %v801, 0.0
      %v834 = vsel %vm484, %v802, 0.0
      %v835 = vsel %vm484, %v803, 0.0
      %v836 = vsel %vm484, %v804, 0.0
      %vm837 = vcmask 261120
      %v838 = vsel %vm837, %v805, 0.0
      %839 = vadd.xlane.f32.xlu0 %v838
      %v840 = vpop.xlane.xlu0 %839
      %v841 = vsel %vm837, %v806, 0.0
      %842 = vadd.xlane.f32.xlu0 %v841
      %v843 = vpop.xlane.xlu0 %842
      %v844 = vsel %vm837, %v807, 0.0
      %845 = vadd.xlane.f32.xlu0 %v844
      %v846 = vpop.xlane.xlu0 %845
      %v847 = vsel %vm837, %v808, 0.0
      %848 = vadd.xlane.f32.xlu0 %v847
      %v849 = vpop.xlane.xlu0 %848
      %v850 = vsel %vm837, %v809, 0.0
      %851 = vadd.xlane.f32.xlu0 %v850
      %v852 = vpop.xlane.xlu0 %851
      %v853 = vsel %vm837, %v810, 0.0
      %854 = vadd.xlane.f32.xlu0 %v853
      %v855 = vpop.xlane.xlu0 %854
      %v856 = vsel %vm837, %v811, 0.0
      %857 = vadd.xlane.f32.xlu0 %v856
      %v858 = vpop.xlane.xlu0 %857
      %v859 = vsel %vm837, %v812, 0.0
      %860 = vadd.xlane.f32.xlu0 %v859
      %v861 = vpop.xlane.xlu0 %860
      %v862 = vsel %vm837, %v813, 0.0
      %863 = vadd.xlane.f32.xlu0 %v862
      %v864 = vpop.xlane.xlu0 %863
      %v865 = vsel %vm837, %v814, 0.0
      %866 = vadd.xlane.f32.xlu0 %v865
      %v867 = vpop.xlane.xlu0 %866
      %v868 = vsel %vm837, %v815, 0.0
      %869 = vadd.xlane.f32.xlu0 %v868
      %v870 = vpop.xlane.xlu0 %869
      %v871 = vsel %vm837, %v816, 0.0
      %872 = vadd.xlane.f32.xlu0 %v871
      %v873 = vpop.xlane.xlu0 %872
      %v874 = vsel %vm837, %v817, 0.0
      %875 = vadd.xlane.f32.xlu0 %v874
      %v876 = vpop.xlane.xlu0 %875
      %v877 = vsel %vm837, %v818, 0.0
      %878 = vadd.xlane.f32.xlu0 %v877
      %v879 = vpop.xlane.xlu0 %878
      %v880 = vsel %vm837, %v819, 0.0
      %881 = vadd.xlane.f32.xlu0 %v880
      %v882 = vpop.xlane.xlu0 %881
      %v883 = vsel %vm837, %v820, 0.0
      %884 = vadd.xlane.f32.xlu0 %v883
      %v885 = vpop.xlane.xlu0 %884
      %v886 = vsel %vm837, %v821, 0.0
      %887 = vadd.xlane.f32.xlu0 %v886
      %v888 = vpop.xlane.xlu0 %887
      %v889 = vsel %vm837, %v822, 0.0
      %890 = vadd.xlane.f32.xlu0 %v889
      %v891 = vpop.xlane.xlu0 %890
      %v892 = vsel %vm837, %v823, 0.0
      %893 = vadd.xlane.f32.xlu0 %v892
      %v894 = vpop.xlane.xlu0 %893
      %v895 = vsel %vm837, %v824, 0.0
      %896 = vadd.xlane.f32.xlu0 %v895
      %v897 = vpop.xlane.xlu0 %896
      %v898 = vsel %vm837, %v825, 0.0
      %899 = vadd.xlane.f32.xlu0 %v898
      %v900 = vpop.xlane.xlu0 %899
      %v901 = vsel %vm837, %v826, 0.0
      %902 = vadd.xlane.f32.xlu0 %v901
      %v903 = vpop.xlane.xlu0 %902
      %v904 = vsel %vm837, %v827, 0.0
      %905 = vadd.xlane.f32.xlu0 %v904
      %v906 = vpop.xlane.xlu0 %905
      %v907 = vsel %vm837, %v828, 0.0
      %908 = vadd.xlane.f32.xlu0 %v907
      %v909 = vpop.xlane.xlu0 %908
      %v910 = vsel %vm837, %v829, 0.0
      %911 = vadd.xlane.f32.xlu0 %v910
      %v912 = vpop.xlane.xlu0 %911
      %v913 = vsel %vm837, %v830, 0.0
      %914 = vadd.xlane.f32.xlu0 %v913
      %v915 = vpop.xlane.xlu0 %914
      %v916 = vsel %vm837, %v831, 0.0
      %917 = vadd.xlane.f32.xlu0 %v916
      %v918 = vpop.xlane.xlu0 %917
      %v919 = vsel %vm837, %v832, 0.0
      %920 = vadd.xlane.f32.xlu0 %v919
      %v921 = vpop.xlane.xlu0 %920
      %v922 = vsel %vm837, %v833, 0.0
      %923 = vadd.xlane.f32.xlu0 %v922
      %v924 = vpop.xlane.xlu0 %923
      %v925 = vsel %vm837, %v834, 0.0
      %926 = vadd.xlane.f32.xlu0 %v925
      %v927 = vpop.xlane.xlu0 %926
      %v928 = vsel %vm837, %v835, 0.0
      %929 = vadd.xlane.f32.xlu0 %v928
      %v930 = vpop.xlane.xlu0 %929
      %v931 = vsel %vm837, %v836, 0.0
      %932 = vadd.xlane.f32.xlu0 %v931
      %v933 = vpop.xlane.xlu0 %932
      %v934 = vsel %vm837, %v773, 0.0
      %935 = vadd.xlane.f32.xlu0 %v934
      %v936 = vpop.xlane.xlu0 %935
      %v937 = vsel %vm837, %v774, 0.0
      %938 = vadd.xlane.f32.xlu0 %v937
      %v939 = vpop.xlane.xlu0 %938
      %v940 = vsel %vm837, %v775, 0.0
      %941 = vadd.xlane.f32.xlu0 %v940
      %v942 = vpop.xlane.xlu0 %941
      %v943 = vsel %vm837, %v776, 0.0
      %944 = vadd.xlane.f32.xlu0 %v943
      %v945 = vpop.xlane.xlu0 %944
      %v946 = vsel %vm837, %v777, 0.0
      %947 = vadd.xlane.f32.xlu0 %v946
      %v948 = vpop.xlane.xlu0 %947
      %v949 = vsel %vm837, %v778, 0.0
      %950 = vadd.xlane.f32.xlu0 %v949
      %v951 = vpop.xlane.xlu0 %950
      %v952 = vsel %vm837, %v779, 0.0
      %953 = vadd.xlane.f32.xlu0 %v952
      %v954 = vpop.xlane.xlu0 %953
      %v955 = vsel %vm837, %v780, 0.0
      %956 = vadd.xlane.f32.xlu0 %v955
      %v957 = vpop.xlane.xlu0 %956
      %v958 = vsel %vm837, %v781, 0.0
      %959 = vadd.xlane.f32.xlu0 %v958
      %v960 = vpop.xlane.xlu0 %959
      %v961 = vsel %vm837, %v782, 0.0
      %962 = vadd.xlane.f32.xlu0 %v961
      %v963 = vpop.xlane.xlu0 %962
      %v964 = vsel %vm837, %v783, 0.0
      %965 = vadd.xlane.f32.xlu0 %v964
      %v966 = vpop.xlane.xlu0 %965
      %v967 = vsel %vm837, %v784, 0.0
      %968 = vadd.xlane.f32.xlu0 %v967
      %v969 = vpop.xlane.xlu0 %968
      %v970 = vsel %vm837, %v785, 0.0
      %971 = vadd.xlane.f32.xlu0 %v970
      %v972 = vpop.xlane.xlu0 %971
      %v973 = vsel %vm837, %v786, 0.0
      %974 = vadd.xlane.f32.xlu0 %v973
      %v975 = vpop.xlane.xlu0 %974
      %v976 = vsel %vm837, %v787, 0.0
      %977 = vadd.xlane.f32.xlu0 %v976
      %v978 = vpop.xlane.xlu0 %977
      %v979 = vsel %vm837, %v788, 0.0
      %980 = vadd.xlane.f32.xlu0 %v979
      %v981 = vpop.xlane.xlu0 %980
      %v982 = vsel %vm837, %v789, 0.0
      %983 = vadd.xlane.f32.xlu0 %v982
      %v984 = vpop.xlane.xlu0 %983
      %v985 = vsel %vm837, %v790, 0.0
      %986 = vadd.xlane.f32.xlu0 %v985
      %v987 = vpop.xlane.xlu0 %986
      %v988 = vsel %vm837, %v791, 0.0
      %989 = vadd.xlane.f32.xlu0 %v988
      %v990 = vpop.xlane.xlu0 %989
      %v991 = vsel %vm837, %v792, 0.0
      %992 = vadd.xlane.f32.xlu0 %v991
      %v993 = vpop.xlane.xlu0 %992
      %v994 = vsel %vm837, %v793, 0.0
      %995 = vadd.xlane.f32.xlu0 %v994
      %v996 = vpop.xlane.xlu0 %995
      %v997 = vsel %vm837, %v794, 0.0
      %998 = vadd.xlane.f32.xlu0 %v997
      %v999 = vpop.xlane.xlu0 %998
      %v1000 = vsel %vm837, %v795, 0.0
      %1001 = vadd.xlane.f32.xlu0 %v1000
      %v1002 = vpop.xlane.xlu0 %1001
      %v1003 = vsel %vm837, %v796, 0.0
      %1004 = vadd.xlane.f32.xlu0 %v1003
      %v1005 = vpop.xlane.xlu0 %1004
      %v1006 = vsel %vm837, %v797, 0.0
      %1007 = vadd.xlane.f32.xlu0 %v1006
      %v1008 = vpop.xlane.xlu0 %1007
      %v1009 = vsel %vm837, %v798, 0.0
      %1010 = vadd.xlane.f32.xlu0 %v1009
      %v1011 = vpop.xlane.xlu0 %1010
      %v1012 = vsel %vm837, %v799, 0.0
      %1013 = vadd.xlane.f32.xlu0 %v1012
      %v1014 = vpop.xlane.xlu0 %1013
      %v1015 = vsel %vm837, %v800, 0.0
      %1016 = vadd.xlane.f32.xlu0 %v1015
      %v1017 = vpop.xlane.xlu0 %1016
      %v1018 = vsel %vm837, %v801, 0.0
      %1019 = vadd.xlane.f32.xlu0 %v1018
      %v1020 = vpop.xlane.xlu0 %1019
      %v1021 = vsel %vm837, %v802, 0.0
      %1022 = vadd.xlane.f32.xlu0 %v1021
      %v1023 = vpop.xlane.xlu0 %1022
      %v1024 = vsel %vm837, %v803, 0.0
      %1025 = vadd.xlane.f32.xlu0 %v1024
      %v1026 = vpop.xlane.xlu0 %1025
      %v1027 = vsel %vm837, %v804, 0.0
      %1028 = vadd.xlane.f32.xlu0 %v1027
      %v1029 = vpop.xlane.xlu0 %1028
      %v1030 = vsub.f32 %v936, %v840
      %v1031 = vsub.f32 %v939, %v843
      %v1032 = vsub.f32 %v942, %v846
      %v1033 = vsub.f32 %v945, %v849
      %v1034 = vsub.f32 %v948, %v852
      %v1035 = vsub.f32 %v951, %v855
      %v1036 = vsub.f32 %v954, %v858
      %v1037 = vsub.f32 %v957, %v861
      %v1038 = vsub.f32 %v960, %v864
      %v1039 = vsub.f32 %v963, %v867
      %v1040 = vsub.f32 %v966, %v870
      %v1041 = vsub.f32 %v969, %v873
      %v1042 = vsub.f32 %v972, %v876
      %v1043 = vsub.f32 %v975, %v879
      %v1044 = vsub.f32 %v978, %v882
      %v1045 = vsub.f32 %v981, %v885
      %v1046 = vsub.f32 %v984, %v888
      %v1047 = vsub.f32 %v987, %v891
      %v1048 = vsub.f32 %v990, %v894
      %v1049 = vsub.f32 %v993, %v897
      %v1050 = vsub.f32 %v996, %v900
      %v1051 = vsub.f32 %v999, %v903
      %v1052 = vsub.f32 %v1002, %v906
      %v1053 = vsub.f32 %v1005, %v909
      %v1054 = vsub.f32 %v1008, %v912
      %v1055 = vsub.f32 %v1011, %v915
      %v1056 = vsub.f32 %v1014, %v918
      %v1057 = vsub.f32 %v1017, %v921
      %v1058 = vsub.f32 %v1020, %v924
      %v1059 = vsub.f32 %v1023, %v927
      %v1060 = vsub.f32 %v1026, %v930
      %v1061 = vsub.f32 %v1029, %v933
      %v1062 = vsel %vm484, %v840, %v1030
      %v1063 = vsel %vm484, %v843, %v1031
      %v1064 = vsel %vm484, %v846, %v1032
      %v1065 = vsel %vm484, %v849, %v1033
      %v1066 = vsel %vm484, %v852, %v1034
      %v1067 = vsel %vm484, %v855, %v1035
      %v1068 = vsel %vm484, %v858, %v1036
      %v1069 = vsel %vm484, %v861, %v1037
      %v1070 = vsel %vm484, %v864, %v1038
      %v1071 = vsel %vm484, %v867, %v1039
      %v1072 = vsel %vm484, %v870, %v1040
      %v1073 = vsel %vm484, %v873, %v1041
      %v1074 = vsel %vm484, %v876, %v1042
      %v1075 = vsel %vm484, %v879, %v1043
      %v1076 = vsel %vm484, %v882, %v1044
      %v1077 = vsel %vm484, %v885, %v1045
      %v1078 = vsel %vm484, %v888, %v1046
      %v1079 = vsel %vm484, %v891, %v1047
      %v1080 = vsel %vm484, %v894, %v1048
      %v1081 = vsel %vm484, %v897, %v1049
      %v1082 = vsel %vm484, %v900, %v1050
      %v1083 = vsel %vm484, %v903, %v1051
      %v1084 = vsel %vm484, %v906, %v1052
      %v1085 = vsel %vm484, %v909, %v1053
      %v1086 = vsel %vm484, %v912, %v1054
      %v1087 = vsel %vm484, %v915, %v1055
      %v1088 = vsel %vm484, %v918, %v1056
      %v1089 = vsel %vm484, %v921, %v1057
      %v1090 = vsel %vm484, %v924, %v1058
      %v1091 = vsel %vm484, %v927, %v1059
      %v1092 = vsel %vm484, %v930, %v1060
      %v1093 = vsel %vm484, %v933, %v1061
      %v1094 = vmul.f32 %v1062, 0.25
      %v1095 = vmul.f32 %v1063, 0.25
      %v1096 = vmul.f32 %v1064, 0.25
      %v1097 = vmul.f32 %v1065, 0.25
      %v1098 = vmul.f32 %v1066, 0.25
      %v1099 = vmul.f32 %v1067, 0.25
      %v1100 = vmul.f32 %v1068, 0.25
      %v1101 = vmul.f32 %v1069, 0.25
      %v1102 = vmul.f32 %v1070, 0.25
      %v1103 = vmul.f32 %v1071, 0.25
      %v1104 = vmul.f32 %v1072, 0.25
      %v1105 = vmul.f32 %v1073, 0.25
      %v1106 = vmul.f32 %v1074, 0.25
      %v1107 = vmul.f32 %v1075, 0.25
      %v1108 = vmul.f32 %v1076, 0.25
      %v1109 = vmul.f32 %v1077, 0.25
      %v1110 = vmul.f32 %v1078, 0.25
      %v1111 = vmul.f32 %v1079, 0.25
      %v1112 = vmul.f32 %v1080, 0.25
      %v1113 = vmul.f32 %v1081, 0.25
      %v1114 = vmul.f32 %v1082, 0.25
      %v1115 = vmul.f32 %v1083, 0.25
      %v1116 = vmul.f32 %v1084, 0.25
      %v1117 = vmul.f32 %v1085, 0.25
      %v1118 = vmul.f32 %v1086, 0.25
      %v1119 = vmul.f32 %v1087, 0.25
      %v1120 = vmul.f32 %v1088, 0.25
      %v1121 = vmul.f32 %v1089, 0.25
      %v1122 = vmul.f32 %v1090, 0.25
      %v1123 = vmul.f32 %v1091, 0.25
      %v1124 = vmul.f32 %v1092, 0.25
      %v1125 = vmul.f32 %v1093, 0.25
      %v1126 = vxor.u32 %v1094, 2147483648
      %v1127 = vxor.u32 %v1095, 2147483648
      %v1128 = vxor.u32 %v1096, 2147483648
      %v1129 = vxor.u32 %v1097, 2147483648
      %v1130 = vxor.u32 %v1098, 2147483648
      %v1131 = vxor.u32 %v1099, 2147483648
      %v1132 = vxor.u32 %v1100, 2147483648
      %v1133 = vxor.u32 %v1101, 2147483648
      %v1134 = vxor.u32 %v1102, 2147483648
      %v1135 = vxor.u32 %v1103, 2147483648
      %v1136 = vxor.u32 %v1104, 2147483648
      %v1137 = vxor.u32 %v1105, 2147483648
      %v1138 = vxor.u32 %v1106, 2147483648
      %v1139 = vxor.u32 %v1107, 2147483648
      %v1140 = vxor.u32 %v1108, 2147483648
      %v1141 = vxor.u32 %v1109, 2147483648
      %v1142 = vxor.u32 %v1110, 2147483648
      %v1143 = vxor.u32 %v1111, 2147483648
      %v1144 = vxor.u32 %v1112, 2147483648
      %v1145 = vxor.u32 %v1113, 2147483648
      %v1146 = vxor.u32 %v1114, 2147483648
      %v1147 = vxor.u32 %v1115, 2147483648
      %v1148 = vxor.u32 %v1116, 2147483648
      %v1149 = vxor.u32 %v1117, 2147483648
      %v1150 = vxor.u32 %v1118, 2147483648
      %v1151 = vxor.u32 %v1119, 2147483648
      %v1152 = vxor.u32 %v1120, 2147483648
      %v1153 = vxor.u32 %v1121, 2147483648
      %v1154 = vxor.u32 %v1122, 2147483648
      %v1155 = vxor.u32 %v1123, 2147483648
      %v1156 = vxor.u32 %v1124, 2147483648
      %v1157 = vxor.u32 %v1125, 2147483648
      %v1158 = vmul.f32 %v1126, 1.442695
      %v1159 = vpow.pop %v1158
      %v1160 = vmul.f32 %v1127, 1.442695
      %v1161 = vpow.pop %v1160
      %v1162 = vmul.f32 %v1128, 1.442695
      %v1163 = vpow.pop %v1162
      %v1164 = vmul.f32 %v1129, 1.442695
      %v1165 = vpow.pop %v1164
      %v1166 = vmul.f32 %v1130, 1.442695
      %v1167 = vpow.pop %v1166
      %v1168 = vmul.f32 %v1131, 1.442695
      %v1169 = vpow.pop %v1168
      %v1170 = vmul.f32 %v1132, 1.442695
      %v1171 = vpow.pop %v1170
      %v1172 = vmul.f32 %v1133, 1.442695
      %v1173 = vpow.pop %v1172
      %v1174 = vmul.f32 %v1134, 1.442695
      %v1175 = vpow.pop %v1174
      %v1176 = vmul.f32 %v1135, 1.442695
      %v1177 = vpow.pop %v1176
      %v1178 = vmul.f32 %v1136, 1.442695
      %v1179 = vpow.pop %v1178
      %v1180 = vmul.f32 %v1137, 1.442695
      %v1181 = vpow.pop %v1180
      %v1182 = vmul.f32 %v1138, 1.442695
      %v1183 = vpow.pop %v1182
      %v1184 = vmul.f32 %v1139, 1.442695
      %v1185 = vpow.pop %v1184
      %v1186 = vmul.f32 %v1140, 1.442695
      %v1187 = vpow.pop %v1186
      %v1188 = vmul.f32 %v1141, 1.442695
      %v1189 = vpow.pop %v1188
      %v1190 = vmul.f32 %v1142, 1.442695
      %v1191 = vpow.pop %v1190
      %v1192 = vmul.f32 %v1143, 1.442695
      %v1193 = vpow.pop %v1192
      %v1194 = vmul.f32 %v1144, 1.442695
      %v1195 = vpow.pop %v1194
      %v1196 = vmul.f32 %v1145, 1.442695
      %v1197 = vpow.pop %v1196
      %v1198 = vmul.f32 %v1146, 1.442695
      %v1199 = vpow.pop %v1198
      %v1200 = vmul.f32 %v1147, 1.442695
      %v1201 = vpow.pop %v1200
      %v1202 = vmul.f32 %v1148, 1.442695
      %v1203 = vpow.pop %v1202
      %v1204 = vmul.f32 %v1149, 1.442695
      %v1205 = vpow.pop %v1204
      %v1206 = vmul.f32 %v1150, 1.442695
      %v1207 = vpow.pop %v1206
      %v1208 = vmul.f32 %v1151, 1.442695
      %v1209 = vpow.pop %v1208
      %v1210 = vmul.f32 %v1152, 1.442695
      %v1211 = vpow.pop %v1210
      %v1212 = vmul.f32 %v1153, 1.442695
      %v1213 = vpow.pop %v1212
      %v1214 = vmul.f32 %v1154, 1.442695
      %v1215 = vpow.pop %v1214
      %v1216 = vmul.f32 %v1155, 1.442695
      %v1217 = vpow.pop %v1216
      %v1218 = vmul.f32 %v1156, 1.442695
      %v1219 = vpow.pop %v1218
      %v1220 = vmul.f32 %v1157, 1.442695
      %v1221 = vpow.pop %v1220
      %v1222 = vadd.f32 %v1159, 1.0
      %v1223 = vadd.f32 %v1161, 1.0
      %v1224 = vadd.f32 %v1163, 1.0
      %v1225 = vadd.f32 %v1165, 1.0
      %v1226 = vadd.f32 %v1167, 1.0
      %v1227 = vadd.f32 %v1169, 1.0
      %v1228 = vadd.f32 %v1171, 1.0
      %v1229 = vadd.f32 %v1173, 1.0
      %v1230 = vadd.f32 %v1175, 1.0
      %v1231 = vadd.f32 %v1177, 1.0
      %v1232 = vadd.f32 %v1179, 1.0
      %v1233 = vadd.f32 %v1181, 1.0
      %v1234 = vadd.f32 %v1183, 1.0
      %v1235 = vadd.f32 %v1185, 1.0
      %v1236 = vadd.f32 %v1187, 1.0
      %v1237 = vadd.f32 %v1189, 1.0
      %v1238 = vadd.f32 %v1191, 1.0
      %v1239 = vadd.f32 %v1193, 1.0
      %v1240 = vadd.f32 %v1195, 1.0
      %v1241 = vadd.f32 %v1197, 1.0
      %v1242 = vadd.f32 %v1199, 1.0
      %v1243 = vadd.f32 %v1201, 1.0
      %v1244 = vadd.f32 %v1203, 1.0
      %v1245 = vadd.f32 %v1205, 1.0
      %v1246 = vadd.f32 %v1207, 1.0
      %v1247 = vadd.f32 %v1209, 1.0
      %v1248 = vadd.f32 %v1211, 1.0
      %v1249 = vadd.f32 %v1213, 1.0
      %v1250 = vadd.f32 %v1215, 1.0
      %v1251 = vadd.f32 %v1217, 1.0
      %v1252 = vadd.f32 %v1219, 1.0
      %v1253 = vadd.f32 %v1221, 1.0
      %v1254 = vrcp.pop %v1222
      %v1255 = vmul.f32 1.0, %v1254
      %v1256 = vrcp.pop %v1223
      %v1257 = vmul.f32 1.0, %v1256
      %v1258 = vrcp.pop %v1224
      %v1259 = vmul.f32 1.0, %v1258
      %v1260 = vrcp.pop %v1225
      %v1261 = vmul.f32 1.0, %v1260
      %v1262 = vrcp.pop %v1226
      %v1263 = vmul.f32 1.0, %v1262
      %v1264 = vrcp.pop %v1227
      %v1265 = vmul.f32 1.0, %v1264
      %v1266 = vrcp.pop %v1228
      %v1267 = vmul.f32 1.0, %v1266
      %v1268 = vrcp.pop %v1229
      %v1269 = vmul.f32 1.0, %v1268
      %v1270 = vrcp.pop %v1230
      %v1271 = vmul.f32 1.0, %v1270
      %v1272 = vrcp.pop %v1231
      %v1273 = vmul.f32 1.0, %v1272
      %v1274 = vrcp.pop %v1232
      %v1275 = vmul.f32 1.0, %v1274
      %v1276 = vrcp.pop %v1233
      %v1277 = vmul.f32 1.0, %v1276
      %v1278 = vrcp.pop %v1234
      %v1279 = vmul.f32 1.0, %v1278
      %v1280 = vrcp.pop %v1235
      %v1281 = vmul.f32 1.0, %v1280
      %v1282 = vrcp.pop %v1236
      %v1283 = vmul.f32 1.0, %v1282
      %v1284 = vrcp.pop %v1237
      %v1285 = vmul.f32 1.0, %v1284
      %v1286 = vrcp.pop %v1238
      %v1287 = vmul.f32 1.0, %v1286
      %v1288 = vrcp.pop %v1239
      %v1289 = vmul.f32 1.0, %v1288
      %v1290 = vrcp.pop %v1240
      %v1291 = vmul.f32 1.0, %v1290
      %v1292 = vrcp.pop %v1241
      %v1293 = vmul.f32 1.0, %v1292
      %v1294 = vrcp.pop %v1242
      %v1295 = vmul.f32 1.0, %v1294
      %v1296 = vrcp.pop %v1243
      %v1297 = vmul.f32 1.0, %v1296
      %v1298 = vrcp.pop %v1244
      %v1299 = vmul.f32 1.0, %v1298
      %v1300 = vrcp.pop %v1245
      %v1301 = vmul.f32 1.0, %v1300
      %v1302 = vrcp.pop %v1246
      %v1303 = vmul.f32 1.0, %v1302
      %v1304 = vrcp.pop %v1247
      %v1305 = vmul.f32 1.0, %v1304
      %v1306 = vrcp.pop %v1248
      %v1307 = vmul.f32 1.0, %v1306
      %v1308 = vrcp.pop %v1249
      %v1309 = vmul.f32 1.0, %v1308
      %v1310 = vrcp.pop %v1250
      %v1311 = vmul.f32 1.0, %v1310
      %v1312 = vrcp.pop %v1251
      %v1313 = vmul.f32 1.0, %v1312
      %v1314 = vrcp.pop %v1252
      %v1315 = vmul.f32 1.0, %v1314
      %v1316 = vrcp.pop %v1253
      %v1317 = vmul.f32 1.0, %v1316
      %1318 = vrot.lane.b32.xlu0 %v324, 48
      %v1319 = vpop.permute.xlu0 %1318
      %1320 = vrot.lane.b32.xlu0 %v329, 48
      %v1321 = vpop.permute.xlu0 %1320
      %1322 = vrot.lane.b32.xlu0 %v334, 48
      %v1323 = vpop.permute.xlu0 %1322
      %1324 = vrot.lane.b32.xlu0 %v339, 48
      %v1325 = vpop.permute.xlu0 %1324
      %1326 = vrot.lane.b32.xlu0 %v344, 48
      %v1327 = vpop.permute.xlu0 %1326
      %1328 = vrot.lane.b32.xlu0 %v349, 48
      %v1329 = vpop.permute.xlu0 %1328
      %1330 = vrot.lane.b32.xlu0 %v354, 48
      %v1331 = vpop.permute.xlu0 %1330
      %1332 = vrot.lane.b32.xlu0 %v359, 48
      %v1333 = vpop.permute.xlu0 %1332
      %1334 = vrot.lane.b32.xlu0 %v364, 48
      %v1335 = vpop.permute.xlu0 %1334
      %1336 = vrot.lane.b32.xlu0 %v369, 48
      %v1337 = vpop.permute.xlu0 %1336
      %1338 = vrot.lane.b32.xlu0 %v374, 48
      %v1339 = vpop.permute.xlu0 %1338
      %1340 = vrot.lane.b32.xlu0 %v379, 48
      %v1341 = vpop.permute.xlu0 %1340
      %1342 = vrot.lane.b32.xlu0 %v384, 48
      %v1343 = vpop.permute.xlu0 %1342
      %1344 = vrot.lane.b32.xlu0 %v389, 48
      %v1345 = vpop.permute.xlu0 %1344
      %1346 = vrot.lane.b32.xlu0 %v394, 48
      %v1347 = vpop.permute.xlu0 %1346
      %1348 = vrot.lane.b32.xlu0 %v399, 48
      %v1349 = vpop.permute.xlu0 %1348
      %1350 = vrot.lane.b32.xlu0 %v404, 48
      %v1351 = vpop.permute.xlu0 %1350
      %1352 = vrot.lane.b32.xlu0 %v409, 48
      %v1353 = vpop.permute.xlu0 %1352
      %1354 = vrot.lane.b32.xlu0 %v414, 48
      %v1355 = vpop.permute.xlu0 %1354
      %1356 = vrot.lane.b32.xlu0 %v419, 48
      %v1357 = vpop.permute.xlu0 %1356
      %1358 = vrot.lane.b32.xlu0 %v424, 48
      %v1359 = vpop.permute.xlu0 %1358
      %1360 = vrot.lane.b32.xlu0 %v429, 48
      %v1361 = vpop.permute.xlu0 %1360
      %1362 = vrot.lane.b32.xlu0 %v434, 48
      %v1363 = vpop.permute.xlu0 %1362
      %1364 = vrot.lane.b32.xlu0 %v439, 48
      %v1365 = vpop.permute.xlu0 %1364
      %1366 = vrot.lane.b32.xlu0 %v444, 48
      %v1367 = vpop.permute.xlu0 %1366
      %1368 = vrot.lane.b32.xlu0 %v449, 48
      %v1369 = vpop.permute.xlu0 %1368
      %1370 = vrot.lane.b32.xlu0 %v454, 48
      %v1371 = vpop.permute.xlu0 %1370
      %1372 = vrot.lane.b32.xlu0 %v459, 48
      %v1373 = vpop.permute.xlu0 %1372
      %1374 = vrot.lane.b32.xlu0 %v464, 48
      %v1375 = vpop.permute.xlu0 %1374
      %1376 = vrot.lane.b32.xlu0 %v469, 48
      %v1377 = vpop.permute.xlu0 %1376
      %1378 = vrot.lane.b32.xlu0 %v474, 48
      %v1379 = vpop.permute.xlu0 %1378
      %1380 = vrot.lane.b32.xlu0 %v479, 48
      %v1381 = vpop.permute.xlu0 %1380
      %v1414 = vmul.f32 %v1255, %v1319
      %v1415 = vmul.f32 %v1257, %v1321
      %v1416 = vmul.f32 %v1259, %v1323
      %v1417 = vmul.f32 %v1261, %v1325
      %v1418 = vmul.f32 %v1263, %v1327
      %v1419 = vmul.f32 %v1265, %v1329
      %v1420 = vmul.f32 %v1267, %v1331
      %v1421 = vmul.f32 %v1269, %v1333
      %v1422 = vmul.f32 %v1271, %v1335
      %v1423 = vmul.f32 %v1273, %v1337
      %v1424 = vmul.f32 %v1275, %v1339
      %v1425 = vmul.f32 %v1277, %v1341
      %v1426 = vmul.f32 %v1279, %v1343
      %v1427 = vmul.f32 %v1281, %v1345
      %v1428 = vmul.f32 %v1283, %v1347
      %v1429 = vmul.f32 %v1285, %v1349
      %v1430 = vmul.f32 %v1287, %v1351
      %v1431 = vmul.f32 %v1289, %v1353
      %v1432 = vmul.f32 %v1291, %v1355
      %v1433 = vmul.f32 %v1293, %v1357
      %v1434 = vmul.f32 %v1295, %v1359
      %v1435 = vmul.f32 %v1297, %v1361
      %v1436 = vmul.f32 %v1299, %v1363
      %v1437 = vmul.f32 %v1301, %v1365
      %v1438 = vmul.f32 %v1303, %v1367
      %v1439 = vmul.f32 %v1305, %v1369
      %v1440 = vmul.f32 %v1307, %v1371
      %v1441 = vmul.f32 %v1309, %v1373
      %v1442 = vmul.f32 %v1311, %v1375
      %v1443 = vmul.f32 %v1313, %v1377
      %v1444 = vmul.f32 %v1315, %v1379
      %v1445 = vmul.f32 %v1317, %v1381
      %v1446 = vsub.f32 1.0, %v1255
      %v1447 = vsub.f32 1.0, %v1257
      %v1448 = vsub.f32 1.0, %v1259
      %v1449 = vsub.f32 1.0, %v1261
      %v1450 = vsub.f32 1.0, %v1263
      %v1451 = vsub.f32 1.0, %v1265
      %v1452 = vsub.f32 1.0, %v1267
      %v1453 = vsub.f32 1.0, %v1269
      %v1454 = vsub.f32 1.0, %v1271
      %v1455 = vsub.f32 1.0, %v1273
      %v1456 = vsub.f32 1.0, %v1275
      %v1457 = vsub.f32 1.0, %v1277
      %v1458 = vsub.f32 1.0, %v1279
      %v1459 = vsub.f32 1.0, %v1281
      %v1460 = vsub.f32 1.0, %v1283
      %v1461 = vsub.f32 1.0, %v1285
      %v1462 = vsub.f32 1.0, %v1287
      %v1463 = vsub.f32 1.0, %v1289
      %v1464 = vsub.f32 1.0, %v1291
      %v1465 = vsub.f32 1.0, %v1293
      %v1466 = vsub.f32 1.0, %v1295
      %v1467 = vsub.f32 1.0, %v1297
      %v1468 = vsub.f32 1.0, %v1299
      %v1469 = vsub.f32 1.0, %v1301
      %v1470 = vsub.f32 1.0, %v1303
      %v1471 = vsub.f32 1.0, %v1305
      %v1472 = vsub.f32 1.0, %v1307
      %v1473 = vsub.f32 1.0, %v1309
      %v1474 = vsub.f32 1.0, %v1311
      %v1475 = vsub.f32 1.0, %v1313
      %v1476 = vsub.f32 1.0, %v1315
      %v1477 = vsub.f32 1.0, %v1317
      %1478 = vrot.lane.b32.xlu0 %v324, 32
      %v1479 = vpop.permute.xlu0 %1478
      %1480 = vrot.lane.b32.xlu0 %v329, 32
      %v1481 = vpop.permute.xlu0 %1480
      %1482 = vrot.lane.b32.xlu0 %v334, 32
      %v1483 = vpop.permute.xlu0 %1482
      %1484 = vrot.lane.b32.xlu0 %v339, 32
      %v1485 = vpop.permute.xlu0 %1484
      %1486 = vrot.lane.b32.xlu0 %v344, 32
      %v1487 = vpop.permute.xlu0 %1486
      %1488 = vrot.lane.b32.xlu0 %v349, 32
      %v1489 = vpop.permute.xlu0 %1488
      %1490 = vrot.lane.b32.xlu0 %v354, 32
      %v1491 = vpop.permute.xlu0 %1490
      %1492 = vrot.lane.b32.xlu0 %v359, 32
      %v1493 = vpop.permute.xlu0 %1492
      %1494 = vrot.lane.b32.xlu0 %v364, 32
      %v1495 = vpop.permute.xlu0 %1494
      %1496 = vrot.lane.b32.xlu0 %v369, 32
      %v1497 = vpop.permute.xlu0 %1496
      %1498 = vrot.lane.b32.xlu0 %v374, 32
      %v1499 = vpop.permute.xlu0 %1498
      %1500 = vrot.lane.b32.xlu0 %v379, 32
      %v1501 = vpop.permute.xlu0 %1500
      %1502 = vrot.lane.b32.xlu0 %v384, 32
      %v1503 = vpop.permute.xlu0 %1502
      %1504 = vrot.lane.b32.xlu0 %v389, 32
      %v1505 = vpop.permute.xlu0 %1504
      %1506 = vrot.lane.b32.xlu0 %v394, 32
      %v1507 = vpop.permute.xlu0 %1506
      %1508 = vrot.lane.b32.xlu0 %v399, 32
      %v1509 = vpop.permute.xlu0 %1508
      %1510 = vrot.lane.b32.xlu0 %v404, 32
      %v1511 = vpop.permute.xlu0 %1510
      %1512 = vrot.lane.b32.xlu0 %v409, 32
      %v1513 = vpop.permute.xlu0 %1512
      %1514 = vrot.lane.b32.xlu0 %v414, 32
      %v1515 = vpop.permute.xlu0 %1514
      %1516 = vrot.lane.b32.xlu0 %v419, 32
      %v1517 = vpop.permute.xlu0 %1516
      %1518 = vrot.lane.b32.xlu0 %v424, 32
      %v1519 = vpop.permute.xlu0 %1518
      %1520 = vrot.lane.b32.xlu0 %v429, 32
      %v1521 = vpop.permute.xlu0 %1520
      %1522 = vrot.lane.b32.xlu0 %v434, 32
      %v1523 = vpop.permute.xlu0 %1522
      %1524 = vrot.lane.b32.xlu0 %v439, 32
      %v1525 = vpop.permute.xlu0 %1524
      %1526 = vrot.lane.b32.xlu0 %v444, 32
      %v1527 = vpop.permute.xlu0 %1526
      %1528 = vrot.lane.b32.xlu0 %v449, 32
      %v1529 = vpop.permute.xlu0 %1528
      %1530 = vrot.lane.b32.xlu0 %v454, 32
      %v1531 = vpop.permute.xlu0 %1530
      %1532 = vrot.lane.b32.xlu0 %v459, 32
      %v1533 = vpop.permute.xlu0 %1532
      %1534 = vrot.lane.b32.xlu0 %v464, 32
      %v1535 = vpop.permute.xlu0 %1534
      %1536 = vrot.lane.b32.xlu0 %v469, 32
      %v1537 = vpop.permute.xlu0 %1536
      %1538 = vrot.lane.b32.xlu0 %v474, 32
      %v1539 = vpop.permute.xlu0 %1538
      %1540 = vrot.lane.b32.xlu0 %v479, 32
      %v1541 = vpop.permute.xlu0 %1540
      %v1574 = vmul.f32 %v1446, %v1479
      %v1575 = vmul.f32 %v1447, %v1481
      %v1576 = vmul.f32 %v1448, %v1483
      %v1577 = vmul.f32 %v1449, %v1485
      %v1578 = vmul.f32 %v1450, %v1487
      %v1579 = vmul.f32 %v1451, %v1489
      %v1580 = vmul.f32 %v1452, %v1491
      %v1581 = vmul.f32 %v1453, %v1493
      %v1582 = vmul.f32 %v1454, %v1495
      %v1583 = vmul.f32 %v1455, %v1497
      %v1584 = vmul.f32 %v1456, %v1499
      %v1585 = vmul.f32 %v1457, %v1501
      %v1586 = vmul.f32 %v1458, %v1503
      %v1587 = vmul.f32 %v1459, %v1505
      %v1588 = vmul.f32 %v1460, %v1507
      %v1589 = vmul.f32 %v1461, %v1509
      %v1590 = vmul.f32 %v1462, %v1511
      %v1591 = vmul.f32 %v1463, %v1513
      %v1592 = vmul.f32 %v1464, %v1515
      %v1593 = vmul.f32 %v1465, %v1517
      %v1594 = vmul.f32 %v1466, %v1519
      %v1595 = vmul.f32 %v1467, %v1521
      %v1596 = vmul.f32 %v1468, %v1523
      %v1597 = vmul.f32 %v1469, %v1525
      %v1598 = vmul.f32 %v1470, %v1527
      %v1599 = vmul.f32 %v1471, %v1529
      %v1600 = vmul.f32 %v1472, %v1531
      %v1601 = vmul.f32 %v1473, %v1533
      %v1602 = vmul.f32 %v1474, %v1535
      %v1603 = vmul.f32 %v1475, %v1537
      %v1604 = vmul.f32 %v1476, %v1539
      %v1605 = vmul.f32 %v1477, %v1541
      %v1606 = vadd.f32 %v1414, %v1574
      %v1607 = vadd.f32 %v1415, %v1575
      %v1608 = vadd.f32 %v1416, %v1576
      %v1609 = vadd.f32 %v1417, %v1577
      %v1610 = vadd.f32 %v1418, %v1578
      %v1611 = vadd.f32 %v1419, %v1579
      %v1612 = vadd.f32 %v1420, %v1580
      %v1613 = vadd.f32 %v1421, %v1581
      %v1614 = vadd.f32 %v1422, %v1582
      %v1615 = vadd.f32 %v1423, %v1583
      %v1616 = vadd.f32 %v1424, %v1584
      %v1617 = vadd.f32 %v1425, %v1585
      %v1618 = vadd.f32 %v1426, %v1586
      %v1619 = vadd.f32 %v1427, %v1587
      %v1620 = vadd.f32 %v1428, %v1588
      %v1621 = vadd.f32 %v1429, %v1589
      %v1622 = vadd.f32 %v1430, %v1590
      %v1623 = vadd.f32 %v1431, %v1591
      %v1624 = vadd.f32 %v1432, %v1592
      %v1625 = vadd.f32 %v1433, %v1593
      %v1626 = vadd.f32 %v1434, %v1594
      %v1627 = vadd.f32 %v1435, %v1595
      %v1628 = vadd.f32 %v1436, %v1596
      %v1629 = vadd.f32 %v1437, %v1597
      %v1630 = vadd.f32 %v1438, %v1598
      %v1631 = vadd.f32 %v1439, %v1599
      %v1632 = vadd.f32 %v1440, %v1600
      %v1633 = vadd.f32 %v1441, %v1601
      %v1634 = vadd.f32 %v1442, %v1602
      %v1635 = vadd.f32 %v1443, %v1603
      %v1636 = vadd.f32 %v1444, %v1604
      %v1637 = vadd.f32 %v1445, %v1605
      %v1638 = vld [vmem:[%s1 + $0x80] sm:$0xff]
      %v1639 = vld [vmem:[%s1 + $0x88] sm:$0xff]
      %v1640 = vld [vmem:[%s1 + $0x90] sm:$0xff]
      %v1641 = vld [vmem:[%s1 + $0x98] sm:$0xff]
      %v1643 = vsel %vm837, %v1606, 0
      %v1646 = vsel %vm837, %v1607, 0
      %v1649 = vsel %vm837, %v1608, 0
      %v1652 = vsel %vm837, %v1609, 0
      %v1655 = vsel %vm837, %v1610, 0
      %v1658 = vsel %vm837, %v1611, 0
      %v1661 = vsel %vm837, %v1612, 0
      %v1664 = vsel %vm837, %v1613, 0
      %v1667 = vsel %vm837, %v1614, 0
      %v1670 = vsel %vm837, %v1615, 0
      %v1673 = vsel %vm837, %v1616, 0
      %v1676 = vsel %vm837, %v1617, 0
      %v1679 = vsel %vm837, %v1618, 0
      %v1682 = vsel %vm837, %v1619, 0
      %v1685 = vsel %vm837, %v1620, 0
      %v1688 = vsel %vm837, %v1621, 0
      %v1691 = vsel %vm837, %v1622, 0
      %v1694 = vsel %vm837, %v1623, 0
      %v1697 = vsel %vm837, %v1624, 0
      %v1700 = vsel %vm837, %v1625, 0
      %v1703 = vsel %vm837, %v1626, 0
      %v1706 = vsel %vm837, %v1627, 0
      %v1709 = vsel %vm837, %v1628, 0
      %v1712 = vsel %vm837, %v1629, 0
      %v1715 = vsel %vm837, %v1630, 0
      %v1718 = vsel %vm837, %v1631, 0
      %v1721 = vsel %vm837, %v1632, 0
      %v1724 = vsel %vm837, %v1633, 0
      %v1727 = vsel %vm837, %v1634, 0
      %v1730 = vsel %vm837, %v1635, 0
      %v1733 = vsel %vm837, %v1636, 0
      %v1736 = vsel %vm837, %v1637, 0
      %1738 = vmatprep.subr.mxu0 0.0
      %1739 = vmatpush1.msra.mxu0 %v1638
      %1740 = vmatprep.subr.mxu0 0.0
      %1741 = vmatpush1.msra.mxu0 %v1639
      %1742 = vmatprep.subr.mxu0 0.0
      %1743 = vmatpush1.msra.mxu0 %v1640
      %1744 = vmatprep.subr.mxu0 0.0
      %1745 = vmatpush1.msra.mxu0 %v1641
      %1746 = vmatprep.subr.mxu0 0.0
      %1747 = vmatpush1.msra.mxu0 0.0
      %1748 = vmatprep.subr.mxu0 0.0
      %1749 = vmatpush1.msra.mxu0 0.0
      %1750 = vmatprep.subr.mxu0 0.0
      %1751 = vmatpush1.msra.mxu0 0.0
      %1752 = vmatprep.subr.mxu0 0.0
      %1753 = vmatpush1.msra.mxu0 0.0
      %1754 = vmatprep.subr.mxu0 0.0
      %1755 = vmatpush1.msra.mxu0 0.0
      %1756 = vmatprep.subr.mxu0 0.0
      %1757 = vmatpush1.msra.mxu0 0.0
      %1758 = vmatprep.subr.mxu0 0.0
      %1759 = vmatpush1.msra.mxu0 0.0
      %1760 = vmatprep.subr.mxu0 0.0
      %1761 = vmatpush1.msra.mxu0 0.0
      %1762 = vmatprep.subr.mxu0 0.0
      %1763 = vmatpush1.msra.mxu0 0.0
      %1764 = vmatprep.subr.mxu0 0.0
      %1765 = vmatpush1.msra.mxu0 0.0
      %1766 = vmatprep.subr.mxu0 0.0
      %1767 = vmatpush1.msra.mxu0 0.0
      %1768 = vmatprep.subr.mxu0 0.0
      %1769 = vmatpush1.msra.mxu0 0.0
      %1770 = vmatprep.subr.mxu0 0.0
      %1771 = vmatpush1.msra.mxu0 0.0
      %1772 = vmatprep.subr.mxu0 0.0
      %1773 = vmatpush1.msra.mxu0 0.0
      %1774 = vmatprep.subr.mxu0 0.0
      %1775 = vmatpush1.msra.mxu0 0.0
      %1776 = vmatprep.subr.mxu0 0.0
      %1777 = vmatpush1.msra.mxu0 0.0
      %1778 = vmatprep.subr.mxu0 0.0
      %1779 = vmatpush1.msra.mxu0 0.0
      %1780 = vmatprep.subr.mxu0 0.0
      %1781 = vmatpush1.msra.mxu0 0.0
      %1782 = vmatprep.subr.mxu0 0.0
      %1783 = vmatpush1.msra.mxu0 0.0
      %1784 = vmatprep.subr.mxu0 0.0
      %1785 = vmatpush1.msra.mxu0 0.0
      %1786 = vmatprep.subr.mxu0 0.0
      %1787 = vmatpush1.msra.mxu0 0.0
      %1788 = vmatprep.subr.mxu0 0.0
      %1789 = vmatpush1.msra.mxu0 0.0
      %1790 = vmatprep.subr.mxu0 0.0
      %1791 = vmatpush1.msra.mxu0 0.0
      %1792 = vmatprep.subr.mxu0 0.0
      %1793 = vmatpush1.msra.mxu0 0.0
      %1794 = vmatprep.subr.mxu0 0.0
      %1795 = vmatpush1.msra.mxu0 0.0
      %1796 = vmatprep.subr.mxu0 0.0
      %1797 = vmatpush1.msra.mxu0 0.0
      %1798 = vmatprep.subr.mxu0 0.0
      %1799 = vmatpush1.msra.mxu0 0.0
      %1800 = vmatprep.subr.mxu0 0.0
      %1801 = vmatpush1.msra.mxu0 0.0
      %1802 = vmatprep.mubr.f32.mxu0 0.0
      %1803 = vmatmul.mubr.f32.gmra.mrb[0].mxu0 %v1643
      %v1804 = vpop.f32.mrb[0].mxu0
      %v1805 = vadd.f32 0.0, %v1804
      %v1806 = vpop.f32.mrb[0].mxu0
      %1807 = vmatprep.mubr.f32.mxu0 0.0
      %1808 = vmatmul.mubr.f32.gmra.mrb[0].mxu0 %v1646
      %v1809 = vpop.f32.mrb[0].mxu0
      %v1810 = vadd.f32 0.0, %v1809
      %v1811 = vpop.f32.mrb[0].mxu0
      %1812 = vmatprep.mubr.f32.mxu0 0.0
      %1813 = vmatmul.mubr.f32.gmra.mrb[0].mxu0 %v1649
      %v1814 = vpop.f32.mrb[0].mxu0
      %v1815 = vadd.f32 0.0, %v1814
      %v1816 = vpop.f32.mrb[0].mxu0
      %1817 = vmatprep.mubr.f32.mxu0 0.0
      %1818 = vmatmul.mubr.f32.gmra.mrb[0].mxu0 %v1652
      %v1819 = vpop.f32.mrb[0].mxu0
      %v1820 = vadd.f32 0.0, %v1819
      %v1821 = vpop.f32.mrb[0].mxu0
      %1822 = vmatprep.mubr.f32.mxu0 0.0
      %1823 = vmatmul.mubr.f32.gmra.mrb[0].mxu0 %v1655
      %v1824 = vpop.f32.mrb[0].mxu0
      %v1825 = vadd.f32 0.0, %v1824
      %v1826 = vpop.f32.mrb[0].mxu0
      %1827 = vmatprep.mubr.f32.mxu0 0.0
      %1828 = vmatmul.mubr.f32.gmra.mrb[0].mxu0 %v1658
      %v1829 = vpop.f32.mrb[0].mxu0
      %v1830 = vadd.f32 0.0, %v1829
      %v1831 = vpop.f32.mrb[0].mxu0
      %1832 = vmatprep.mubr.f32.mxu0 0.0
      %1833 = vmatmul.mubr.f32.gmra.mrb[0].mxu0 %v1661
      %v1834 = vpop.f32.mrb[0].mxu0
      %v1835 = vadd.f32 0.0, %v1834
      %v1836 = vpop.f32.mrb[0].mxu0
      %1837 = vmatprep.mubr.f32.mxu0 0.0
      %1838 = vmatmul.mubr.f32.gmra.mrb[0].mxu0 %v1664
      %v1839 = vpop.f32.mrb[0].mxu0
      %v1840 = vadd.f32 0.0, %v1839
      %v1841 = vpop.f32.mrb[0].mxu0
      %1842 = vmatprep.mubr.f32.mxu0 0.0
      %1843 = vmatmul.mubr.f32.gmra.mrb[0].mxu0 %v1667
      %v1844 = vpop.f32.mrb[0].mxu0
      %v1845 = vadd.f32 0.0, %v1844
      %v1846 = vpop.f32.mrb[0].mxu0
      %1847 = vmatprep.mubr.f32.mxu0 0.0
      %1848 = vmatmul.mubr.f32.gmra.mrb[0].mxu0 %v1670
      %v1849 = vpop.f32.mrb[0].mxu0
      %v1850 = vadd.f32 0.0, %v1849
      %v1851 = vpop.f32.mrb[0].mxu0
      %1852 = vmatprep.mubr.f32.mxu0 0.0
      %1853 = vmatmul.mubr.f32.gmra.mrb[0].mxu0 %v1673
      %v1854 = vpop.f32.mrb[0].mxu0
      %v1855 = vadd.f32 0.0, %v1854
      %v1856 = vpop.f32.mrb[0].mxu0
      %1857 = vmatprep.mubr.f32.mxu0 0.0
      %1858 = vmatmul.mubr.f32.gmra.mrb[0].mxu0 %v1676
      %v1859 = vpop.f32.mrb[0].mxu0
      %v1860 = vadd.f32 0.0, %v1859
      %v1861 = vpop.f32.mrb[0].mxu0
      %1862 = vmatprep.mubr.f32.mxu0 0.0
      %1863 = vmatmul.mubr.f32.gmra.mrb[0].mxu0 %v1679
      %v1864 = vpop.f32.mrb[0].mxu0
      %v1865 = vadd.f32 0.0, %v1864
      %v1866 = vpop.f32.mrb[0].mxu0
      %1867 = vmatprep.mubr.f32.mxu0 0.0
      %1868 = vmatmul.mubr.f32.gmra.mrb[0].mxu0 %v1682
      %v1869 = vpop.f32.mrb[0].mxu0
      %v1870 = vadd.f32 0.0, %v1869
      %v1871 = vpop.f32.mrb[0].mxu0
      %1872 = vmatprep.mubr.f32.mxu0 0.0
      %1873 = vmatmul.mubr.f32.gmra.mrb[0].mxu0 %v1685
      %v1874 = vpop.f32.mrb[0].mxu0
      %v1875 = vadd.f32 0.0, %v1874
      %v1876 = vpop.f32.mrb[0].mxu0
      %1877 = vmatprep.mubr.f32.mxu0 0.0
      %1878 = vmatmul.mubr.f32.gmra.mrb[0].mxu0 %v1688
      %v1879 = vpop.f32.mrb[0].mxu0
      %v1880 = vadd.f32 0.0, %v1879
      %v1881 = vpop.f32.mrb[0].mxu0
      %1882 = vmatprep.mubr.f32.mxu0 0.0
      %1883 = vmatmul.mubr.f32.gmra.mrb[0].mxu0 %v1691
      %v1884 = vpop.f32.mrb[0].mxu0
      %v1885 = vadd.f32 0.0, %v1884
      %v1886 = vpop.f32.mrb[0].mxu0
      %1887 = vmatprep.mubr.f32.mxu0 0.0
      %1888 = vmatmul.mubr.f32.gmra.mrb[0].mxu0 %v1694
      %v1889 = vpop.f32.mrb[0].mxu0
      %v1890 = vadd.f32 0.0, %v1889
      %v1891 = vpop.f32.mrb[0].mxu0
      %1892 = vmatprep.mubr.f32.mxu0 0.0
      %1893 = vmatmul.mubr.f32.gmra.mrb[0].mxu0 %v1697
      %v1894 = vpop.f32.mrb[0].mxu0
      %v1895 = vadd.f32 0.0, %v1894
      %v1896 = vpop.f32.mrb[0].mxu0
      %1897 = vmatprep.mubr.f32.mxu0 0.0
      %1898 = vmatmul.mubr.f32.gmra.mrb[0].mxu0 %v1700
      %v1899 = vpop.f32.mrb[0].mxu0
      %v1900 = vadd.f32 0.0, %v1899
      %v1901 = vpop.f32.mrb[0].mxu0
      %1902 = vmatprep.mubr.f32.mxu0 0.0
      %1903 = vmatmul.mubr.f32.gmra.mrb[0].mxu0 %v1703
      %v1904 = vpop.f32.mrb[0].mxu0
      %v1905 = vadd.f32 0.0, %v1904
      %v1906 = vpop.f32.mrb[0].mxu0
      %1907 = vmatprep.mubr.f32.mxu0 0.0
      %1908 = vmatmul.mubr.f32.gmra.mrb[0].mxu0 %v1706
      %v1909 = vpop.f32.mrb[0].mxu0
      %v1910 = vadd.f32 0.0, %v1909
      %v1911 = vpop.f32.mrb[0].mxu0
      %1912 = vmatprep.mubr.f32.mxu0 0.0
      %1913 = vmatmul.mubr.f32.gmra.mrb[0].mxu0 %v1709
      %v1914 = vpop.f32.mrb[0].mxu0
      %v1915 = vadd.f32 0.0, %v1914
      %v1916 = vpop.f32.mrb[0].mxu0
      %1917 = vmatprep.mubr.f32.mxu0 0.0
      %1918 = vmatmul.mubr.f32.gmra.mrb[0].mxu0 %v1712
      %v1919 = vpop.f32.mrb[0].mxu0
      %v1920 = vadd.f32 0.0, %v1919
      %v1921 = vpop.f32.mrb[0].mxu0
      %1922 = vmatprep.mubr.f32.mxu0 0.0
      %1923 = vmatmul.mubr.f32.gmra.mrb[0].mxu0 %v1715
      %v1924 = vpop.f32.mrb[0].mxu0
      %v1925 = vadd.f32 0.0, %v1924
      %v1926 = vpop.f32.mrb[0].mxu0
      %1927 = vmatprep.mubr.f32.mxu0 0.0
      %1928 = vmatmul.mubr.f32.gmra.mrb[0].mxu0 %v1718
      %v1929 = vpop.f32.mrb[0].mxu0
      %v1930 = vadd.f32 0.0, %v1929
      %v1931 = vpop.f32.mrb[0].mxu0
      %1932 = vmatprep.mubr.f32.mxu0 0.0
      %1933 = vmatmul.mubr.f32.gmra.mrb[0].mxu0 %v1721
      %v1934 = vpop.f32.mrb[0].mxu0
      %v1935 = vadd.f32 0.0, %v1934
      %v1936 = vpop.f32.mrb[0].mxu0
      %1937 = vmatprep.mubr.f32.mxu0 0.0
      %1938 = vmatmul.mubr.f32.gmra.mrb[0].mxu0 %v1724
      %v1939 = vpop.f32.mrb[0].mxu0
      %v1940 = vadd.f32 0.0, %v1939
      %v1941 = vpop.f32.mrb[0].mxu0
      %1942 = vmatprep.mubr.f32.mxu0 0.0
      %1943 = vmatmul.mubr.f32.gmra.mrb[0].mxu0 %v1727
      %v1944 = vpop.f32.mrb[0].mxu0
      %v1945 = vadd.f32 0.0, %v1944
      %v1946 = vpop.f32.mrb[0].mxu0
      %1947 = vmatprep.mubr.f32.mxu0 0.0
      %1948 = vmatmul.mubr.f32.gmra.mrb[0].mxu0 %v1730
      %v1949 = vpop.f32.mrb[0].mxu0
      %v1950 = vadd.f32 0.0, %v1949
      %v1951 = vpop.f32.mrb[0].mxu0
      %1952 = vmatprep.mubr.f32.mxu0 0.0
      %1953 = vmatmul.mubr.f32.gmra.mrb[0].mxu0 %v1733
      %v1954 = vpop.f32.mrb[0].mxu0
      %v1955 = vadd.f32 0.0, %v1954
      %v1956 = vpop.f32.mrb[0].mxu0
      %1957 = vmatprep.mubr.f32.mxu0 0.0
      %1958 = vmatmul.mubr.f32.gmra.mrb[0].mxu0 %v1736
      %v1959 = vpop.f32.mrb[0].mxu0
      %v1960 = vadd.f32 0.0, %v1959
      %v1961 = vpop.f32.mrb[0].mxu0
      %1962 = vdwg.mxu0
      %v1963 = vadd.f32 %v177, %v1805
      %v1964 = vadd.f32 %v179, %v1810
      %v1965 = vadd.f32 %v181, %v1815
      %v1966 = vadd.f32 %v183, %v1820
      %v1967 = vadd.f32 %v185, %v1825
      %v1968 = vadd.f32 %v187, %v1830
      %v1969 = vadd.f32 %v189, %v1835
      %v1970 = vadd.f32 %v191, %v1840
      %v1971 = vadd.f32 %v193, %v1845
      %v1972 = vadd.f32 %v195, %v1850
      %v1973 = vadd.f32 %v197, %v1855
      %v1974 = vadd.f32 %v199, %v1860
      %v1975 = vadd.f32 %v201, %v1865
      %v1976 = vadd.f32 %v203, %v1870
      %v1977 = vadd.f32 %v205, %v1875
      %v1978 = vadd.f32 %v207, %v1880
      %v1979 = vadd.f32 %v209, %v1885
      %v1980 = vadd.f32 %v211, %v1890
      %v1981 = vadd.f32 %v213, %v1895
      %v1982 = vadd.f32 %v215, %v1900
      %v1983 = vadd.f32 %v217, %v1905
      %v1984 = vadd.f32 %v219, %v1910
      %v1985 = vadd.f32 %v221, %v1915
      %v1986 = vadd.f32 %v223, %v1920
      %v1987 = vadd.f32 %v225, %v1925
      %v1988 = vadd.f32 %v227, %v1930
      %v1989 = vadd.f32 %v229, %v1935
      %v1990 = vadd.f32 %v231, %v1940
      %v1991 = vadd.f32 %v233, %v1945
      %v1992 = vadd.f32 %v235, %v1950
      %v1993 = vadd.f32 %v237, %v1955
      %v1994 = vadd.f32 %v239, %v1960
      %v1995 = vld [vmem:[%s1 + $0xa0] sm:$0xff]
      %v1996 = vld [vmem:[%s1 + $0xa8] sm:$0xff]
      %v1997 = vld [vmem:[%s1 + $0xb0] sm:$0xff]
      %v1998 = vld [vmem:[%s1 + $0xb8] sm:$0xff]
      %v1999 = vld [vmem:[%s1 + $0xc0] sm:$0xff]
      %v2000 = vld [vmem:[%s1 + $0xc8] sm:$0xff]
      %v2001 = vld [vmem:[%s1 + $0xd0] sm:$0xff]
      %v2002 = vld [vmem:[%s1 + $0xd8] sm:$0xff]
      %v2003 = vld [vmem:[%s1 + $0xe0] sm:$0xff]
      %v2004 = vld [vmem:[%s1 + $0xe8] sm:$0xff]
      %v2005 = vld [vmem:[%s1 + $0xf0] sm:$0xff]
      %v2006 = vld [vmem:[%s1 + $0xf8] sm:$0xff]
      %v2007 = vld [vmem:[%s1 + $0x100] sm:$0xff]
      %v2008 = vld [vmem:[%s1 + $0x108] sm:$0xff]
      %v2009 = vld [vmem:[%s1 + $0x110] sm:$0xff]
      %v2010 = vld [vmem:[%s1 + $0x118] sm:$0xff]
      %2011 = vmatprep.subr.mxu0 0.0
      %2012 = vmatpush1.msra.mxu0 %v1995
      %2013 = vmatprep.subr.mxu0 0.0
      %2014 = vmatpush1.msra.mxu0 %v1996
      %2015 = vmatprep.subr.mxu0 0.0
      %2016 = vmatpush1.msra.mxu0 %v1997
      %2017 = vmatprep.subr.mxu0 0.0
      %2018 = vmatpush1.msra.mxu0 %v1998
      %2019 = vmatprep.subr.mxu0 0.0
      %2020 = vmatpush1.msra.mxu0 %v1999
      %2021 = vmatprep.subr.mxu0 0.0
      %2022 = vmatpush1.msra.mxu0 %v2000
      %2023 = vmatprep.subr.mxu0 0.0
      %2024 = vmatpush1.msra.mxu0 %v2001
      %2025 = vmatprep.subr.mxu0 0.0
      %2026 = vmatpush1.msra.mxu0 %v2002
      %2027 = vmatprep.subr.mxu0 0.0
      %2028 = vmatpush1.msra.mxu0 %v2003
      %2029 = vmatprep.subr.mxu0 0.0
      %2030 = vmatpush1.msra.mxu0 %v2004
      %2031 = vmatprep.subr.mxu0 0.0
      %2032 = vmatpush1.msra.mxu0 %v2005
      %2033 = vmatprep.subr.mxu0 0.0
      %2034 = vmatpush1.msra.mxu0 %v2006
      %2035 = vmatprep.subr.mxu0 0.0
      %2036 = vmatpush1.msra.mxu0 %v2007
      %2037 = vmatprep.subr.mxu0 0.0
      %2038 = vmatpush1.msra.mxu0 %v2008
      %2039 = vmatprep.subr.mxu0 0.0
      %2040 = vmatpush1.msra.mxu0 %v2009
      %2041 = vmatprep.subr.mxu0 0.0
      %2042 = vmatpush1.msra.mxu0 %v2010
      %2043 = vmatprep.subr.mxu0 0.0
      %2044 = vmatpush1.msra.mxu0 0.0
      %2045 = vmatprep.subr.mxu0 0.0
      %2046 = vmatpush1.msra.mxu0 0.0
      %2047 = vmatprep.subr.mxu0 0.0
      %2048 = vmatpush1.msra.mxu0 0.0
      %2049 = vmatprep.subr.mxu0 0.0
      %2050 = vmatpush1.msra.mxu0 0.0
      %2051 = vmatprep.subr.mxu0 0.0
      %2052 = vmatpush1.msra.mxu0 0.0
      %2053 = vmatprep.subr.mxu0 0.0
      %2054 = vmatpush1.msra.mxu0 0.0
      %2055 = vmatprep.subr.mxu0 0.0
      %2056 = vmatpush1.msra.mxu0 0.0
      %2057 = vmatprep.subr.mxu0 0.0
      %2058 = vmatpush1.msra.mxu0 0.0
      %2059 = vmatprep.subr.mxu0 0.0
      %2060 = vmatpush1.msra.mxu0 0.0
      %2061 = vmatprep.subr.mxu0 0.0
      %2062 = vmatpush1.msra.mxu0 0.0
      %2063 = vmatprep.subr.mxu0 0.0
      %2064 = vmatpush1.msra.mxu0 0.0
      %2065 = vmatprep.subr.mxu0 0.0
      %2066 = vmatpush1.msra.mxu0 0.0
      %2067 = vmatprep.subr.mxu0 0.0
      %2068 = vmatpush1.msra.mxu0 0.0
      %2069 = vmatprep.subr.mxu0 0.0
      %2070 = vmatpush1.msra.mxu0 0.0
      %2071 = vmatprep.subr.mxu0 0.0
      %2072 = vmatpush1.msra.mxu0 0.0
      %2073 = vmatprep.subr.mxu0 0.0
      %2074 = vmatpush1.msra.mxu0 0.0
      %2075 = vmatprep.mubr.f32.mxu0 0.0
      %2076 = vmatmul.mubr.f32.gmra.mrb[0].mxu0 %v1963
      %v2077 = vpop.f32.mrb[0].mxu0
      %v2078 = vadd.f32 0.0, %v2077
      %v2079 = vpop.f32.mrb[0].mxu0
      %2080 = vmatprep.mubr.f32.mxu0 0.0
      %2081 = vmatmul.mubr.f32.gmra.mrb[0].mxu0 %v1964
      %v2082 = vpop.f32.mrb[0].mxu0
      %v2083 = vadd.f32 0.0, %v2082
      %v2084 = vpop.f32.mrb[0].mxu0
      %2085 = vmatprep.mubr.f32.mxu0 0.0
      %2086 = vmatmul.mubr.f32.gmra.mrb[0].mxu0 %v1965
      %v2087 = vpop.f32.mrb[0].mxu0
      %v2088 = vadd.f32 0.0, %v2087
      %v2089 = vpop.f32.mrb[0].mxu0
      %2090 = vmatprep.mubr.f32.mxu0 0.0
      %2091 = vmatmul.mubr.f32.gmra.mrb[0].mxu0 %v1966
      %v2092 = vpop.f32.mrb[0].mxu0
      %v2093 = vadd.f32 0.0, %v2092
      %v2094 = vpop.f32.mrb[0].mxu0
      %2095 = vmatprep.mubr.f32.mxu0 0.0
      %2096 = vmatmul.mubr.f32.gmra.mrb[0].mxu0 %v1967
      %v2097 = vpop.f32.mrb[0].mxu0
      %v2098 = vadd.f32 0.0, %v2097
      %v2099 = vpop.f32.mrb[0].mxu0
      %2100 = vmatprep.mubr.f32.mxu0 0.0
      %2101 = vmatmul.mubr.f32.gmra.mrb[0].mxu0 %v1968
      %v2102 = vpop.f32.mrb[0].mxu0
      %v2103 = vadd.f32 0.0, %v2102
      %v2104 = vpop.f32.mrb[0].mxu0
      %2105 = vmatprep.mubr.f32.mxu0 0.0
      %2106 = vmatmul.mubr.f32.gmra.mrb[0].mxu0 %v1969
      %v2107 = vpop.f32.mrb[0].mxu0
      %v2108 = vadd.f32 0.0, %v2107
      %v2109 = vpop.f32.mrb[0].mxu0
      %2110 = vmatprep.mubr.f32.mxu0 0.0
      %2111 = vmatmul.mubr.f32.gmra.mrb[0].mxu0 %v1970
      %v2112 = vpop.f32.mrb[0].mxu0
      %v2113 = vadd.f32 0.0, %v2112
      %v2114 = vpop.f32.mrb[0].mxu0
      %2115 = vmatprep.mubr.f32.mxu0 0.0
      %2116 = vmatmul.mubr.f32.gmra.mrb[0].mxu0 %v1971
      %v2117 = vpop.f32.mrb[0].mxu0
      %v2118 = vadd.f32 0.0, %v2117
      %v2119 = vpop.f32.mrb[0].mxu0
      %2120 = vmatprep.mubr.f32.mxu0 0.0
      %2121 = vmatmul.mubr.f32.gmra.mrb[0].mxu0 %v1972
      %v2122 = vpop.f32.mrb[0].mxu0
      %v2123 = vadd.f32 0.0, %v2122
      %v2124 = vpop.f32.mrb[0].mxu0
      %2125 = vmatprep.mubr.f32.mxu0 0.0
      %2126 = vmatmul.mubr.f32.gmra.mrb[0].mxu0 %v1973
      %v2127 = vpop.f32.mrb[0].mxu0
      %v2128 = vadd.f32 0.0, %v2127
      %v2129 = vpop.f32.mrb[0].mxu0
      %2130 = vmatprep.mubr.f32.mxu0 0.0
      %2131 = vmatmul.mubr.f32.gmra.mrb[0].mxu0 %v1974
      %v2132 = vpop.f32.mrb[0].mxu0
      %v2133 = vadd.f32 0.0, %v2132
      %v2134 = vpop.f32.mrb[0].mxu0
      %2135 = vmatprep.mubr.f32.mxu0 0.0
      %2136 = vmatmul.mubr.f32.gmra.mrb[0].mxu0 %v1975
      %v2137 = vpop.f32.mrb[0].mxu0
      %v2138 = vadd.f32 0.0, %v2137
      %v2139 = vpop.f32.mrb[0].mxu0
      %2140 = vmatprep.mubr.f32.mxu0 0.0
      %2141 = vmatmul.mubr.f32.gmra.mrb[0].mxu0 %v1976
      %v2142 = vpop.f32.mrb[0].mxu0
      %v2143 = vadd.f32 0.0, %v2142
      %v2144 = vpop.f32.mrb[0].mxu0
      %2145 = vmatprep.mubr.f32.mxu0 0.0
      %2146 = vmatmul.mubr.f32.gmra.mrb[0].mxu0 %v1977
      %v2147 = vpop.f32.mrb[0].mxu0
      %v2148 = vadd.f32 0.0, %v2147
      %v2149 = vpop.f32.mrb[0].mxu0
      %2150 = vmatprep.mubr.f32.mxu0 0.0
      %2151 = vmatmul.mubr.f32.gmra.mrb[0].mxu0 %v1978
      %v2152 = vpop.f32.mrb[0].mxu0
      %v2153 = vadd.f32 0.0, %v2152
      %v2154 = vpop.f32.mrb[0].mxu0
      %2155 = vmatprep.mubr.f32.mxu0 0.0
      %2156 = vmatmul.mubr.f32.gmra.mrb[0].mxu0 %v1979
      %v2157 = vpop.f32.mrb[0].mxu0
      %v2158 = vadd.f32 0.0, %v2157
      %v2159 = vpop.f32.mrb[0].mxu0
      %2160 = vmatprep.mubr.f32.mxu0 0.0
      %2161 = vmatmul.mubr.f32.gmra.mrb[0].mxu0 %v1980
      %v2162 = vpop.f32.mrb[0].mxu0
      %v2163 = vadd.f32 0.0, %v2162
      %v2164 = vpop.f32.mrb[0].mxu0
      %2165 = vmatprep.mubr.f32.mxu0 0.0
      %2166 = vmatmul.mubr.f32.gmra.mrb[0].mxu0 %v1981
      %v2167 = vpop.f32.mrb[0].mxu0
      %v2168 = vadd.f32 0.0, %v2167
      %v2169 = vpop.f32.mrb[0].mxu0
      %2170 = vmatprep.mubr.f32.mxu0 0.0
      %2171 = vmatmul.mubr.f32.gmra.mrb[0].mxu0 %v1982
      %v2172 = vpop.f32.mrb[0].mxu0
      %v2173 = vadd.f32 0.0, %v2172
      %v2174 = vpop.f32.mrb[0].mxu0
      %2175 = vmatprep.mubr.f32.mxu0 0.0
      %2176 = vmatmul.mubr.f32.gmra.mrb[0].mxu0 %v1983
      %v2177 = vpop.f32.mrb[0].mxu0
      %v2178 = vadd.f32 0.0, %v2177
      %v2179 = vpop.f32.mrb[0].mxu0
      %2180 = vmatprep.mubr.f32.mxu0 0.0
      %2181 = vmatmul.mubr.f32.gmra.mrb[0].mxu0 %v1984
      %v2182 = vpop.f32.mrb[0].mxu0
      %v2183 = vadd.f32 0.0, %v2182
      %v2184 = vpop.f32.mrb[0].mxu0
      %2185 = vmatprep.mubr.f32.mxu0 0.0
      %2186 = vmatmul.mubr.f32.gmra.mrb[0].mxu0 %v1985
      %v2187 = vpop.f32.mrb[0].mxu0
      %v2188 = vadd.f32 0.0, %v2187
      %v2189 = vpop.f32.mrb[0].mxu0
      %2190 = vmatprep.mubr.f32.mxu0 0.0
      %2191 = vmatmul.mubr.f32.gmra.mrb[0].mxu0 %v1986
      %v2192 = vpop.f32.mrb[0].mxu0
      %v2193 = vadd.f32 0.0, %v2192
      %v2194 = vpop.f32.mrb[0].mxu0
      %2195 = vmatprep.mubr.f32.mxu0 0.0
      %2196 = vmatmul.mubr.f32.gmra.mrb[0].mxu0 %v1987
      %v2197 = vpop.f32.mrb[0].mxu0
      %v2198 = vadd.f32 0.0, %v2197
      %v2199 = vpop.f32.mrb[0].mxu0
      %2200 = vmatprep.mubr.f32.mxu0 0.0
      %2201 = vmatmul.mubr.f32.gmra.mrb[0].mxu0 %v1988
      %v2202 = vpop.f32.mrb[0].mxu0
      %v2203 = vadd.f32 0.0, %v2202
      %v2204 = vpop.f32.mrb[0].mxu0
      %2205 = vmatprep.mubr.f32.mxu0 0.0
      %2206 = vmatmul.mubr.f32.gmra.mrb[0].mxu0 %v1989
      %v2207 = vpop.f32.mrb[0].mxu0
      %v2208 = vadd.f32 0.0, %v2207
      %v2209 = vpop.f32.mrb[0].mxu0
      %2210 = vmatprep.mubr.f32.mxu0 0.0
      %2211 = vmatmul.mubr.f32.gmra.mrb[0].mxu0 %v1990
      %v2212 = vpop.f32.mrb[0].mxu0
      %v2213 = vadd.f32 0.0, %v2212
      %v2214 = vpop.f32.mrb[0].mxu0
      %2215 = vmatprep.mubr.f32.mxu0 0.0
      %2216 = vmatmul.mubr.f32.gmra.mrb[0].mxu0 %v1991
      %v2217 = vpop.f32.mrb[0].mxu0
      %v2218 = vadd.f32 0.0, %v2217
      %v2219 = vpop.f32.mrb[0].mxu0
      %2220 = vmatprep.mubr.f32.mxu0 0.0
      %2221 = vmatmul.mubr.f32.gmra.mrb[0].mxu0 %v1992
      %v2222 = vpop.f32.mrb[0].mxu0
      %v2223 = vadd.f32 0.0, %v2222
      %v2224 = vpop.f32.mrb[0].mxu0
      %2225 = vmatprep.mubr.f32.mxu0 0.0
      %2226 = vmatmul.mubr.f32.gmra.mrb[0].mxu0 %v1993
      %v2227 = vpop.f32.mrb[0].mxu0
      %v2228 = vadd.f32 0.0, %v2227
      %v2229 = vpop.f32.mrb[0].mxu0
      %2230 = vmatprep.mubr.f32.mxu0 0.0
      %2231 = vmatmul.mubr.f32.gmra.mrb[0].mxu0 %v1994
      %v2232 = vpop.f32.mrb[0].mxu0
      %v2233 = vadd.f32 0.0, %v2232
      %v2234 = vpop.f32.mrb[0].mxu0
      %2235 = vdwg.mxu0
      %v2236 = vxor.u32 %v2078, 2147483648
      %v2237 = vxor.u32 %v2083, 2147483648
      %v2238 = vxor.u32 %v2088, 2147483648
      %v2239 = vxor.u32 %v2093, 2147483648
      %v2240 = vxor.u32 %v2098, 2147483648
      %v2241 = vxor.u32 %v2103, 2147483648
      %v2242 = vxor.u32 %v2108, 2147483648
      %v2243 = vxor.u32 %v2113, 2147483648
      %v2244 = vxor.u32 %v2118, 2147483648
      %v2245 = vxor.u32 %v2123, 2147483648
      %v2246 = vxor.u32 %v2128, 2147483648
      %v2247 = vxor.u32 %v2133, 2147483648
      %v2248 = vxor.u32 %v2138, 2147483648
      %v2249 = vxor.u32 %v2143, 2147483648
      %v2250 = vxor.u32 %v2148, 2147483648
      %v2251 = vxor.u32 %v2153, 2147483648
      %v2252 = vxor.u32 %v2158, 2147483648
      %v2253 = vxor.u32 %v2163, 2147483648
      %v2254 = vxor.u32 %v2168, 2147483648
      %v2255 = vxor.u32 %v2173, 2147483648
      %v2256 = vxor.u32 %v2178, 2147483648
      %v2257 = vxor.u32 %v2183, 2147483648
      %v2258 = vxor.u32 %v2188, 2147483648
      %v2259 = vxor.u32 %v2193, 2147483648
      %v2260 = vxor.u32 %v2198, 2147483648
      %v2261 = vxor.u32 %v2203, 2147483648
      %v2262 = vxor.u32 %v2208, 2147483648
      %v2263 = vxor.u32 %v2213, 2147483648
      %v2264 = vxor.u32 %v2218, 2147483648
      %v2265 = vxor.u32 %v2223, 2147483648
      %v2266 = vxor.u32 %v2228, 2147483648
      %v2267 = vxor.u32 %v2233, 2147483648
      %v2268 = vmul.f32 %v2236, 1.442695
      %v2269 = vpow.pop %v2268
      %v2270 = vmul.f32 %v2237, 1.442695
      %v2271 = vpow.pop %v2270
      %v2272 = vmul.f32 %v2238, 1.442695
      %v2273 = vpow.pop %v2272
      %v2274 = vmul.f32 %v2239, 1.442695
      %v2275 = vpow.pop %v2274
      %v2276 = vmul.f32 %v2240, 1.442695
      %v2277 = vpow.pop %v2276
      %v2278 = vmul.f32 %v2241, 1.442695
      %v2279 = vpow.pop %v2278
      %v2280 = vmul.f32 %v2242, 1.442695
      %v2281 = vpow.pop %v2280
      %v2282 = vmul.f32 %v2243, 1.442695
      %v2283 = vpow.pop %v2282
      %v2284 = vmul.f32 %v2244, 1.442695
      %v2285 = vpow.pop %v2284
      %v2286 = vmul.f32 %v2245, 1.442695
      %v2287 = vpow.pop %v2286
      %v2288 = vmul.f32 %v2246, 1.442695
      %v2289 = vpow.pop %v2288
      %v2290 = vmul.f32 %v2247, 1.442695
      %v2291 = vpow.pop %v2290
      %v2292 = vmul.f32 %v2248, 1.442695
      %v2293 = vpow.pop %v2292
      %v2294 = vmul.f32 %v2249, 1.442695
      %v2295 = vpow.pop %v2294
      %v2296 = vmul.f32 %v2250, 1.442695
      %v2297 = vpow.pop %v2296
      %v2298 = vmul.f32 %v2251, 1.442695
      %v2299 = vpow.pop %v2298
      %v2300 = vmul.f32 %v2252, 1.442695
      %v2301 = vpow.pop %v2300
      %v2302 = vmul.f32 %v2253, 1.442695
      %v2303 = vpow.pop %v2302
      %v2304 = vmul.f32 %v2254, 1.442695
      %v2305 = vpow.pop %v2304
      %v2306 = vmul.f32 %v2255, 1.442695
      %v2307 = vpow.pop %v2306
      %v2308 = vmul.f32 %v2256, 1.442695
      %v2309 = vpow.pop %v2308
      %v2310 = vmul.f32 %v2257, 1.442695
      %v2311 = vpow.pop %v2310
      %v2312 = vmul.f32 %v2258, 1.442695
      %v2313 = vpow.pop %v2312
      %v2314 = vmul.f32 %v2259, 1.442695
      %v2315 = vpow.pop %v2314
      %v2316 = vmul.f32 %v2260, 1.442695
      %v2317 = vpow.pop %v2316
      %v2318 = vmul.f32 %v2261, 1.442695
      %v2319 = vpow.pop %v2318
      %v2320 = vmul.f32 %v2262, 1.442695
      %v2321 = vpow.pop %v2320
      %v2322 = vmul.f32 %v2263, 1.442695
      %v2323 = vpow.pop %v2322
      %v2324 = vmul.f32 %v2264, 1.442695
      %v2325 = vpow.pop %v2324
      %v2326 = vmul.f32 %v2265, 1.442695
      %v2327 = vpow.pop %v2326
      %v2328 = vmul.f32 %v2266, 1.442695
      %v2329 = vpow.pop %v2328
      %v2330 = vmul.f32 %v2267, 1.442695
      %v2331 = vpow.pop %v2330
      %v2332 = vadd.f32 %v2269, 1.0
      %v2333 = vadd.f32 %v2271, 1.0
      %v2334 = vadd.f32 %v2273, 1.0
      %v2335 = vadd.f32 %v2275, 1.0
      %v2336 = vadd.f32 %v2277, 1.0
      %v2337 = vadd.f32 %v2279, 1.0
      %v2338 = vadd.f32 %v2281, 1.0
      %v2339 = vadd.f32 %v2283, 1.0
      %v2340 = vadd.f32 %v2285, 1.0
      %v2341 = vadd.f32 %v2287, 1.0
      %v2342 = vadd.f32 %v2289, 1.0
      %v2343 = vadd.f32 %v2291, 1.0
      %v2344 = vadd.f32 %v2293, 1.0
      %v2345 = vadd.f32 %v2295, 1.0
      %v2346 = vadd.f32 %v2297, 1.0
      %v2347 = vadd.f32 %v2299, 1.0
      %v2348 = vadd.f32 %v2301, 1.0
      %v2349 = vadd.f32 %v2303, 1.0
      %v2350 = vadd.f32 %v2305, 1.0
      %v2351 = vadd.f32 %v2307, 1.0
      %v2352 = vadd.f32 %v2309, 1.0
      %v2353 = vadd.f32 %v2311, 1.0
      %v2354 = vadd.f32 %v2313, 1.0
      %v2355 = vadd.f32 %v2315, 1.0
      %v2356 = vadd.f32 %v2317, 1.0
      %v2357 = vadd.f32 %v2319, 1.0
      %v2358 = vadd.f32 %v2321, 1.0
      %v2359 = vadd.f32 %v2323, 1.0
      %v2360 = vadd.f32 %v2325, 1.0
      %v2361 = vadd.f32 %v2327, 1.0
      %v2362 = vadd.f32 %v2329, 1.0
      %v2363 = vadd.f32 %v2331, 1.0
      %v2364 = vrcp.pop %v2332
      %v2365 = vmul.f32 1.0, %v2364
      %v2366 = vrcp.pop %v2333
      %v2367 = vmul.f32 1.0, %v2366
      %v2368 = vrcp.pop %v2334
      %v2369 = vmul.f32 1.0, %v2368
      %v2370 = vrcp.pop %v2335
      %v2371 = vmul.f32 1.0, %v2370
      %v2372 = vrcp.pop %v2336
      %v2373 = vmul.f32 1.0, %v2372
      %v2374 = vrcp.pop %v2337
      %v2375 = vmul.f32 1.0, %v2374
      %v2376 = vrcp.pop %v2338
      %v2377 = vmul.f32 1.0, %v2376
      %v2378 = vrcp.pop %v2339
      %v2379 = vmul.f32 1.0, %v2378
      %v2380 = vrcp.pop %v2340
      %v2381 = vmul.f32 1.0, %v2380
      %v2382 = vrcp.pop %v2341
      %v2383 = vmul.f32 1.0, %v2382
      %v2384 = vrcp.pop %v2342
      %v2385 = vmul.f32 1.0, %v2384
      %v2386 = vrcp.pop %v2343
      %v2387 = vmul.f32 1.0, %v2386
      %v2388 = vrcp.pop %v2344
      %v2389 = vmul.f32 1.0, %v2388
      %v2390 = vrcp.pop %v2345
      %v2391 = vmul.f32 1.0, %v2390
      %v2392 = vrcp.pop %v2346
      %v2393 = vmul.f32 1.0, %v2392
      %v2394 = vrcp.pop %v2347
      %v2395 = vmul.f32 1.0, %v2394
      %v2396 = vrcp.pop %v2348
      %v2397 = vmul.f32 1.0, %v2396
      %v2398 = vrcp.pop %v2349
      %v2399 = vmul.f32 1.0, %v2398
      %v2400 = vrcp.pop %v2350
      %v2401 = vmul.f32 1.0, %v2400
      %v2402 = vrcp.pop %v2351
      %v2403 = vmul.f32 1.0, %v2402
      %v2404 = vrcp.pop %v2352
      %v2405 = vmul.f32 1.0, %v2404
      %v2406 = vrcp.pop %v2353
      %v2407 = vmul.f32 1.0, %v2406
      %v2408 = vrcp.pop %v2354
      %v2409 = vmul.f32 1.0, %v2408
      %v2410 = vrcp.pop %v2355
      %v2411 = vmul.f32 1.0, %v2410
      %v2412 = vrcp.pop %v2356
      %v2413 = vmul.f32 1.0, %v2412
      %v2414 = vrcp.pop %v2357
      %v2415 = vmul.f32 1.0, %v2414
      %v2416 = vrcp.pop %v2358
      %v2417 = vmul.f32 1.0, %v2416
      %v2418 = vrcp.pop %v2359
      %v2419 = vmul.f32 1.0, %v2418
      %v2420 = vrcp.pop %v2360
      %v2421 = vmul.f32 1.0, %v2420
      %v2422 = vrcp.pop %v2361
      %v2423 = vmul.f32 1.0, %v2422
      %v2424 = vrcp.pop %v2362
      %v2425 = vmul.f32 1.0, %v2424
      %v2426 = vrcp.pop %v2363
      %v2427 = vmul.f32 1.0, %v2426
      %v2428 = vmul.f32 %v2078, %v2365
      %v2429 = vmul.f32 %v2083, %v2367
      %v2430 = vmul.f32 %v2088, %v2369
      %v2431 = vmul.f32 %v2093, %v2371
      %v2432 = vmul.f32 %v2098, %v2373
      %v2433 = vmul.f32 %v2103, %v2375
      %v2434 = vmul.f32 %v2108, %v2377
      %v2435 = vmul.f32 %v2113, %v2379
      %v2436 = vmul.f32 %v2118, %v2381
      %v2437 = vmul.f32 %v2123, %v2383
      %v2438 = vmul.f32 %v2128, %v2385
      %v2439 = vmul.f32 %v2133, %v2387
      %v2440 = vmul.f32 %v2138, %v2389
      %v2441 = vmul.f32 %v2143, %v2391
      %v2442 = vmul.f32 %v2148, %v2393
      %v2443 = vmul.f32 %v2153, %v2395
      %v2444 = vmul.f32 %v2158, %v2397
      %v2445 = vmul.f32 %v2163, %v2399
      %v2446 = vmul.f32 %v2168, %v2401
      %v2447 = vmul.f32 %v2173, %v2403
      %v2448 = vmul.f32 %v2178, %v2405
      %v2449 = vmul.f32 %v2183, %v2407
      %v2450 = vmul.f32 %v2188, %v2409
      %v2451 = vmul.f32 %v2193, %v2411
      %v2452 = vmul.f32 %v2198, %v2413
      %v2453 = vmul.f32 %v2203, %v2415
      %v2454 = vmul.f32 %v2208, %v2417
      %v2455 = vmul.f32 %v2213, %v2419
      %v2456 = vmul.f32 %v2218, %v2421
      %v2457 = vmul.f32 %v2223, %v2423
      %v2458 = vmul.f32 %v2228, %v2425
      %v2459 = vmul.f32 %v2233, %v2427
      %2461 = vset.pattern.permute.xlu0 40
      %2462 = vperm.xlu0 %2461, %v178
      %v2463 = vpop.permute.xlu0 %2462
      %2466 = vset.pattern.permute.xlu0 40
      %2467 = vperm.xlu0 %2466, %v180
      %v2468 = vpop.permute.xlu0 %2467
      %2471 = vset.pattern.permute.xlu0 40
      %2472 = vperm.xlu0 %2471, %v182
      %v2473 = vpop.permute.xlu0 %2472
      %2476 = vset.pattern.permute.xlu0 40
      %2477 = vperm.xlu0 %2476, %v184
      %v2478 = vpop.permute.xlu0 %2477
      %2481 = vset.pattern.permute.xlu0 40
      %2482 = vperm.xlu0 %2481, %v186
      %v2483 = vpop.permute.xlu0 %2482
      %2486 = vset.pattern.permute.xlu0 40
      %2487 = vperm.xlu0 %2486, %v188
      %v2488 = vpop.permute.xlu0 %2487
      %2491 = vset.pattern.permute.xlu0 40
      %2492 = vperm.xlu0 %2491, %v190
      %v2493 = vpop.permute.xlu0 %2492
      %2496 = vset.pattern.permute.xlu0 40
      %2497 = vperm.xlu0 %2496, %v192
      %v2498 = vpop.permute.xlu0 %2497
      %2501 = vset.pattern.permute.xlu0 40
      %2502 = vperm.xlu0 %2501, %v194
      %v2503 = vpop.permute.xlu0 %2502
      %2506 = vset.pattern.permute.xlu0 40
      %2507 = vperm.xlu0 %2506, %v196
      %v2508 = vpop.permute.xlu0 %2507
      %2511 = vset.pattern.permute.xlu0 40
      %2512 = vperm.xlu0 %2511, %v198
      %v2513 = vpop.permute.xlu0 %2512
      %2516 = vset.pattern.permute.xlu0 40
      %2517 = vperm.xlu0 %2516, %v200
      %v2518 = vpop.permute.xlu0 %2517
      %2521 = vset.pattern.permute.xlu0 40
      %2522 = vperm.xlu0 %2521, %v202
      %v2523 = vpop.permute.xlu0 %2522
      %2526 = vset.pattern.permute.xlu0 40
      %2527 = vperm.xlu0 %2526, %v204
      %v2528 = vpop.permute.xlu0 %2527
      %2531 = vset.pattern.permute.xlu0 40
      %2532 = vperm.xlu0 %2531, %v206
      %v2533 = vpop.permute.xlu0 %2532
      %2536 = vset.pattern.permute.xlu0 40
      %2537 = vperm.xlu0 %2536, %v208
      %v2538 = vpop.permute.xlu0 %2537
      %2541 = vset.pattern.permute.xlu0 40
      %2542 = vperm.xlu0 %2541, %v210
      %v2543 = vpop.permute.xlu0 %2542
      %2546 = vset.pattern.permute.xlu0 40
      %2547 = vperm.xlu0 %2546, %v212
      %v2548 = vpop.permute.xlu0 %2547
      %2551 = vset.pattern.permute.xlu0 40
      %2552 = vperm.xlu0 %2551, %v214
      %v2553 = vpop.permute.xlu0 %2552
      %2556 = vset.pattern.permute.xlu0 40
      %2557 = vperm.xlu0 %2556, %v216
      %v2558 = vpop.permute.xlu0 %2557
      %2561 = vset.pattern.permute.xlu0 40
      %2562 = vperm.xlu0 %2561, %v218
      %v2563 = vpop.permute.xlu0 %2562
      %2566 = vset.pattern.permute.xlu0 40
      %2567 = vperm.xlu0 %2566, %v220
      %v2568 = vpop.permute.xlu0 %2567
      %2571 = vset.pattern.permute.xlu0 40
      %2572 = vperm.xlu0 %2571, %v222
      %v2573 = vpop.permute.xlu0 %2572
      %2576 = vset.pattern.permute.xlu0 40
      %2577 = vperm.xlu0 %2576, %v224
      %v2578 = vpop.permute.xlu0 %2577
      %2581 = vset.pattern.permute.xlu0 40
      %2582 = vperm.xlu0 %2581, %v226
      %v2583 = vpop.permute.xlu0 %2582
      %2586 = vset.pattern.permute.xlu0 40
      %2587 = vperm.xlu0 %2586, %v228
      %v2588 = vpop.permute.xlu0 %2587
      %2591 = vset.pattern.permute.xlu0 40
      %2592 = vperm.xlu0 %2591, %v230
      %v2593 = vpop.permute.xlu0 %2592
      %2596 = vset.pattern.permute.xlu0 40
      %2597 = vperm.xlu0 %2596, %v232
      %v2598 = vpop.permute.xlu0 %2597
      %2601 = vset.pattern.permute.xlu0 40
      %2602 = vperm.xlu0 %2601, %v234
      %v2603 = vpop.permute.xlu0 %2602
      %2606 = vset.pattern.permute.xlu0 40
      %2607 = vperm.xlu0 %2606, %v236
      %v2608 = vpop.permute.xlu0 %2607
      %2611 = vset.pattern.permute.xlu0 40
      %2612 = vperm.xlu0 %2611, %v238
      %v2613 = vpop.permute.xlu0 %2612
      %2616 = vset.pattern.permute.xlu0 40
      %2617 = vperm.xlu0 %2616, %v240
      %v2618 = vpop.permute.xlu0 %2617
      %v2620 = vsel %vm484, 1.0, %v2463
      %v2621 = vsel %vm484, 1.0, %v2468
      %v2622 = vsel %vm484, 1.0, %v2473
      %v2623 = vsel %vm484, 1.0, %v2478
      %v2624 = vsel %vm484, 1.0, %v2483
      %v2625 = vsel %vm484, 1.0, %v2488
      %v2626 = vsel %vm484, 1.0, %v2493
      %v2627 = vsel %vm484, 1.0, %v2498
      %v2628 = vsel %vm484, 1.0, %v2503
      %v2629 = vsel %vm484, 1.0, %v2508
      %v2630 = vsel %vm484, 1.0, %v2513
      %v2631 = vsel %vm484, 1.0, %v2518
      %v2632 = vsel %vm484, 1.0, %v2523
      %v2633 = vsel %vm484, 1.0, %v2528
      %v2634 = vsel %vm484, 1.0, %v2533
      %v2635 = vsel %vm484, 1.0, %v2538
      %v2636 = vsel %vm484, 1.0, %v2543
      %v2637 = vsel %vm484, 1.0, %v2548
      %v2638 = vsel %vm484, 1.0, %v2553
      %v2639 = vsel %vm484, 1.0, %v2558
      %v2640 = vsel %vm484, 1.0, %v2563
      %v2641 = vsel %vm484, 1.0, %v2568
      %v2642 = vsel %vm484, 1.0, %v2573
      %v2643 = vsel %vm484, 1.0, %v2578
      %v2644 = vsel %vm484, 1.0, %v2583
      %v2645 = vsel %vm484, 1.0, %v2588
      %v2646 = vsel %vm484, 1.0, %v2593
      %v2647 = vsel %vm484, 1.0, %v2598
      %v2648 = vsel %vm484, 1.0, %v2603
      %v2649 = vsel %vm484, 1.0, %v2608
      %v2650 = vsel %vm484, 1.0, %v2613
      %v2651 = vsel %vm484, 1.0, %v2618
      %vm2652 = vcmp.lt.s32.totalorder %v483, 40
      %v2653 = vxor.u32 %v178, 2147483648
      %v2654 = vxor.u32 %v180, 2147483648
      %v2655 = vxor.u32 %v182, 2147483648
      %v2656 = vxor.u32 %v184, 2147483648
      %v2657 = vxor.u32 %v186, 2147483648
      %v2658 = vxor.u32 %v188, 2147483648
      %v2659 = vxor.u32 %v190, 2147483648
      %v2660 = vxor.u32 %v192, 2147483648
      %v2661 = vxor.u32 %v194, 2147483648
      %v2662 = vxor.u32 %v196, 2147483648
      %v2663 = vxor.u32 %v198, 2147483648
      %v2664 = vxor.u32 %v200, 2147483648
      %v2665 = vxor.u32 %v202, 2147483648
      %v2666 = vxor.u32 %v204, 2147483648
      %v2667 = vxor.u32 %v206, 2147483648
      %v2668 = vxor.u32 %v208, 2147483648
      %v2669 = vxor.u32 %v210, 2147483648
      %v2670 = vxor.u32 %v212, 2147483648
      %v2671 = vxor.u32 %v214, 2147483648
      %v2672 = vxor.u32 %v216, 2147483648
      %v2673 = vxor.u32 %v218, 2147483648
      %v2674 = vxor.u32 %v220, 2147483648
      %v2675 = vxor.u32 %v222, 2147483648
      %v2676 = vxor.u32 %v224, 2147483648
      %v2677 = vxor.u32 %v226, 2147483648
      %v2678 = vxor.u32 %v228, 2147483648
      %v2679 = vxor.u32 %v230, 2147483648
      %v2680 = vxor.u32 %v232, 2147483648
      %v2681 = vxor.u32 %v234, 2147483648
      %v2682 = vxor.u32 %v236, 2147483648
      %v2683 = vxor.u32 %v238, 2147483648
      %v2684 = vxor.u32 %v240, 2147483648
      %v2685 = vmul.f32 %v2653, 1.442695
      %v2686 = vpow.pop %v2685
      %v2687 = vmul.f32 %v2654, 1.442695
      %v2688 = vpow.pop %v2687
      %v2689 = vmul.f32 %v2655, 1.442695
      %v2690 = vpow.pop %v2689
      %v2691 = vmul.f32 %v2656, 1.442695
      %v2692 = vpow.pop %v2691
      %v2693 = vmul.f32 %v2657, 1.442695
      %v2694 = vpow.pop %v2693
      %v2695 = vmul.f32 %v2658, 1.442695
      %v2696 = vpow.pop %v2695
      %v2697 = vmul.f32 %v2659, 1.442695
      %v2698 = vpow.pop %v2697
      %v2699 = vmul.f32 %v2660, 1.442695
      %v2700 = vpow.pop %v2699
      %v2701 = vmul.f32 %v2661, 1.442695
      %v2702 = vpow.pop %v2701
      %v2703 = vmul.f32 %v2662, 1.442695
      %v2704 = vpow.pop %v2703
      %v2705 = vmul.f32 %v2663, 1.442695
      %v2706 = vpow.pop %v2705
      %v2707 = vmul.f32 %v2664, 1.442695
      %v2708 = vpow.pop %v2707
      %v2709 = vmul.f32 %v2665, 1.442695
      %v2710 = vpow.pop %v2709
      %v2711 = vmul.f32 %v2666, 1.442695
      %v2712 = vpow.pop %v2711
      %v2713 = vmul.f32 %v2667, 1.442695
      %v2714 = vpow.pop %v2713
      %v2715 = vmul.f32 %v2668, 1.442695
      %v2716 = vpow.pop %v2715
      %v2717 = vmul.f32 %v2669, 1.442695
      %v2718 = vpow.pop %v2717
      %v2719 = vmul.f32 %v2670, 1.442695
      %v2720 = vpow.pop %v2719
      %v2721 = vmul.f32 %v2671, 1.442695
      %v2722 = vpow.pop %v2721
      %v2723 = vmul.f32 %v2672, 1.442695
      %v2724 = vpow.pop %v2723
      %v2725 = vmul.f32 %v2673, 1.442695
      %v2726 = vpow.pop %v2725
      %v2727 = vmul.f32 %v2674, 1.442695
      %v2728 = vpow.pop %v2727
      %v2729 = vmul.f32 %v2675, 1.442695
      %v2730 = vpow.pop %v2729
      %v2731 = vmul.f32 %v2676, 1.442695
      %v2732 = vpow.pop %v2731
      %v2733 = vmul.f32 %v2677, 1.442695
      %v2734 = vpow.pop %v2733
      %v2735 = vmul.f32 %v2678, 1.442695
      %v2736 = vpow.pop %v2735
      %v2737 = vmul.f32 %v2679, 1.442695
      %v2738 = vpow.pop %v2737
      %v2739 = vmul.f32 %v2680, 1.442695
      %v2740 = vpow.pop %v2739
      %v2741 = vmul.f32 %v2681, 1.442695
      %v2742 = vpow.pop %v2741
      %v2743 = vmul.f32 %v2682, 1.442695
      %v2744 = vpow.pop %v2743
      %v2745 = vmul.f32 %v2683, 1.442695
      %v2746 = vpow.pop %v2745
      %v2747 = vmul.f32 %v2684, 1.442695
      %v2748 = vpow.pop %v2747
      %v2749 = vadd.f32 %v2686, 1.0
      %v2750 = vadd.f32 %v2688, 1.0
      %v2751 = vadd.f32 %v2690, 1.0
      %v2752 = vadd.f32 %v2692, 1.0
      %v2753 = vadd.f32 %v2694, 1.0
      %v2754 = vadd.f32 %v2696, 1.0
      %v2755 = vadd.f32 %v2698, 1.0
      %v2756 = vadd.f32 %v2700, 1.0
      %v2757 = vadd.f32 %v2702, 1.0
      %v2758 = vadd.f32 %v2704, 1.0
      %v2759 = vadd.f32 %v2706, 1.0
      %v2760 = vadd.f32 %v2708, 1.0
      %v2761 = vadd.f32 %v2710, 1.0
      %v2762 = vadd.f32 %v2712, 1.0
      %v2763 = vadd.f32 %v2714, 1.0
      %v2764 = vadd.f32 %v2716, 1.0
      %v2765 = vadd.f32 %v2718, 1.0
      %v2766 = vadd.f32 %v2720, 1.0
      %v2767 = vadd.f32 %v2722, 1.0
      %v2768 = vadd.f32 %v2724, 1.0
      %v2769 = vadd.f32 %v2726, 1.0
      %v2770 = vadd.f32 %v2728, 1.0
      %v2771 = vadd.f32 %v2730, 1.0
      %v2772 = vadd.f32 %v2732, 1.0
      %v2773 = vadd.f32 %v2734, 1.0
      %v2774 = vadd.f32 %v2736, 1.0
      %v2775 = vadd.f32 %v2738, 1.0
      %v2776 = vadd.f32 %v2740, 1.0
      %v2777 = vadd.f32 %v2742, 1.0
      %v2778 = vadd.f32 %v2744, 1.0
      %v2779 = vadd.f32 %v2746, 1.0
      %v2780 = vadd.f32 %v2748, 1.0
      %v2781 = vrcp.pop %v2749
      %v2782 = vmul.f32 1.0, %v2781
      %v2783 = vrcp.pop %v2750
      %v2784 = vmul.f32 1.0, %v2783
      %v2785 = vrcp.pop %v2751
      %v2786 = vmul.f32 1.0, %v2785
      %v2787 = vrcp.pop %v2752
      %v2788 = vmul.f32 1.0, %v2787
      %v2789 = vrcp.pop %v2753
      %v2790 = vmul.f32 1.0, %v2789
      %v2791 = vrcp.pop %v2754
      %v2792 = vmul.f32 1.0, %v2791
      %v2793 = vrcp.pop %v2755
      %v2794 = vmul.f32 1.0, %v2793
      %v2795 = vrcp.pop %v2756
      %v2796 = vmul.f32 1.0, %v2795
      %v2797 = vrcp.pop %v2757
      %v2798 = vmul.f32 1.0, %v2797
      %v2799 = vrcp.pop %v2758
      %v2800 = vmul.f32 1.0, %v2799
      %v2801 = vrcp.pop %v2759
      %v2802 = vmul.f32 1.0, %v2801
      %v2803 = vrcp.pop %v2760
      %v2804 = vmul.f32 1.0, %v2803
      %v2805 = vrcp.pop %v2761
      %v2806 = vmul.f32 1.0, %v2805
      %v2807 = vrcp.pop %v2762
      %v2808 = vmul.f32 1.0, %v2807
      %v2809 = vrcp.pop %v2763
      %v2810 = vmul.f32 1.0, %v2809
      %v2811 = vrcp.pop %v2764
      %v2812 = vmul.f32 1.0, %v2811
      %v2813 = vrcp.pop %v2765
      %v2814 = vmul.f32 1.0, %v2813
      %v2815 = vrcp.pop %v2766
      %v2816 = vmul.f32 1.0, %v2815
      %v2817 = vrcp.pop %v2767
      %v2818 = vmul.f32 1.0, %v2817
      %v2819 = vrcp.pop %v2768
      %v2820 = vmul.f32 1.0, %v2819
      %v2821 = vrcp.pop %v2769
      %v2822 = vmul.f32 1.0, %v2821
      %v2823 = vrcp.pop %v2770
      %v2824 = vmul.f32 1.0, %v2823
      %v2825 = vrcp.pop %v2771
      %v2826 = vmul.f32 1.0, %v2825
      %v2827 = vrcp.pop %v2772
      %v2828 = vmul.f32 1.0, %v2827
      %v2829 = vrcp.pop %v2773
      %v2830 = vmul.f32 1.0, %v2829
      %v2831 = vrcp.pop %v2774
      %v2832 = vmul.f32 1.0, %v2831
      %v2833 = vrcp.pop %v2775
      %v2834 = vmul.f32 1.0, %v2833
      %v2835 = vrcp.pop %v2776
      %v2836 = vmul.f32 1.0, %v2835
      %v2837 = vrcp.pop %v2777
      %v2838 = vmul.f32 1.0, %v2837
      %v2839 = vrcp.pop %v2778
      %v2840 = vmul.f32 1.0, %v2839
      %v2841 = vrcp.pop %v2779
      %v2842 = vmul.f32 1.0, %v2841
      %v2843 = vrcp.pop %v2780
      %v2844 = vmul.f32 1.0, %v2843
      %v2845 = vmul.f32 %v178, %v2782
      %v2846 = vmul.f32 %v180, %v2784
      %v2847 = vmul.f32 %v182, %v2786
      %v2848 = vmul.f32 %v184, %v2788
      %v2849 = vmul.f32 %v186, %v2790
      %v2850 = vmul.f32 %v188, %v2792
      %v2851 = vmul.f32 %v190, %v2794
      %v2852 = vmul.f32 %v192, %v2796
      %v2853 = vmul.f32 %v194, %v2798
      %v2854 = vmul.f32 %v196, %v2800
      %v2855 = vmul.f32 %v198, %v2802
      %v2856 = vmul.f32 %v200, %v2804
      %v2857 = vmul.f32 %v202, %v2806
      %v2858 = vmul.f32 %v204, %v2808
      %v2859 = vmul.f32 %v206, %v2810
      %v2860 = vmul.f32 %v208, %v2812
      %v2861 = vmul.f32 %v210, %v2814
      %v2862 = vmul.f32 %v212, %v2816
      %v2863 = vmul.f32 %v214, %v2818
      %v2864 = vmul.f32 %v216, %v2820
      %v2865 = vmul.f32 %v218, %v2822
      %v2866 = vmul.f32 %v220, %v2824
      %v2867 = vmul.f32 %v222, %v2826
      %v2868 = vmul.f32 %v224, %v2828
      %v2869 = vmul.f32 %v226, %v2830
      %v2870 = vmul.f32 %v228, %v2832
      %v2871 = vmul.f32 %v230, %v2834
      %v2872 = vmul.f32 %v232, %v2836
      %v2873 = vmul.f32 %v234, %v2838
      %v2874 = vmul.f32 %v236, %v2840
      %v2875 = vmul.f32 %v238, %v2842
      %v2876 = vmul.f32 %v240, %v2844
      %v2877 = vmul.f32 %v2845, %v2620
      %v2878 = vmul.f32 %v2846, %v2621
      %v2879 = vmul.f32 %v2847, %v2622
      %v2880 = vmul.f32 %v2848, %v2623
      %v2881 = vmul.f32 %v2849, %v2624
      %v2882 = vmul.f32 %v2850, %v2625
      %v2883 = vmul.f32 %v2851, %v2626
      %v2884 = vmul.f32 %v2852, %v2627
      %v2885 = vmul.f32 %v2853, %v2628
      %v2886 = vmul.f32 %v2854, %v2629
      %v2887 = vmul.f32 %v2855, %v2630
      %v2888 = vmul.f32 %v2856, %v2631
      %v2889 = vmul.f32 %v2857, %v2632
      %v2890 = vmul.f32 %v2858, %v2633
      %v2891 = vmul.f32 %v2859, %v2634
      %v2892 = vmul.f32 %v2860, %v2635
      %v2893 = vmul.f32 %v2861, %v2636
      %v2894 = vmul.f32 %v2862, %v2637
      %v2895 = vmul.f32 %v2863, %v2638
      %v2896 = vmul.f32 %v2864, %v2639
      %v2897 = vmul.f32 %v2865, %v2640
      %v2898 = vmul.f32 %v2866, %v2641
      %v2899 = vmul.f32 %v2867, %v2642
      %v2900 = vmul.f32 %v2868, %v2643
      %v2901 = vmul.f32 %v2869, %v2644
      %v2902 = vmul.f32 %v2870, %v2645
      %v2903 = vmul.f32 %v2871, %v2646
      %v2904 = vmul.f32 %v2872, %v2647
      %v2905 = vmul.f32 %v2873, %v2648
      %v2906 = vmul.f32 %v2874, %v2649
      %v2907 = vmul.f32 %v2875, %v2650
      %v2908 = vmul.f32 %v2876, %v2651
      %v2909 = vsel %vm2652, %v2877, %v178
      %v2910 = vsel %vm2652, %v2878, %v180
      %v2911 = vsel %vm2652, %v2879, %v182
      %v2912 = vsel %vm2652, %v2880, %v184
      %v2913 = vsel %vm2652, %v2881, %v186
      %v2914 = vsel %vm2652, %v2882, %v188
      %v2915 = vsel %vm2652, %v2883, %v190
      %v2916 = vsel %vm2652, %v2884, %v192
      %v2917 = vsel %vm2652, %v2885, %v194
      %v2918 = vsel %vm2652, %v2886, %v196
      %v2919 = vsel %vm2652, %v2887, %v198
      %v2920 = vsel %vm2652, %v2888, %v200
      %v2921 = vsel %vm2652, %v2889, %v202
      %v2922 = vsel %vm2652, %v2890, %v204
      %v2923 = vsel %vm2652, %v2891, %v206
      %v2924 = vsel %vm2652, %v2892, %v208
      %v2925 = vsel %vm2652, %v2893, %v210
      %v2926 = vsel %vm2652, %v2894, %v212
      %v2927 = vsel %vm2652, %v2895, %v214
      %v2928 = vsel %vm2652, %v2896, %v216
      %v2929 = vsel %vm2652, %v2897, %v218
      %v2930 = vsel %vm2652, %v2898, %v220
      %v2931 = vsel %vm2652, %v2899, %v222
      %v2932 = vsel %vm2652, %v2900, %v224
      %v2933 = vsel %vm2652, %v2901, %v226
      %v2934 = vsel %vm2652, %v2902, %v228
      %v2935 = vsel %vm2652, %v2903, %v230
      %v2936 = vsel %vm2652, %v2904, %v232
      %v2937 = vsel %vm2652, %v2905, %v234
      %v2938 = vsel %vm2652, %v2906, %v236
      %v2939 = vsel %vm2652, %v2907, %v238
      %v2940 = vsel %vm2652, %v2908, %v240
      %v2941 = vld [vmem:[%s1 + $0x120] sm:$0xff]
      %v2942 = vld [vmem:[%s1 + $0x128] sm:$0xff]
      %v2943 = vld [vmem:[%s1 + $0x130] sm:$0xff]
      %v2944 = vld [vmem:[%s1 + $0x138] sm:$0xff]
      %v2945 = vld [vmem:[%s1 + $0x140] sm:$0xff]
      %v2946 = vld [vmem:[%s1 + $0x148] sm:$0xff]
      %v2947 = vld [vmem:[%s1 + $0x150] sm:$0xff]
      %v2948 = vld [vmem:[%s1 + $0x158] sm:$0xff]
      %v2949 = vld [vmem:[%s1 + $0x160] sm:$0xff]
      %v2950 = vld [vmem:[%s1 + $0x168] sm:$0xff]
      %v2951 = vld [vmem:[%s1 + $0x170] sm:$0xff]
      %v2952 = vld [vmem:[%s1 + $0x178] sm:$0xff]
      %v2953 = vld [vmem:[%s1 + $0x180] sm:$0xff]
      %v2954 = vld [vmem:[%s1 + $0x188] sm:$0xff]
      %v2955 = vld [vmem:[%s1 + $0x190] sm:$0xff]
      %v2956 = vld [vmem:[%s1 + $0x198] sm:$0xff]
      %2957 = vmatprep.subr.mxu0 0.0
      %2958 = vmatpush1.msra.mxu0 %v2941
      %2959 = vmatprep.subr.mxu0 0.0
      %2960 = vmatpush1.msra.mxu0 %v2942
      %2961 = vmatprep.subr.mxu0 0.0
      %2962 = vmatpush1.msra.mxu0 %v2943
      %2963 = vmatprep.subr.mxu0 0.0
      %2964 = vmatpush1.msra.mxu0 %v2944
      %2965 = vmatprep.subr.mxu0 0.0
      %2966 = vmatpush1.msra.mxu0 %v2945
      %2967 = vmatprep.subr.mxu0 0.0
      %2968 = vmatpush1.msra.mxu0 %v2946
      %2969 = vmatprep.subr.mxu0 0.0
      %2970 = vmatpush1.msra.mxu0 %v2947
      %2971 = vmatprep.subr.mxu0 0.0
      %2972 = vmatpush1.msra.mxu0 %v2948
      %2973 = vmatprep.subr.mxu0 0.0
      %2974 = vmatpush1.msra.mxu0 %v2949
      %2975 = vmatprep.subr.mxu0 0.0
      %2976 = vmatpush1.msra.mxu0 %v2950
      %2977 = vmatprep.subr.mxu0 0.0
      %2978 = vmatpush1.msra.mxu0 %v2951
      %2979 = vmatprep.subr.mxu0 0.0
      %2980 = vmatpush1.msra.mxu0 %v2952
      %2981 = vmatprep.subr.mxu0 0.0
      %2982 = vmatpush1.msra.mxu0 %v2953
      %2983 = vmatprep.subr.mxu0 0.0
      %2984 = vmatpush1.msra.mxu0 %v2954
      %2985 = vmatprep.subr.mxu0 0.0
      %2986 = vmatpush1.msra.mxu0 %v2955
      %2987 = vmatprep.subr.mxu0 0.0
      %2988 = vmatpush1.msra.mxu0 %v2956
      %2989 = vmatprep.subr.mxu0 0.0
      %2990 = vmatpush1.msra.mxu0 0.0
      %2991 = vmatprep.subr.mxu0 0.0
      %2992 = vmatpush1.msra.mxu0 0.0
      %2993 = vmatprep.subr.mxu0 0.0
      %2994 = vmatpush1.msra.mxu0 0.0
      %2995 = vmatprep.subr.mxu0 0.0
      %2996 = vmatpush1.msra.mxu0 0.0
      %2997 = vmatprep.subr.mxu0 0.0
      %2998 = vmatpush1.msra.mxu0 0.0
      %2999 = vmatprep.subr.mxu0 0.0
      %3000 = vmatpush1.msra.mxu0 0.0
      %3001 = vmatprep.subr.mxu0 0.0
      %3002 = vmatpush1.msra.mxu0 0.0
      %3003 = vmatprep.subr.mxu0 0.0
      %3004 = vmatpush1.msra.mxu0 0.0
      %3005 = vmatprep.subr.mxu0 0.0
      %3006 = vmatpush1.msra.mxu0 0.0
      %3007 = vmatprep.subr.mxu0 0.0
      %3008 = vmatpush1.msra.mxu0 0.0
      %3009 = vmatprep.subr.mxu0 0.0
      %3010 = vmatpush1.msra.mxu0 0.0
      %3011 = vmatprep.subr.mxu0 0.0
      %3012 = vmatpush1.msra.mxu0 0.0
      %3013 = vmatprep.subr.mxu0 0.0
      %3014 = vmatpush1.msra.mxu0 0.0
      %3015 = vmatprep.subr.mxu0 0.0
      %3016 = vmatpush1.msra.mxu0 0.0
      %3017 = vmatprep.subr.mxu0 0.0
      %3018 = vmatpush1.msra.mxu0 0.0
      %3019 = vmatprep.subr.mxu0 0.0
      %3020 = vmatpush1.msra.mxu0 0.0
      %3021 = vmatprep.mubr.f32.mxu0 0.0
      %3022 = vmatmul.mubr.f32.gmra.mrb[0].mxu0 %v2909
      %v3023 = vpop.f32.mrb[0].mxu0
      %v3024 = vadd.f32 0.0, %v3023
      %v3025 = vpop.f32.mrb[0].mxu0
      %3026 = vmatprep.mubr.f32.mxu0 0.0
      %3027 = vmatmul.mubr.f32.gmra.mrb[0].mxu0 %v2910
      %v3028 = vpop.f32.mrb[0].mxu0
      %v3029 = vadd.f32 0.0, %v3028
      %v3030 = vpop.f32.mrb[0].mxu0
      %3031 = vmatprep.mubr.f32.mxu0 0.0
      %3032 = vmatmul.mubr.f32.gmra.mrb[0].mxu0 %v2911
      %v3033 = vpop.f32.mrb[0].mxu0
      %v3034 = vadd.f32 0.0, %v3033
      %v3035 = vpop.f32.mrb[0].mxu0
      %3036 = vmatprep.mubr.f32.mxu0 0.0
      %3037 = vmatmul.mubr.f32.gmra.mrb[0].mxu0 %v2912
      %v3038 = vpop.f32.mrb[0].mxu0
      %v3039 = vadd.f32 0.0, %v3038
      %v3040 = vpop.f32.mrb[0].mxu0
      %3041 = vmatprep.mubr.f32.mxu0 0.0
      %3042 = vmatmul.mubr.f32.gmra.mrb[0].mxu0 %v2913
      %v3043 = vpop.f32.mrb[0].mxu0
      %v3044 = vadd.f32 0.0, %v3043
      %v3045 = vpop.f32.mrb[0].mxu0
      %3046 = vmatprep.mubr.f32.mxu0 0.0
      %3047 = vmatmul.mubr.f32.gmra.mrb[0].mxu0 %v2914
      %v3048 = vpop.f32.mrb[0].mxu0
      %v3049 = vadd.f32 0.0, %v3048
      %v3050 = vpop.f32.mrb[0].mxu0
      %3051 = vmatprep.mubr.f32.mxu0 0.0
      %3052 = vmatmul.mubr.f32.gmra.mrb[0].mxu0 %v2915
      %v3053 = vpop.f32.mrb[0].mxu0
      %v3054 = vadd.f32 0.0, %v3053
      %v3055 = vpop.f32.mrb[0].mxu0
      %3056 = vmatprep.mubr.f32.mxu0 0.0
      %3057 = vmatmul.mubr.f32.gmra.mrb[0].mxu0 %v2916
      %v3058 = vpop.f32.mrb[0].mxu0
      %v3059 = vadd.f32 0.0, %v3058
      %v3060 = vpop.f32.mrb[0].mxu0
      %3061 = vmatprep.mubr.f32.mxu0 0.0
      %3062 = vmatmul.mubr.f32.gmra.mrb[0].mxu0 %v2917
      %v3063 = vpop.f32.mrb[0].mxu0
      %v3064 = vadd.f32 0.0, %v3063
      %v3065 = vpop.f32.mrb[0].mxu0
      %3066 = vmatprep.mubr.f32.mxu0 0.0
      %3067 = vmatmul.mubr.f32.gmra.mrb[0].mxu0 %v2918
      %v3068 = vpop.f32.mrb[0].mxu0
      %v3069 = vadd.f32 0.0, %v3068
      %v3070 = vpop.f32.mrb[0].mxu0
      %3071 = vmatprep.mubr.f32.mxu0 0.0
      %3072 = vmatmul.mubr.f32.gmra.mrb[0].mxu0 %v2919
      %v3073 = vpop.f32.mrb[0].mxu0
      %v3074 = vadd.f32 0.0, %v3073
      %v3075 = vpop.f32.mrb[0].mxu0
      %3076 = vmatprep.mubr.f32.mxu0 0.0
      %3077 = vmatmul.mubr.f32.gmra.mrb[0].mxu0 %v2920
      %v3078 = vpop.f32.mrb[0].mxu0
      %v3079 = vadd.f32 0.0, %v3078
      %v3080 = vpop.f32.mrb[0].mxu0
      %3081 = vmatprep.mubr.f32.mxu0 0.0
      %3082 = vmatmul.mubr.f32.gmra.mrb[0].mxu0 %v2921
      %v3083 = vpop.f32.mrb[0].mxu0
      %v3084 = vadd.f32 0.0, %v3083
      %v3085 = vpop.f32.mrb[0].mxu0
      %3086 = vmatprep.mubr.f32.mxu0 0.0
      %3087 = vmatmul.mubr.f32.gmra.mrb[0].mxu0 %v2922
      %v3088 = vpop.f32.mrb[0].mxu0
      %v3089 = vadd.f32 0.0, %v3088
      %v3090 = vpop.f32.mrb[0].mxu0
      %3091 = vmatprep.mubr.f32.mxu0 0.0
      %3092 = vmatmul.mubr.f32.gmra.mrb[0].mxu0 %v2923
      %v3093 = vpop.f32.mrb[0].mxu0
      %v3094 = vadd.f32 0.0, %v3093
      %v3095 = vpop.f32.mrb[0].mxu0
      %3096 = vmatprep.mubr.f32.mxu0 0.0
      %3097 = vmatmul.mubr.f32.gmra.mrb[0].mxu0 %v2924
      %v3098 = vpop.f32.mrb[0].mxu0
      %v3099 = vadd.f32 0.0, %v3098
      %v3100 = vpop.f32.mrb[0].mxu0
      %3101 = vmatprep.mubr.f32.mxu0 0.0
      %3102 = vmatmul.mubr.f32.gmra.mrb[0].mxu0 %v2925
      %v3103 = vpop.f32.mrb[0].mxu0
      %v3104 = vadd.f32 0.0, %v3103
      %v3105 = vpop.f32.mrb[0].mxu0
      %3106 = vmatprep.mubr.f32.mxu0 0.0
      %3107 = vmatmul.mubr.f32.gmra.mrb[0].mxu0 %v2926
      %v3108 = vpop.f32.mrb[0].mxu0
      %v3109 = vadd.f32 0.0, %v3108
      %v3110 = vpop.f32.mrb[0].mxu0
      %3111 = vmatprep.mubr.f32.mxu0 0.0
      %3112 = vmatmul.mubr.f32.gmra.mrb[0].mxu0 %v2927
      %v3113 = vpop.f32.mrb[0].mxu0
      %v3114 = vadd.f32 0.0, %v3113
      %v3115 = vpop.f32.mrb[0].mxu0
      %3116 = vmatprep.mubr.f32.mxu0 0.0
      %3117 = vmatmul.mubr.f32.gmra.mrb[0].mxu0 %v2928
      %v3118 = vpop.f32.mrb[0].mxu0
      %v3119 = vadd.f32 0.0, %v3118
      %v3120 = vpop.f32.mrb[0].mxu0
      %3121 = vmatprep.mubr.f32.mxu0 0.0
      %3122 = vmatmul.mubr.f32.gmra.mrb[0].mxu0 %v2929
      %v3123 = vpop.f32.mrb[0].mxu0
      %v3124 = vadd.f32 0.0, %v3123
      %v3125 = vpop.f32.mrb[0].mxu0
      %3126 = vmatprep.mubr.f32.mxu0 0.0
      %3127 = vmatmul.mubr.f32.gmra.mrb[0].mxu0 %v2930
      %v3128 = vpop.f32.mrb[0].mxu0
      %v3129 = vadd.f32 0.0, %v3128
      %v3130 = vpop.f32.mrb[0].mxu0
      %3131 = vmatprep.mubr.f32.mxu0 0.0
      %3132 = vmatmul.mubr.f32.gmra.mrb[0].mxu0 %v2931
      %v3133 = vpop.f32.mrb[0].mxu0
      %v3134 = vadd.f32 0.0, %v3133
      %v3135 = vpop.f32.mrb[0].mxu0
      %3136 = vmatprep.mubr.f32.mxu0 0.0
      %3137 = vmatmul.mubr.f32.gmra.mrb[0].mxu0 %v2932
      %v3138 = vpop.f32.mrb[0].mxu0
      %v3139 = vadd.f32 0.0, %v3138
      %v3140 = vpop.f32.mrb[0].mxu0
      %3141 = vmatprep.mubr.f32.mxu0 0.0
      %3142 = vmatmul.mubr.f32.gmra.mrb[0].mxu0 %v2933
      %v3143 = vpop.f32.mrb[0].mxu0
      %v3144 = vadd.f32 0.0, %v3143
      %v3145 = vpop.f32.mrb[0].mxu0
      %3146 = vmatprep.mubr.f32.mxu0 0.0
      %3147 = vmatmul.mubr.f32.gmra.mrb[0].mxu0 %v2934
      %v3148 = vpop.f32.mrb[0].mxu0
      %v3149 = vadd.f32 0.0, %v3148
      %v3150 = vpop.f32.mrb[0].mxu0
      %3151 = vmatprep.mubr.f32.mxu0 0.0
      %3152 = vmatmul.mubr.f32.gmra.mrb[0].mxu0 %v2935
      %v3153 = vpop.f32.mrb[0].mxu0
      %v3154 = vadd.f32 0.0, %v3153
      %v3155 = vpop.f32.mrb[0].mxu0
      %3156 = vmatprep.mubr.f32.mxu0 0.0
      %3157 = vmatmul.mubr.f32.gmra.mrb[0].mxu0 %v2936
      %v3158 = vpop.f32.mrb[0].mxu0
      %v3159 = vadd.f32 0.0, %v3158
      %v3160 = vpop.f32.mrb[0].mxu0
      %3161 = vmatprep.mubr.f32.mxu0 0.0
      %3162 = vmatmul.mubr.f32.gmra.mrb[0].mxu0 %v2937
      %v3163 = vpop.f32.mrb[0].mxu0
      %v3164 = vadd.f32 0.0, %v3163
      %v3165 = vpop.f32.mrb[0].mxu0
      %3166 = vmatprep.mubr.f32.mxu0 0.0
      %3167 = vmatmul.mubr.f32.gmra.mrb[0].mxu0 %v2938
      %v3168 = vpop.f32.mrb[0].mxu0
      %v3169 = vadd.f32 0.0, %v3168
      %v3170 = vpop.f32.mrb[0].mxu0
      %3171 = vmatprep.mubr.f32.mxu0 0.0
      %3172 = vmatmul.mubr.f32.gmra.mrb[0].mxu0 %v2939
      %v3173 = vpop.f32.mrb[0].mxu0
      %v3174 = vadd.f32 0.0, %v3173
      %v3175 = vpop.f32.mrb[0].mxu0
      %3176 = vmatprep.mubr.f32.mxu0 0.0
      %3177 = vmatmul.mubr.f32.gmra.mrb[0].mxu0 %v2940
      %v3178 = vpop.f32.mrb[0].mxu0
      %v3179 = vadd.f32 0.0, %v3178
      %v3180 = vpop.f32.mrb[0].mxu0
      %3181 = vdwg.mxu0
      %v3182 = vadd.f32 %v2428, %v3024
      %v3183 = vadd.f32 %v2429, %v3029
      %v3184 = vadd.f32 %v2430, %v3034
      %v3185 = vadd.f32 %v2431, %v3039
      %v3186 = vadd.f32 %v2432, %v3044
      %v3187 = vadd.f32 %v2433, %v3049
      %v3188 = vadd.f32 %v2434, %v3054
      %v3189 = vadd.f32 %v2435, %v3059
      %v3190 = vadd.f32 %v2436, %v3064
      %v3191 = vadd.f32 %v2437, %v3069
      %v3192 = vadd.f32 %v2438, %v3074
      %v3193 = vadd.f32 %v2439, %v3079
      %v3194 = vadd.f32 %v2440, %v3084
      %v3195 = vadd.f32 %v2441, %v3089
      %v3196 = vadd.f32 %v2442, %v3094
      %v3197 = vadd.f32 %v2443, %v3099
      %v3198 = vadd.f32 %v2444, %v3104
      %v3199 = vadd.f32 %v2445, %v3109
      %v3200 = vadd.f32 %v2446, %v3114
      %v3201 = vadd.f32 %v2447, %v3119
      %v3202 = vadd.f32 %v2448, %v3124
      %v3203 = vadd.f32 %v2449, %v3129
      %v3204 = vadd.f32 %v2450, %v3134
      %v3205 = vadd.f32 %v2451, %v3139
      %v3206 = vadd.f32 %v2452, %v3144
      %v3207 = vadd.f32 %v2453, %v3149
      %v3208 = vadd.f32 %v2454, %v3154
      %v3209 = vadd.f32 %v2455, %v3159
      %v3210 = vadd.f32 %v2456, %v3164
      %v3211 = vadd.f32 %v2457, %v3169
      %v3212 = vadd.f32 %v2458, %v3174
      %v3213 = vadd.f32 %v2459, %v3179
      %v3214 = vld [vmem:[%s1 + $0x1a0] sm:$0xff]
      %v3215 = vld [vmem:[%s1 + $0x1a8] sm:$0xff]
      %v3216 = vld [vmem:[%s1 + $0x1b0] sm:$0xff]
      %v3217 = vld [vmem:[%s1 + $0x1b8] sm:$0xff]
      %v3218 = vld [vmem:[%s1 + $0x1c0] sm:$0xff]
      %v3219 = vld [vmem:[%s1 + $0x1c8] sm:$0xff]
      %v3220 = vld [vmem:[%s1 + $0x1d0] sm:$0xff]
      %v3221 = vld [vmem:[%s1 + $0x1d8] sm:$0xff]
      %v3222 = vld [vmem:[%s1 + $0x1e0] sm:$0xff]
      %v3223 = vld [vmem:[%s1 + $0x1e8] sm:$0xff]
      %v3224 = vld [vmem:[%s1 + $0x1f0] sm:$0xff]
      %v3225 = vld [vmem:[%s1 + $0x1f8] sm:$0xff]
      %v3226 = vld [vmem:[%s1 + $0x200] sm:$0xff]
      %v3227 = vld [vmem:[%s1 + $0x208] sm:$0xff]
      %v3228 = vld [vmem:[%s1 + $0x210] sm:$0xff]
      %v3229 = vld [vmem:[%s1 + $0x218] sm:$0xff]
      %3230 = vmatprep.subr.mxu0 0.0
      %3231 = vmatpush1.msra.mxu0 %v3214
      %3232 = vmatprep.subr.mxu0 0.0
      %3233 = vmatpush1.msra.mxu0 %v3215
      %3234 = vmatprep.subr.mxu0 0.0
      %3235 = vmatpush1.msra.mxu0 %v3216
      %3236 = vmatprep.subr.mxu0 0.0
      %3237 = vmatpush1.msra.mxu0 %v3217
      %3238 = vmatprep.subr.mxu0 0.0
      %3239 = vmatpush1.msra.mxu0 %v3218
      %3240 = vmatprep.subr.mxu0 0.0
      %3241 = vmatpush1.msra.mxu0 %v3219
      %3242 = vmatprep.subr.mxu0 0.0
      %3243 = vmatpush1.msra.mxu0 %v3220
      %3244 = vmatprep.subr.mxu0 0.0
      %3245 = vmatpush1.msra.mxu0 %v3221
      %3246 = vmatprep.subr.mxu0 0.0
      %3247 = vmatpush1.msra.mxu0 %v3222
      %3248 = vmatprep.subr.mxu0 0.0
      %3249 = vmatpush1.msra.mxu0 %v3223
      %3250 = vmatprep.subr.mxu0 0.0
      %3251 = vmatpush1.msra.mxu0 %v3224
      %3252 = vmatprep.subr.mxu0 0.0
      %3253 = vmatpush1.msra.mxu0 %v3225
      %3254 = vmatprep.subr.mxu0 0.0
      %3255 = vmatpush1.msra.mxu0 %v3226
      %3256 = vmatprep.subr.mxu0 0.0
      %3257 = vmatpush1.msra.mxu0 %v3227
      %3258 = vmatprep.subr.mxu0 0.0
      %3259 = vmatpush1.msra.mxu0 %v3228
      %3260 = vmatprep.subr.mxu0 0.0
      %3261 = vmatpush1.msra.mxu0 %v3229
      %3262 = vmatprep.subr.mxu0 0.0
      %3263 = vmatpush1.msra.mxu0 0.0
      %3264 = vmatprep.subr.mxu0 0.0
      %3265 = vmatpush1.msra.mxu0 0.0
      %3266 = vmatprep.subr.mxu0 0.0
      %3267 = vmatpush1.msra.mxu0 0.0
      %3268 = vmatprep.subr.mxu0 0.0
      %3269 = vmatpush1.msra.mxu0 0.0
      %3270 = vmatprep.subr.mxu0 0.0
      %3271 = vmatpush1.msra.mxu0 0.0
      %3272 = vmatprep.subr.mxu0 0.0
      %3273 = vmatpush1.msra.mxu0 0.0
      %3274 = vmatprep.subr.mxu0 0.0
      %3275 = vmatpush1.msra.mxu0 0.0
      %3276 = vmatprep.subr.mxu0 0.0
      %3277 = vmatpush1.msra.mxu0 0.0
      %3278 = vmatprep.subr.mxu0 0.0
      %3279 = vmatpush1.msra.mxu0 0.0
      %3280 = vmatprep.subr.mxu0 0.0
      %3281 = vmatpush1.msra.mxu0 0.0
      %3282 = vmatprep.subr.mxu0 0.0
      %3283 = vmatpush1.msra.mxu0 0.0
      %3284 = vmatprep.subr.mxu0 0.0
      %3285 = vmatpush1.msra.mxu0 0.0
      %3286 = vmatprep.subr.mxu0 0.0
      %3287 = vmatpush1.msra.mxu0 0.0
      %3288 = vmatprep.subr.mxu0 0.0
      %3289 = vmatpush1.msra.mxu0 0.0
      %3290 = vmatprep.subr.mxu0 0.0
      %3291 = vmatpush1.msra.mxu0 0.0
      %3292 = vmatprep.subr.mxu0 0.0
      %3293 = vmatpush1.msra.mxu0 0.0
      %3294 = vmatprep.mubr.f32.mxu0 0.0
      %3295 = vmatmul.mubr.f32.gmra.mrb[0].mxu0 %v3182
      %v3296 = vpop.f32.mrb[0].mxu0
      %v3297 = vadd.f32 0.0, %v3296
      %v3298 = vpop.f32.mrb[0].mxu0
      %3299 = vmatprep.mubr.f32.mxu0 0.0
      %3300 = vmatmul.mubr.f32.gmra.mrb[0].mxu0 %v3183
      %v3301 = vpop.f32.mrb[0].mxu0
      %v3302 = vadd.f32 0.0, %v3301
      %v3303 = vpop.f32.mrb[0].mxu0
      %3304 = vmatprep.mubr.f32.mxu0 0.0
      %3305 = vmatmul.mubr.f32.gmra.mrb[0].mxu0 %v3184
      %v3306 = vpop.f32.mrb[0].mxu0
      %v3307 = vadd.f32 0.0, %v3306
      %v3308 = vpop.f32.mrb[0].mxu0
      %3309 = vmatprep.mubr.f32.mxu0 0.0
      %3310 = vmatmul.mubr.f32.gmra.mrb[0].mxu0 %v3185
      %v3311 = vpop.f32.mrb[0].mxu0
      %v3312 = vadd.f32 0.0, %v3311
      %v3313 = vpop.f32.mrb[0].mxu0
      %3314 = vmatprep.mubr.f32.mxu0 0.0
      %3315 = vmatmul.mubr.f32.gmra.mrb[0].mxu0 %v3186
      %v3316 = vpop.f32.mrb[0].mxu0
      %v3317 = vadd.f32 0.0, %v3316
      %v3318 = vpop.f32.mrb[0].mxu0
      %3319 = vmatprep.mubr.f32.mxu0 0.0
      %3320 = vmatmul.mubr.f32.gmra.mrb[0].mxu0 %v3187
      %v3321 = vpop.f32.mrb[0].mxu0
      %v3322 = vadd.f32 0.0, %v3321
      %v3323 = vpop.f32.mrb[0].mxu0
      %3324 = vmatprep.mubr.f32.mxu0 0.0
      %3325 = vmatmul.mubr.f32.gmra.mrb[0].mxu0 %v3188
      %v3326 = vpop.f32.mrb[0].mxu0
      %v3327 = vadd.f32 0.0, %v3326
      %v3328 = vpop.f32.mrb[0].mxu0
      %3329 = vmatprep.mubr.f32.mxu0 0.0
      %3330 = vmatmul.mubr.f32.gmra.mrb[0].mxu0 %v3189
      %v3331 = vpop.f32.mrb[0].mxu0
      %v3332 = vadd.f32 0.0, %v3331
      %v3333 = vpop.f32.mrb[0].mxu0
      %3334 = vmatprep.mubr.f32.mxu0 0.0
      %3335 = vmatmul.mubr.f32.gmra.mrb[0].mxu0 %v3190
      %v3336 = vpop.f32.mrb[0].mxu0
      %v3337 = vadd.f32 0.0, %v3336
      %v3338 = vpop.f32.mrb[0].mxu0
      %3339 = vmatprep.mubr.f32.mxu0 0.0
      %3340 = vmatmul.mubr.f32.gmra.mrb[0].mxu0 %v3191
      %v3341 = vpop.f32.mrb[0].mxu0
      %v3342 = vadd.f32 0.0, %v3341
      %v3343 = vpop.f32.mrb[0].mxu0
      %3344 = vmatprep.mubr.f32.mxu0 0.0
      %3345 = vmatmul.mubr.f32.gmra.mrb[0].mxu0 %v3192
      %v3346 = vpop.f32.mrb[0].mxu0
      %v3347 = vadd.f32 0.0, %v3346
      %v3348 = vpop.f32.mrb[0].mxu0
      %3349 = vmatprep.mubr.f32.mxu0 0.0
      %3350 = vmatmul.mubr.f32.gmra.mrb[0].mxu0 %v3193
      %v3351 = vpop.f32.mrb[0].mxu0
      %v3352 = vadd.f32 0.0, %v3351
      %v3353 = vpop.f32.mrb[0].mxu0
      %3354 = vmatprep.mubr.f32.mxu0 0.0
      %3355 = vmatmul.mubr.f32.gmra.mrb[0].mxu0 %v3194
      %v3356 = vpop.f32.mrb[0].mxu0
      %v3357 = vadd.f32 0.0, %v3356
      %v3358 = vpop.f32.mrb[0].mxu0
      %3359 = vmatprep.mubr.f32.mxu0 0.0
      %3360 = vmatmul.mubr.f32.gmra.mrb[0].mxu0 %v3195
      %v3361 = vpop.f32.mrb[0].mxu0
      %v3362 = vadd.f32 0.0, %v3361
      %v3363 = vpop.f32.mrb[0].mxu0
      %3364 = vmatprep.mubr.f32.mxu0 0.0
      %3365 = vmatmul.mubr.f32.gmra.mrb[0].mxu0 %v3196
      %v3366 = vpop.f32.mrb[0].mxu0
      %v3367 = vadd.f32 0.0, %v3366
      %v3368 = vpop.f32.mrb[0].mxu0
      %3369 = vmatprep.mubr.f32.mxu0 0.0
      %3370 = vmatmul.mubr.f32.gmra.mrb[0].mxu0 %v3197
      %v3371 = vpop.f32.mrb[0].mxu0
      %v3372 = vadd.f32 0.0, %v3371
      %v3373 = vpop.f32.mrb[0].mxu0
      %3374 = vmatprep.mubr.f32.mxu0 0.0
      %3375 = vmatmul.mubr.f32.gmra.mrb[0].mxu0 %v3198
      %v3376 = vpop.f32.mrb[0].mxu0
      %v3377 = vadd.f32 0.0, %v3376
      %v3378 = vpop.f32.mrb[0].mxu0
      %3379 = vmatprep.mubr.f32.mxu0 0.0
      %3380 = vmatmul.mubr.f32.gmra.mrb[0].mxu0 %v3199
      %v3381 = vpop.f32.mrb[0].mxu0
      %v3382 = vadd.f32 0.0, %v3381
      %v3383 = vpop.f32.mrb[0].mxu0
      %3384 = vmatprep.mubr.f32.mxu0 0.0
      %3385 = vmatmul.mubr.f32.gmra.mrb[0].mxu0 %v3200
      %v3386 = vpop.f32.mrb[0].mxu0
      %v3387 = vadd.f32 0.0, %v3386
      %v3388 = vpop.f32.mrb[0].mxu0
      %3389 = vmatprep.mubr.f32.mxu0 0.0
      %3390 = vmatmul.mubr.f32.gmra.mrb[0].mxu0 %v3201
      %v3391 = vpop.f32.mrb[0].mxu0
      %v3392 = vadd.f32 0.0, %v3391
      %v3393 = vpop.f32.mrb[0].mxu0
      %3394 = vmatprep.mubr.f32.mxu0 0.0
      %3395 = vmatmul.mubr.f32.gmra.mrb[0].mxu0 %v3202
      %v3396 = vpop.f32.mrb[0].mxu0
      %v3397 = vadd.f32 0.0, %v3396
      %v3398 = vpop.f32.mrb[0].mxu0
      %3399 = vmatprep.mubr.f32.mxu0 0.0
      %3400 = vmatmul.mubr.f32.gmra.mrb[0].mxu0 %v3203
      %v3401 = vpop.f32.mrb[0].mxu0
      %v3402 = vadd.f32 0.0, %v3401
      %v3403 = vpop.f32.mrb[0].mxu0
      %3404 = vmatprep.mubr.f32.mxu0 0.0
      %3405 = vmatmul.mubr.f32.gmra.mrb[0].mxu0 %v3204
      %v3406 = vpop.f32.mrb[0].mxu0
      %v3407 = vadd.f32 0.0, %v3406
      %v3408 = vpop.f32.mrb[0].mxu0
      %3409 = vmatprep.mubr.f32.mxu0 0.0
      %3410 = vmatmul.mubr.f32.gmra.mrb[0].mxu0 %v3205
      %v3411 = vpop.f32.mrb[0].mxu0
      %v3412 = vadd.f32 0.0, %v3411
      %v3413 = vpop.f32.mrb[0].mxu0
      %3414 = vmatprep.mubr.f32.mxu0 0.0
      %3415 = vmatmul.mubr.f32.gmra.mrb[0].mxu0 %v3206
      %v3416 = vpop.f32.mrb[0].mxu0
      %v3417 = vadd.f32 0.0, %v3416
      %v3418 = vpop.f32.mrb[0].mxu0
      %3419 = vmatprep.mubr.f32.mxu0 0.0
      %3420 = vmatmul.mubr.f32.gmra.mrb[0].mxu0 %v3207
      %v3421 = vpop.f32.mrb[0].mxu0
      %v3422 = vadd.f32 0.0, %v3421
      %v3423 = vpop.f32.mrb[0].mxu0
      %3424 = vmatprep.mubr.f32.mxu0 0.0
      %3425 = vmatmul.mubr.f32.gmra.mrb[0].mxu0 %v3208
      %v3426 = vpop.f32.mrb[0].mxu0
      %v3427 = vadd.f32 0.0, %v3426
      %v3428 = vpop.f32.mrb[0].mxu0
      %3429 = vmatprep.mubr.f32.mxu0 0.0
      %3430 = vmatmul.mubr.f32.gmra.mrb[0].mxu0 %v3209
      %v3431 = vpop.f32.mrb[0].mxu0
      %v3432 = vadd.f32 0.0, %v3431
      %v3433 = vpop.f32.mrb[0].mxu0
      %3434 = vmatprep.mubr.f32.mxu0 0.0
      %3435 = vmatmul.mubr.f32.gmra.mrb[0].mxu0 %v3210
      %v3436 = vpop.f32.mrb[0].mxu0
      %v3437 = vadd.f32 0.0, %v3436
      %v3438 = vpop.f32.mrb[0].mxu0
      %3439 = vmatprep.mubr.f32.mxu0 0.0
      %3440 = vmatmul.mubr.f32.gmra.mrb[0].mxu0 %v3211
      %v3441 = vpop.f32.mrb[0].mxu0
      %v3442 = vadd.f32 0.0, %v3441
      %v3443 = vpop.f32.mrb[0].mxu0
      %3444 = vmatprep.mubr.f32.mxu0 0.0
      %3445 = vmatmul.mubr.f32.gmra.mrb[0].mxu0 %v3212
      %v3446 = vpop.f32.mrb[0].mxu0
      %v3447 = vadd.f32 0.0, %v3446
      %v3448 = vpop.f32.mrb[0].mxu0
      %3449 = vmatprep.mubr.f32.mxu0 0.0
      %3450 = vmatmul.mubr.f32.gmra.mrb[0].mxu0 %v3213
      %v3451 = vpop.f32.mrb[0].mxu0
      %v3452 = vadd.f32 0.0, %v3451
      %v3453 = vpop.f32.mrb[0].mxu0
      %3454 = vdwg.mxu0
      %v3455 = vadd.f32 %v1963, %v3297
      %v3456 = vadd.f32 %v1964, %v3302
      %v3457 = vadd.f32 %v1965, %v3307
      %v3458 = vadd.f32 %v1966, %v3312
      %v3459 = vadd.f32 %v1967, %v3317
      %v3460 = vadd.f32 %v1968, %v3322
      %v3461 = vadd.f32 %v1969, %v3327
      %v3462 = vadd.f32 %v1970, %v3332
      %v3463 = vadd.f32 %v1971, %v3337
      %v3464 = vadd.f32 %v1972, %v3342
      %v3465 = vadd.f32 %v1973, %v3347
      %v3466 = vadd.f32 %v1974, %v3352
      %v3467 = vadd.f32 %v1975, %v3357
      %v3468 = vadd.f32 %v1976, %v3362
      %v3469 = vadd.f32 %v1977, %v3367
      %v3470 = vadd.f32 %v1978, %v3372
      %v3471 = vadd.f32 %v1979, %v3377
      %v3472 = vadd.f32 %v1980, %v3382
      %v3473 = vadd.f32 %v1981, %v3387
      %v3474 = vadd.f32 %v1982, %v3392
      %v3475 = vadd.f32 %v1983, %v3397
      %v3476 = vadd.f32 %v1984, %v3402
      %v3477 = vadd.f32 %v1985, %v3407
      %v3478 = vadd.f32 %v1986, %v3412
      %v3479 = vadd.f32 %v1987, %v3417
      %v3480 = vadd.f32 %v1988, %v3422
      %v3481 = vadd.f32 %v1989, %v3427
      %v3482 = vadd.f32 %v1990, %v3432
      %v3483 = vadd.f32 %v1991, %v3437
      %v3484 = vadd.f32 %v1992, %v3442
      %v3485 = vadd.f32 %v1993, %v3447
      %v3486 = vadd.f32 %v1994, %v3452
      %vm3487 = vcmp.lt.s32.totalorder %v483, 32
      %v3488 = vsel %vm3487, %v3455, 0.0
      %v3489 = vsel %vm3487, %v3456, 0.0
      %v3490 = vsel %vm3487, %v3457, 0.0
      %v3491 = vsel %vm3487, %v3458, 0.0
      %v3492 = vsel %vm3487, %v3459, 0.0
      %v3493 = vsel %vm3487, %v3460, 0.0
      %v3494 = vsel %vm3487, %v3461, 0.0
      %v3495 = vsel %vm3487, %v3462, 0.0
      %v3496 = vsel %vm3487, %v3463, 0.0
      %v3497 = vsel %vm3487, %v3464, 0.0
      %v3498 = vsel %vm3487, %v3465, 0.0
      %v3499 = vsel %vm3487, %v3466, 0.0
      %v3500 = vsel %vm3487, %v3467, 0.0
      %v3501 = vsel %vm3487, %v3468, 0.0
      %v3502 = vsel %vm3487, %v3469, 0.0
      %v3503 = vsel %vm3487, %v3470, 0.0
      %v3504 = vsel %vm3487, %v3471, 0.0
      %v3505 = vsel %vm3487, %v3472, 0.0
      %v3506 = vsel %vm3487, %v3473, 0.0
      %v3507 = vsel %vm3487, %v3474, 0.0
      %v3508 = vsel %vm3487, %v3475, 0.0
      %v3509 = vsel %vm3487, %v3476, 0.0
      %v3510 = vsel %vm3487, %v3477, 0.0
      %v3511 = vsel %vm3487, %v3478, 0.0
      %v3512 = vsel %vm3487, %v3479, 0.0
      %v3513 = vsel %vm3487, %v3480, 0.0
      %v3514 = vsel %vm3487, %v3481, 0.0
      %v3515 = vsel %vm3487, %v3482, 0.0
      %v3516 = vsel %vm3487, %v3483, 0.0
      %v3517 = vsel %vm3487, %v3484, 0.0
      %v3518 = vsel %vm3487, %v3485, 0.0
      %v3519 = vsel %vm3487, %v3486, 0.0
      %3520 = vadd.xlane.f32.xlu0 %v3488
      %v3521 = vpop.xlane.xlu0 %3520
      %3522 = vadd.xlane.f32.xlu0 %v3489
      %v3523 = vpop.xlane.xlu0 %3522
      %3524 = vadd.xlane.f32.xlu0 %v3490
      %v3525 = vpop.xlane.xlu0 %3524
      %3526 = vadd.xlane.f32.xlu0 %v3491
      %v3527 = vpop.xlane.xlu0 %3526
      %3528 = vadd.xlane.f32.xlu0 %v3492
      %v3529 = vpop.xlane.xlu0 %3528
      %3530 = vadd.xlane.f32.xlu0 %v3493
      %v3531 = vpop.xlane.xlu0 %3530
      %3532 = vadd.xlane.f32.xlu0 %v3494
      %v3533 = vpop.xlane.xlu0 %3532
      %3534 = vadd.xlane.f32.xlu0 %v3495
      %v3535 = vpop.xlane.xlu0 %3534
      %3536 = vadd.xlane.f32.xlu0 %v3496
      %v3537 = vpop.xlane.xlu0 %3536
      %3538 = vadd.xlane.f32.xlu0 %v3497
      %v3539 = vpop.xlane.xlu0 %3538
      %3540 = vadd.xlane.f32.xlu0 %v3498
      %v3541 = vpop.xlane.xlu0 %3540
      %3542 = vadd.xlane.f32.xlu0 %v3499
      %v3543 = vpop.xlane.xlu0 %3542
      %3544 = vadd.xlane.f32.xlu0 %v3500
      %v3545 = vpop.xlane.xlu0 %3544
      %3546 = vadd.xlane.f32.xlu0 %v3501
      %v3547 = vpop.xlane.xlu0 %3546
      %3548 = vadd.xlane.f32.xlu0 %v3502
      %v3549 = vpop.xlane.xlu0 %3548
      %3550 = vadd.xlane.f32.xlu0 %v3503
      %v3551 = vpop.xlane.xlu0 %3550
      %3552 = vadd.xlane.f32.xlu0 %v3504
      %v3553 = vpop.xlane.xlu0 %3552
      %3554 = vadd.xlane.f32.xlu0 %v3505
      %v3555 = vpop.xlane.xlu0 %3554
      %3556 = vadd.xlane.f32.xlu0 %v3506
      %v3557 = vpop.xlane.xlu0 %3556
      %3558 = vadd.xlane.f32.xlu0 %v3507
      %v3559 = vpop.xlane.xlu0 %3558
      %3560 = vadd.xlane.f32.xlu0 %v3508
      %v3561 = vpop.xlane.xlu0 %3560
      %3562 = vadd.xlane.f32.xlu0 %v3509
      %v3563 = vpop.xlane.xlu0 %3562
      %3564 = vadd.xlane.f32.xlu0 %v3510
      %v3565 = vpop.xlane.xlu0 %3564
      %3566 = vadd.xlane.f32.xlu0 %v3511
      %v3567 = vpop.xlane.xlu0 %3566
      %3568 = vadd.xlane.f32.xlu0 %v3512
      %v3569 = vpop.xlane.xlu0 %3568
      %3570 = vadd.xlane.f32.xlu0 %v3513
      %v3571 = vpop.xlane.xlu0 %3570
      %3572 = vadd.xlane.f32.xlu0 %v3514
      %v3573 = vpop.xlane.xlu0 %3572
      %3574 = vadd.xlane.f32.xlu0 %v3515
      %v3575 = vpop.xlane.xlu0 %3574
      %3576 = vadd.xlane.f32.xlu0 %v3516
      %v3577 = vpop.xlane.xlu0 %3576
      %3578 = vadd.xlane.f32.xlu0 %v3517
      %v3579 = vpop.xlane.xlu0 %3578
      %3580 = vadd.xlane.f32.xlu0 %v3518
      %v3581 = vpop.xlane.xlu0 %3580
      %3582 = vadd.xlane.f32.xlu0 %v3519
      %v3583 = vpop.xlane.xlu0 %3582
      %v3584 = vmul.f32 %v3521, 0.03125
      %v3585 = vmul.f32 %v3523, 0.03125
      %v3586 = vmul.f32 %v3525, 0.03125
      %v3587 = vmul.f32 %v3527, 0.03125
      %v3588 = vmul.f32 %v3529, 0.03125
      %v3589 = vmul.f32 %v3531, 0.03125
      %v3590 = vmul.f32 %v3533, 0.03125
      %v3591 = vmul.f32 %v3535, 0.03125
      %v3592 = vmul.f32 %v3537, 0.03125
      %v3593 = vmul.f32 %v3539, 0.03125
      %v3594 = vmul.f32 %v3541, 0.03125
      %v3595 = vmul.f32 %v3543, 0.03125
      %v3596 = vmul.f32 %v3545, 0.03125
      %v3597 = vmul.f32 %v3547, 0.03125
      %v3598 = vmul.f32 %v3549, 0.03125
      %v3599 = vmul.f32 %v3551, 0.03125
      %v3600 = vmul.f32 %v3553, 0.03125
      %v3601 = vmul.f32 %v3555, 0.03125
      %v3602 = vmul.f32 %v3557, 0.03125
      %v3603 = vmul.f32 %v3559, 0.03125
      %v3604 = vmul.f32 %v3561, 0.03125
      %v3605 = vmul.f32 %v3563, 0.03125
      %v3606 = vmul.f32 %v3565, 0.03125
      %v3607 = vmul.f32 %v3567, 0.03125
      %v3608 = vmul.f32 %v3569, 0.03125
      %v3609 = vmul.f32 %v3571, 0.03125
      %v3610 = vmul.f32 %v3573, 0.03125
      %v3611 = vmul.f32 %v3575, 0.03125
      %v3612 = vmul.f32 %v3577, 0.03125
      %v3613 = vmul.f32 %v3579, 0.03125
      %v3614 = vmul.f32 %v3581, 0.03125
      %v3615 = vmul.f32 %v3583, 0.03125
      %v3616 = vsub.f32 %v3455, %v3584
      %v3617 = vsub.f32 %v3456, %v3585
      %v3618 = vsub.f32 %v3457, %v3586
      %v3619 = vsub.f32 %v3458, %v3587
      %v3620 = vsub.f32 %v3459, %v3588
      %v3621 = vsub.f32 %v3460, %v3589
      %v3622 = vsub.f32 %v3461, %v3590
      %v3623 = vsub.f32 %v3462, %v3591
      %v3624 = vsub.f32 %v3463, %v3592
      %v3625 = vsub.f32 %v3464, %v3593
      %v3626 = vsub.f32 %v3465, %v3594
      %v3627 = vsub.f32 %v3466, %v3595
      %v3628 = vsub.f32 %v3467, %v3596
      %v3629 = vsub.f32 %v3468, %v3597
      %v3630 = vsub.f32 %v3469, %v3598
      %v3631 = vsub.f32 %v3470, %v3599
      %v3632 = vsub.f32 %v3471, %v3600
      %v3633 = vsub.f32 %v3472, %v3601
      %v3634 = vsub.f32 %v3473, %v3602
      %v3635 = vsub.f32 %v3474, %v3603
      %v3636 = vsub.f32 %v3475, %v3604
      %v3637 = vsub.f32 %v3476, %v3605
      %v3638 = vsub.f32 %v3477, %v3606
      %v3639 = vsub.f32 %v3478, %v3607
      %v3640 = vsub.f32 %v3479, %v3608
      %v3641 = vsub.f32 %v3480, %v3609
      %v3642 = vsub.f32 %v3481, %v3610
      %v3643 = vsub.f32 %v3482, %v3611
      %v3644 = vsub.f32 %v3483, %v3612
      %v3645 = vsub.f32 %v3484, %v3613
      %v3646 = vsub.f32 %v3485, %v3614
      %v3647 = vsub.f32 %v3486, %v3615
      %v3648 = vsel %vm3487, %v3616, 0.0
      %v3649 = vsel %vm3487, %v3617, 0.0
      %v3650 = vsel %vm3487, %v3618, 0.0
      %v3651 = vsel %vm3487, %v3619, 0.0
      %v3652 = vsel %vm3487, %v3620, 0.0
      %v3653 = vsel %vm3487, %v3621, 0.0
      %v3654 = vsel %vm3487, %v3622, 0.0
      %v3655 = vsel %vm3487, %v3623, 0.0
      %v3656 = vsel %vm3487, %v3624, 0.0
      %v3657 = vsel %vm3487, %v3625, 0.0
      %v3658 = vsel %vm3487, %v3626, 0.0
      %v3659 = vsel %vm3487, %v3627, 0.0
      %v3660 = vsel %vm3487, %v3628, 0.0
      %v3661 = vsel %vm3487, %v3629, 0.0
      %v3662 = vsel %vm3487, %v3630, 0.0
      %v3663 = vsel %vm3487, %v3631, 0.0
      %v3664 = vsel %vm3487, %v3632, 0.0
      %v3665 = vsel %vm3487, %v3633, 0.0
      %v3666 = vsel %vm3487, %v3634, 0.0
      %v3667 = vsel %vm3487, %v3635, 0.0
      %v3668 = vsel %vm3487, %v3636, 0.0
      %v3669 = vsel %vm3487, %v3637, 0.0
      %v3670 = vsel %vm3487, %v3638, 0.0
      %v3671 = vsel %vm3487, %v3639, 0.0
      %v3672 = vsel %vm3487, %v3640, 0.0
      %v3673 = vsel %vm3487, %v3641, 0.0
      %v3674 = vsel %vm3487, %v3642, 0.0
      %v3675 = vsel %vm3487, %v3643, 0.0
      %v3676 = vsel %vm3487, %v3644, 0.0
      %v3677 = vsel %vm3487, %v3645, 0.0
      %v3678 = vsel %vm3487, %v3646, 0.0
      %v3679 = vsel %vm3487, %v3647, 0.0
      %v3680 = vmul.f32 %v3648, %v3648
      %v3681 = vmul.f32 %v3649, %v3649
      %v3682 = vmul.f32 %v3650, %v3650
      %v3683 = vmul.f32 %v3651, %v3651
      %v3684 = vmul.f32 %v3652, %v3652
      %v3685 = vmul.f32 %v3653, %v3653
      %v3686 = vmul.f32 %v3654, %v3654
      %v3687 = vmul.f32 %v3655, %v3655
      %v3688 = vmul.f32 %v3656, %v3656
      %v3689 = vmul.f32 %v3657, %v3657
      %v3690 = vmul.f32 %v3658, %v3658
      %v3691 = vmul.f32 %v3659, %v3659
      %v3692 = vmul.f32 %v3660, %v3660
      %v3693 = vmul.f32 %v3661, %v3661
      %v3694 = vmul.f32 %v3662, %v3662
      %v3695 = vmul.f32 %v3663, %v3663
      %v3696 = vmul.f32 %v3664, %v3664
      %v3697 = vmul.f32 %v3665, %v3665
      %v3698 = vmul.f32 %v3666, %v3666
      %v3699 = vmul.f32 %v3667, %v3667
      %v3700 = vmul.f32 %v3668, %v3668
      %v3701 = vmul.f32 %v3669, %v3669
      %v3702 = vmul.f32 %v3670, %v3670
      %v3703 = vmul.f32 %v3671, %v3671
      %v3704 = vmul.f32 %v3672, %v3672
      %v3705 = vmul.f32 %v3673, %v3673
      %v3706 = vmul.f32 %v3674, %v3674
      %v3707 = vmul.f32 %v3675, %v3675
      %v3708 = vmul.f32 %v3676, %v3676
      %v3709 = vmul.f32 %v3677, %v3677
      %v3710 = vmul.f32 %v3678, %v3678
      %v3711 = vmul.f32 %v3679, %v3679
      %3712 = vadd.xlane.f32.xlu0 %v3680
      %v3713 = vpop.xlane.xlu0 %3712
      %3714 = vadd.xlane.f32.xlu0 %v3681
      %v3715 = vpop.xlane.xlu0 %3714
      %3716 = vadd.xlane.f32.xlu0 %v3682
      %v3717 = vpop.xlane.xlu0 %3716
      %3718 = vadd.xlane.f32.xlu0 %v3683
      %v3719 = vpop.xlane.xlu0 %3718
      %3720 = vadd.xlane.f32.xlu0 %v3684
      %v3721 = vpop.xlane.xlu0 %3720
      %3722 = vadd.xlane.f32.xlu0 %v3685
      %v3723 = vpop.xlane.xlu0 %3722
      %3724 = vadd.xlane.f32.xlu0 %v3686
      %v3725 = vpop.xlane.xlu0 %3724
      %3726 = vadd.xlane.f32.xlu0 %v3687
      %v3727 = vpop.xlane.xlu0 %3726
      %3728 = vadd.xlane.f32.xlu0 %v3688
      %v3729 = vpop.xlane.xlu0 %3728
      %3730 = vadd.xlane.f32.xlu0 %v3689
      %v3731 = vpop.xlane.xlu0 %3730
      %3732 = vadd.xlane.f32.xlu0 %v3690
      %v3733 = vpop.xlane.xlu0 %3732
      %3734 = vadd.xlane.f32.xlu0 %v3691
      %v3735 = vpop.xlane.xlu0 %3734
      %3736 = vadd.xlane.f32.xlu0 %v3692
      %v3737 = vpop.xlane.xlu0 %3736
      %3738 = vadd.xlane.f32.xlu0 %v3693
      %v3739 = vpop.xlane.xlu0 %3738
      %3740 = vadd.xlane.f32.xlu0 %v3694
      %v3741 = vpop.xlane.xlu0 %3740
      %3742 = vadd.xlane.f32.xlu0 %v3695
      %v3743 = vpop.xlane.xlu0 %3742
      %3744 = vadd.xlane.f32.xlu0 %v3696
      %v3745 = vpop.xlane.xlu0 %3744
      %3746 = vadd.xlane.f32.xlu0 %v3697
      %v3747 = vpop.xlane.xlu0 %3746
      %3748 = vadd.xlane.f32.xlu0 %v3698
      %v3749 = vpop.xlane.xlu0 %3748
      %3750 = vadd.xlane.f32.xlu0 %v3699
      %v3751 = vpop.xlane.xlu0 %3750
      %3752 = vadd.xlane.f32.xlu0 %v3700
      %v3753 = vpop.xlane.xlu0 %3752
      %3754 = vadd.xlane.f32.xlu0 %v3701
      %v3755 = vpop.xlane.xlu0 %3754
      %3756 = vadd.xlane.f32.xlu0 %v3702
      %v3757 = vpop.xlane.xlu0 %3756
      %3758 = vadd.xlane.f32.xlu0 %v3703
      %v3759 = vpop.xlane.xlu0 %3758
      %3760 = vadd.xlane.f32.xlu0 %v3704
      %v3761 = vpop.xlane.xlu0 %3760
      %3762 = vadd.xlane.f32.xlu0 %v3705
      %v3763 = vpop.xlane.xlu0 %3762
      %3764 = vadd.xlane.f32.xlu0 %v3706
      %v3765 = vpop.xlane.xlu0 %3764
      %3766 = vadd.xlane.f32.xlu0 %v3707
      %v3767 = vpop.xlane.xlu0 %3766
      %3768 = vadd.xlane.f32.xlu0 %v3708
      %v3769 = vpop.xlane.xlu0 %3768
      %3770 = vadd.xlane.f32.xlu0 %v3709
      %v3771 = vpop.xlane.xlu0 %3770
      %3772 = vadd.xlane.f32.xlu0 %v3710
      %v3773 = vpop.xlane.xlu0 %3772
      %3774 = vadd.xlane.f32.xlu0 %v3711
      %v3775 = vpop.xlane.xlu0 %3774
      %v3776 = vmul.f32 %v3713, 0.03125
      %v3777 = vmul.f32 %v3715, 0.03125
      %v3778 = vmul.f32 %v3717, 0.03125
      %v3779 = vmul.f32 %v3719, 0.03125
      %v3780 = vmul.f32 %v3721, 0.03125
      %v3781 = vmul.f32 %v3723, 0.03125
      %v3782 = vmul.f32 %v3725, 0.03125
      %v3783 = vmul.f32 %v3727, 0.03125
      %v3784 = vmul.f32 %v3729, 0.03125
      %v3785 = vmul.f32 %v3731, 0.03125
      %v3786 = vmul.f32 %v3733, 0.03125
      %v3787 = vmul.f32 %v3735, 0.03125
      %v3788 = vmul.f32 %v3737, 0.03125
      %v3789 = vmul.f32 %v3739, 0.03125
      %v3790 = vmul.f32 %v3741, 0.03125
      %v3791 = vmul.f32 %v3743, 0.03125
      %v3792 = vmul.f32 %v3745, 0.03125
      %v3793 = vmul.f32 %v3747, 0.03125
      %v3794 = vmul.f32 %v3749, 0.03125
      %v3795 = vmul.f32 %v3751, 0.03125
      %v3796 = vmul.f32 %v3753, 0.03125
      %v3797 = vmul.f32 %v3755, 0.03125
      %v3798 = vmul.f32 %v3757, 0.03125
      %v3799 = vmul.f32 %v3759, 0.03125
      %v3800 = vmul.f32 %v3761, 0.03125
      %v3801 = vmul.f32 %v3763, 0.03125
      %v3802 = vmul.f32 %v3765, 0.03125
      %v3803 = vmul.f32 %v3767, 0.03125
      %v3804 = vmul.f32 %v3769, 0.03125
      %v3805 = vmul.f32 %v3771, 0.03125
      %v3806 = vmul.f32 %v3773, 0.03125
      %v3807 = vmul.f32 %v3775, 0.03125
      %v3808 = vadd.f32 %v3776, 1e-06
      %v3809 = vadd.f32 %v3777, 1e-06
      %v3810 = vadd.f32 %v3778, 1e-06
      %v3811 = vadd.f32 %v3779, 1e-06
      %v3812 = vadd.f32 %v3780, 1e-06
      %v3813 = vadd.f32 %v3781, 1e-06
      %v3814 = vadd.f32 %v3782, 1e-06
      %v3815 = vadd.f32 %v3783, 1e-06
      %v3816 = vadd.f32 %v3784, 1e-06
      %v3817 = vadd.f32 %v3785, 1e-06
      %v3818 = vadd.f32 %v3786, 1e-06
      %v3819 = vadd.f32 %v3787, 1e-06
      %v3820 = vadd.f32 %v3788, 1e-06
      %v3821 = vadd.f32 %v3789, 1e-06
      %v3822 = vadd.f32 %v3790, 1e-06
      %v3823 = vadd.f32 %v3791, 1e-06
      %v3824 = vadd.f32 %v3792, 1e-06
      %v3825 = vadd.f32 %v3793, 1e-06
      %v3826 = vadd.f32 %v3794, 1e-06
      %v3827 = vadd.f32 %v3795, 1e-06
      %v3828 = vadd.f32 %v3796, 1e-06
      %v3829 = vadd.f32 %v3797, 1e-06
      %v3830 = vadd.f32 %v3798, 1e-06
      %v3831 = vadd.f32 %v3799, 1e-06
      %v3832 = vadd.f32 %v3800, 1e-06
      %v3833 = vadd.f32 %v3801, 1e-06
      %v3834 = vadd.f32 %v3802, 1e-06
      %v3835 = vadd.f32 %v3803, 1e-06
      %v3836 = vadd.f32 %v3804, 1e-06
      %v3837 = vadd.f32 %v3805, 1e-06
      %v3838 = vadd.f32 %v3806, 1e-06
      %v3839 = vadd.f32 %v3807, 1e-06
      %v3840 = vrsqrt.pop %v3808
      %v3841 = vrsqrt.pop %v3809
      %v3842 = vrsqrt.pop %v3810
      %v3843 = vrsqrt.pop %v3811
      %v3844 = vrsqrt.pop %v3812
      %v3845 = vrsqrt.pop %v3813
      %v3846 = vrsqrt.pop %v3814
      %v3847 = vrsqrt.pop %v3815
      %v3848 = vrsqrt.pop %v3816
      %v3849 = vrsqrt.pop %v3817
      %v3850 = vrsqrt.pop %v3818
      %v3851 = vrsqrt.pop %v3819
      %v3852 = vrsqrt.pop %v3820
      %v3853 = vrsqrt.pop %v3821
      %v3854 = vrsqrt.pop %v3822
      %v3855 = vrsqrt.pop %v3823
      %v3856 = vrsqrt.pop %v3824
      %v3857 = vrsqrt.pop %v3825
      %v3858 = vrsqrt.pop %v3826
      %v3859 = vrsqrt.pop %v3827
      %v3860 = vrsqrt.pop %v3828
      %v3861 = vrsqrt.pop %v3829
      %v3862 = vrsqrt.pop %v3830
      %v3863 = vrsqrt.pop %v3831
      %v3864 = vrsqrt.pop %v3832
      %v3865 = vrsqrt.pop %v3833
      %v3866 = vrsqrt.pop %v3834
      %v3867 = vrsqrt.pop %v3835
      %v3868 = vrsqrt.pop %v3836
      %v3869 = vrsqrt.pop %v3837
      %v3870 = vrsqrt.pop %v3838
      %v3871 = vrsqrt.pop %v3839
      %v3872 = vmul.f32 %v3648, %v3840
      %v3873 = vmul.f32 %v3649, %v3841
      %v3874 = vmul.f32 %v3650, %v3842
      %v3875 = vmul.f32 %v3651, %v3843
      %v3876 = vmul.f32 %v3652, %v3844
      %v3877 = vmul.f32 %v3653, %v3845
      %v3878 = vmul.f32 %v3654, %v3846
      %v3879 = vmul.f32 %v3655, %v3847
      %v3880 = vmul.f32 %v3656, %v3848
      %v3881 = vmul.f32 %v3657, %v3849
      %v3882 = vmul.f32 %v3658, %v3850
      %v3883 = vmul.f32 %v3659, %v3851
      %v3884 = vmul.f32 %v3660, %v3852
      %v3885 = vmul.f32 %v3661, %v3853
      %v3886 = vmul.f32 %v3662, %v3854
      %v3887 = vmul.f32 %v3663, %v3855
      %v3888 = vmul.f32 %v3664, %v3856
      %v3889 = vmul.f32 %v3665, %v3857
      %v3890 = vmul.f32 %v3666, %v3858
      %v3891 = vmul.f32 %v3667, %v3859
      %v3892 = vmul.f32 %v3668, %v3860
      %v3893 = vmul.f32 %v3669, %v3861
      %v3894 = vmul.f32 %v3670, %v3862
      %v3895 = vmul.f32 %v3671, %v3863
      %v3896 = vmul.f32 %v3672, %v3864
      %v3897 = vmul.f32 %v3673, %v3865
      %v3898 = vmul.f32 %v3674, %v3866
      %v3899 = vmul.f32 %v3675, %v3867
      %v3900 = vmul.f32 %v3676, %v3868
      %v3901 = vmul.f32 %v3677, %v3869
      %v3902 = vmul.f32 %v3678, %v3870
      %v3903 = vmul.f32 %v3679, %v3871
      %v3904 = vld [vmem:[%s2] sm:$0x1]
      %v3905 = vlaneseq
      %v3906 = vshrl.u32 %v3905, 7
      %v3907 = vsub.s32 0, %v3906
      %v3908 = vrot.slane %v3904, %v3907
      %v3909 = vmul.f32 %v3872, %v3908
      %v3910 = vmul.f32 %v3873, %v3908
      %v3911 = vmul.f32 %v3874, %v3908
      %v3912 = vmul.f32 %v3875, %v3908
      %v3913 = vmul.f32 %v3876, %v3908
      %v3914 = vmul.f32 %v3877, %v3908
      %v3915 = vmul.f32 %v3878, %v3908
      %v3916 = vmul.f32 %v3879, %v3908
      %v3917 = vmul.f32 %v3880, %v3908
      %v3918 = vmul.f32 %v3881, %v3908
      %v3919 = vmul.f32 %v3882, %v3908
      %v3920 = vmul.f32 %v3883, %v3908
      %v3921 = vmul.f32 %v3884, %v3908
      %v3922 = vmul.f32 %v3885, %v3908
      %v3923 = vmul.f32 %v3886, %v3908
      %v3924 = vmul.f32 %v3887, %v3908
      %v3925 = vmul.f32 %v3888, %v3908
      %v3926 = vmul.f32 %v3889, %v3908
      %v3927 = vmul.f32 %v3890, %v3908
      %v3928 = vmul.f32 %v3891, %v3908
      %v3929 = vmul.f32 %v3892, %v3908
      %v3930 = vmul.f32 %v3893, %v3908
      %v3931 = vmul.f32 %v3894, %v3908
      %v3932 = vmul.f32 %v3895, %v3908
      %v3933 = vmul.f32 %v3896, %v3908
      %v3934 = vmul.f32 %v3897, %v3908
      %v3935 = vmul.f32 %v3898, %v3908
      %v3936 = vmul.f32 %v3899, %v3908
      %v3937 = vmul.f32 %v3900, %v3908
      %v3938 = vmul.f32 %v3901, %v3908
      %v3939 = vmul.f32 %v3902, %v3908
      %v3940 = vmul.f32 %v3903, %v3908
      %v3941 = vld [vmem:[%s2 + $0x1] sm:$0x1]
      %v3942 = vlaneseq
      %v3943 = vshrl.u32 %v3942, 7
      %v3944 = vsub.s32 0, %v3943
      %v3945 = vrot.slane %v3941, %v3944
      %v3946 = vadd.f32 %v3909, %v3945
      %v3947 = vadd.f32 %v3910, %v3945
      %v3948 = vadd.f32 %v3911, %v3945
      %v3949 = vadd.f32 %v3912, %v3945
      %v3950 = vadd.f32 %v3913, %v3945
      %v3951 = vadd.f32 %v3914, %v3945
      %v3952 = vadd.f32 %v3915, %v3945
      %v3953 = vadd.f32 %v3916, %v3945
      %v3954 = vadd.f32 %v3917, %v3945
      %v3955 = vadd.f32 %v3918, %v3945
      %v3956 = vadd.f32 %v3919, %v3945
      %v3957 = vadd.f32 %v3920, %v3945
      %v3958 = vadd.f32 %v3921, %v3945
      %v3959 = vadd.f32 %v3922, %v3945
      %v3960 = vadd.f32 %v3923, %v3945
      %v3961 = vadd.f32 %v3924, %v3945
      %v3962 = vadd.f32 %v3925, %v3945
      %v3963 = vadd.f32 %v3926, %v3945
      %v3964 = vadd.f32 %v3927, %v3945
      %v3965 = vadd.f32 %v3928, %v3945
      %v3966 = vadd.f32 %v3929, %v3945
      %v3967 = vadd.f32 %v3930, %v3945
      %v3968 = vadd.f32 %v3931, %v3945
      %v3969 = vadd.f32 %v3932, %v3945
      %v3970 = vadd.f32 %v3933, %v3945
      %v3971 = vadd.f32 %v3934, %v3945
      %v3972 = vadd.f32 %v3935, %v3945
      %v3973 = vadd.f32 %v3936, %v3945
      %v3974 = vadd.f32 %v3937, %v3945
      %v3975 = vadd.f32 %v3938, %v3945
      %v3976 = vadd.f32 %v3939, %v3945
      %v3977 = vadd.f32 %v3940, %v3945
      %3978 = vst [vmem:[%s175] sm:$0xff] %v3946
      %3979 = vst [vmem:[%s175 + $0x8] sm:$0xff] %v3947
      %3980 = vst [vmem:[%s175 + $0x10] sm:$0xff] %v3948
      %3981 = vst [vmem:[%s175 + $0x18] sm:$0xff] %v3949
      %3982 = vst [vmem:[%s175 + $0x20] sm:$0xff] %v3950
      %3983 = vst [vmem:[%s175 + $0x28] sm:$0xff] %v3951
      %3984 = vst [vmem:[%s175 + $0x30] sm:$0xff] %v3952
      %3985 = vst [vmem:[%s175 + $0x38] sm:$0xff] %v3953
      %3986 = vst [vmem:[%s175 + $0x40] sm:$0xff] %v3954
      %3987 = vst [vmem:[%s175 + $0x48] sm:$0xff] %v3955
      %3988 = vst [vmem:[%s175 + $0x50] sm:$0xff] %v3956
      %3989 = vst [vmem:[%s175 + $0x58] sm:$0xff] %v3957
      %3990 = vst [vmem:[%s175 + $0x60] sm:$0xff] %v3958
      %3991 = vst [vmem:[%s175 + $0x68] sm:$0xff] %v3959
      %3992 = vst [vmem:[%s175 + $0x70] sm:$0xff] %v3960
      %3993 = vst [vmem:[%s175 + $0x78] sm:$0xff] %v3961
      %3994 = vst [vmem:[%s175 + $0x80] sm:$0xff] %v3962
      %3995 = vst [vmem:[%s175 + $0x88] sm:$0xff] %v3963
      %3996 = vst [vmem:[%s175 + $0x90] sm:$0xff] %v3964
      %3997 = vst [vmem:[%s175 + $0x98] sm:$0xff] %v3965
      %3998 = vst [vmem:[%s175 + $0xa0] sm:$0xff] %v3966
      %3999 = vst [vmem:[%s175 + $0xa8] sm:$0xff] %v3967
      %4000 = vst [vmem:[%s175 + $0xb0] sm:$0xff] %v3968
      %4001 = vst [vmem:[%s175 + $0xb8] sm:$0xff] %v3969
      %4002 = vst [vmem:[%s175 + $0xc0] sm:$0xff] %v3970
      %4003 = vst [vmem:[%s175 + $0xc8] sm:$0xff] %v3971
      %4004 = vst [vmem:[%s175 + $0xd0] sm:$0xff] %v3972
      %4005 = vst [vmem:[%s175 + $0xd8] sm:$0xff] %v3973
      %4006 = vst [vmem:[%s175 + $0xe0] sm:$0xff] %v3974
      %4007 = vst [vmem:[%s175 + $0xe8] sm:$0xff] %v3975
      %4008 = vst [vmem:[%s175 + $0xf0] sm:$0xff] %v3976
      %4009 = vst [vmem:[%s175 + $0xf8] sm:$0xff] %v3977
      %s4010 = smul.u32 32, %s14
      %p4011 = scmp.lt.s32.totalorder %s4010, 63
      %s4012 = scalar_select %p4011, %s4010, 63
      %s4013 = smul.addr %s4012, 8
      %s4014 = scalar_lea.vmem %s3, %s4013
      // Predicated region
      $region33: #{transformer_block.1} parent=31 // pred_check
        %p4015 = pneg %p100
      $region34: #{transformer_block.1} parent=31 // pred_check_branch
        %4017 = sbr.rel (%p4015) target = $region36
      $region35: #{transformer_block.1} parent=31 // pred_region
        %s4018 = smul.u32 32, %s14
      $region36: #{transformer_block.1} parent=31 // pred_fallthru
        _
    $region32: #{transformer_block.1} parent=5 // pred_fallthru
      _
    %p4019 = scmp.le.s32.totalorder 2, %s9
    // Predicated region
    $region37: #{transformer_block.1} parent=5 // pred_check
      %p4020 = pneg %p4019
    $region38: #{transformer_block.1} parent=5 // pred_check_branch
      %4022 = sbr.rel (%p4020) target = $region40
    $region39: #{transformer_block.1} parent=5 // pred_region
      %s4023 = ssub.s32 %s9, 2
      // Predicated region
      $region41: #{transformer_block.1} parent=39 // pred_check
        %p4024 = pneg %p106
      $region42: #{transformer_block.1} parent=39 // pred_check_branch
        %4026 = sbr.rel (%p4024) target = $region44
      $region43: #{transformer_block.1} parent=39 // pred_region
        %s4027 = smul.u32 32, %s15
        %p4028 = scmp.lt.s32.totalorder %s4027, 63
        %s4029 = scalar_select %p4028, %s4027, 63
        %s4030 = smul.addr %s4029, 8
        %s4031 = scalar_lea.vmem %s3, %s4030
      $region44: #{transformer_block.1} parent=39 // pred_fallthru
        _
    $region40: #{transformer_block.1} parent=5 // pred_fallthru
      _
  $region6: #{transformer_block.1} parent=0 // loop_footer
    %s13 = sadd.s32 1, %s9
  $region7: #{transformer_block.1} parent=0 // loop_footer_branch
    %8 = sbr.rel target = $region3
  $region8: #{transformer_block.1} parent=0 // loop_exit
    _

</llo_original>
